<compile_context>
chip_gen: v6e
topology: v6e:2x2x1
jax: 0.10.0
libtpu: 0.0.40
codegen_flags: <defaults>
</compile_context>

<pallas_src>
import functools
import math

import jax
import jax.numpy as jnp
from jax.experimental import pallas as pl
from jax.experimental.pallas import tpu as pltpu

jax.config.update("jax_default_matmul_precision", "highest")


# ------------------------------ helpers -------------------------------------

def _row_tile(m, max_tile=512):
    """Largest multiple-of-8 row tile <= max_tile that divides m (HBM-roofline
    sized); if m itself is <= max_tile (or not 8-divisible) use the full
    dimension, which is always a legal block."""
    if m % 8 != 0 or m <= max_tile:
        return m
    best = 8
    t = 8
    while t <= max_tile:
        if m % t == 0:
            best = t
        t += 8
    return best


def _roll(x, shift, axis):
    """np.roll semantics (elements move toward higher indices by `shift`).

    Uses the XLU rotate (pltpu.roll) when the 2-D operand is (8,128)-tile
    aligned so the rotation rides the otherwise-idle XLU slot; falls back to a
    static slice+concat for tiny / unaligned (demo-sized) tiles."""
    n = x.shape[axis]
    shift = shift % n
    if shift == 0:
        return x
    if x.ndim == 2 and x.shape[0] % 8 == 0 and x.shape[1] % 128 == 0:
        return pltpu.roll(x, shift, axis)
    if axis == 1 or axis == -1:
        return jnp.concatenate([x[:, n - shift:], x[:, :n - shift]], axis=1)
    return jnp.concatenate([x[n - shift:, :], x[:n - shift, :]], axis=0)


# ----------------------------- Pallas kernels --------------------------------

def _ln_qkv_kernel(x_ref, g_ref, b_ref, w_ref, o_ref, *, eps):
    # LayerNorm over the full embedding axis (kept un-tiled: LN needs the whole
    # row), then ONE wide MXU projection x_norm @ W_qkv -> [tm, 3*H*D].
    # xn stays in registers/VMEM; it never hits HBM.
    x = x_ref[...]                                        # [tm, E] f32
    mean = jnp.mean(x, axis=-1, keepdims=True)
    xc = x - mean
    var = jnp.mean(xc * xc, axis=-1, keepdims=True)
    xn = xc * jax.lax.rsqrt(var + eps) * g_ref[...] + b_ref[...]
    xn = xn.astype(w_ref.dtype)                           # bf16 (or f32) MXU operand
    o_ref[...] = jnp.dot(xn, w_ref[...],
                         preferred_element_type=jnp.float32).astype(o_ref.dtype)


def _matmul_kernel(x_ref, w_ref, o_ref):
    o_ref[...] = jnp.dot(x_ref[...], w_ref[...],
                         preferred_element_type=jnp.float32).astype(o_ref.dtype)


def _outproj_residual_kernel(a_ref, w_ref, res_ref, o_ref):
    o_ref[...] = res_ref[...] + jnp.dot(
        a_ref[...], w_ref[...], preferred_element_type=jnp.float32)


def _rel_shift_in_register(s, bit_masks, keep_mask, zero_mask):
    # Exact Transformer-XL _rel_shift of a per-(b,h) [T, K] score matrix
    # (T == K, mems=None), performed on the in-register value so the unshifted
    # scores never round-trip through HBM:
    #   y[i, j]   = s[i, j + K-1-i]     for j <= i
    #   y[i, i+1] = 0
    #   y[i, j]   = s[i+1, j - i - 2]   for j >= i+2
    # The per-row circular roll by (i + 1) is built from one uniform roll plus
    # log2(T) masked uniform rolls (binary shear decomposition).  All masks are
    # head-invariant and precomputed by the caller.
    t = s.shape[0]
    cur = _roll(s, 1, axis=1)
    for b, bm in enumerate(bit_masks):
        cur = jnp.where(bm, _roll(cur, 1 << b, axis=1), cur)
    sk = cur                                              # sk[i,j] = s[i,(j-1-i)%K]
    sk_up = _roll(sk, t - 1, axis=0)                      # sk[i+1,:] at row i
    return jnp.where(keep_mask, sk,
                     jnp.where(zero_mask, jnp.zeros_like(s), sk_up))


def _attn_kernel(lens_ref, qkv_ref, r_ref, rw_ref, rr_ref, o_ref,
                 *, n_head, d_head, scale, approx_recip):
    # Fused per-batch attention: scores (AC + rel-shifted BD), length mask,
    # softmax and P@V for every head, written head-by-head into one lane-dense
    # [T, H*D] output block.  The O(H*T*K) score tensors never touch HBM.
    b = pl.program_id(0)
    len_b = lens_ref[b]                                   # scalar from SMEM
    t = o_ref.shape[0]
    hd = n_head * d_head
    k_len = r_ref.shape[0]
    d = d_head
    # TODO(synk): mems (memory context, K > T) path not implemented.
    assert k_len == t, "rel-shift path assumes mems=None (K == T)"

    # ---- head-invariant index masks (hoisted out of the per-head loop) ----
    row = jax.lax.broadcasted_iota(jnp.int32, (t, k_len), 0)
    col = jax.lax.broadcasted_iota(jnp.int32, (t, k_len), 1)
    key_valid = col < len_b
    keep_mask = col <= row                                 # lower-triangular part
    zero_mask = col == row + 1                             # zeroed super-diagonal
    bit_masks = [((row >> bb) & 1) == 1
                 for bb in range((t - 1).bit_length())]    # binary-shear masks

    qkv = qkv_ref[...]                                     # [T, 3*H*D] (q | k | v)
    r_all = r_ref[...]                                     # [K, H*D]

    dn_t = (((1,), (1,)), ((), ()))                        # [T,D] x [K,D]^T -> [T,K]
    dn_n = (((1,), (0,)), ((), ()))                        # [T,K] x [K,D]   -> [T,D]

    for h in range(n_head):                                # static unrolled loop
        c0 = h * d
        qh = qkv[:, c0:c0 + d]
        kh = qkv[:, hd + c0:hd + c0 + d]
        vh = qkv[:, 2 * hd + c0:2 * hd + c0 + d]
        rh = r_all[:, c0:c0 + d]

        # Fold the rel-position biases into q (exactly the PyTorch formulation):
        # (q + rw) @ k^T and (q + rr) @ r^T -- two [T,D]x[D,K] MXU dots, no
        # [T,K] broadcast adds for the bias terms.
        q_ac = qh + rw_ref[h]
        q_bd = qh + rr_ref[h]

        ac = jax.lax.dot_general(q_ac, kh, dn_t,
                                 preferred_element_type=jnp.float32)    # [T, K]
        bd = jax.lax.dot_general(q_bd, rh, dn_t,
                                 preferred_element_type=jnp.float32)    # [T, K]
        bd = _rel_shift_in_register(bd, bit_masks, keep_mask, zero_mask)

        score = (ac + bd) * scale
        # Matches PyTorch: masked_fill_(-10000.0) on padded keys (not -inf).
        score = jnp.where(key_valid, score, jnp.float32(-10000.0))
        m = jnp.max(score, axis=-1, keepdims=True)
        e = jnp.exp(score - m)
        denom = jnp.sum(e, axis=-1, keepdims=True)
        pv = jax.lax.dot_general(e.astype(vh.dtype), vh, dn_n,
                                 preferred_element_type=jnp.float32)    # [T, D]
        if approx_recip:
            inv = pl.reciprocal(denom, approx=True)        # EUP slot (bf16 path)
        else:
            inv = 1.0 / denom                              # exact (f32 path)
        # Write this head straight into the output VMEM block (no concat, no
        # per-head accumulators kept live past this iteration).
        o_ref[:, c0:c0 + d] = (pv * inv).astype(o_ref.dtype)


# ----------------------------- Pallas wrappers --------------------------------

def pallas_ln_qkv(x2d, gamma, beta, w_qkv, *, eps=1e-5):
    m, e = x2d.shape
    n3 = w_qkv.shape[1]
    tm = _row_tile(m)
    cdt = w_qkv.dtype
    dsz = jnp.dtype(cdt).itemsize
    return pl.pallas_call(
        functools.partial(_ln_qkv_kernel, eps=eps),
        grid=(m // tm,),
        in_specs=[pl.BlockSpec((tm, e), lambda i: (i, 0)),
                  pl.BlockSpec((1, e), lambda i: (0, 0)),
                  pl.BlockSpec((1, e), lambda i: (0, 0)),
                  pl.BlockSpec((e, n3), lambda i: (0, 0))],
        out_specs=pl.BlockSpec((tm, n3), lambda i: (i, 0)),
        out_shape=jax.ShapeDtypeStruct((m, n3), cdt),
        compiler_params=pltpu.CompilerParams(dimension_semantics=("parallel",)),
        cost_estimate=pl.CostEstimate(
            flops=int(2 * m * e * n3 + 8 * m * e),
            transcendentals=int(m),
            bytes_accessed=int(4 * m * e + e * n3 * dsz + m * n3 * dsz)),
    )(x2d, gamma, beta, w_qkv)


def pallas_matmul(x, w, out_dtype):
    m, kdim = x.shape
    n = w.shape[1]
    tm = _row_tile(m)
    dsz = jnp.dtype(x.dtype).itemsize
    return pl.pallas_call(
        _matmul_kernel,
        grid=(m // tm,),
        in_specs=[pl.BlockSpec((tm, kdim), lambda i: (i, 0)),
                  pl.BlockSpec((kdim, n), lambda i: (0, 0))],
        out_specs=pl.BlockSpec((tm, n), lambda i: (i, 0)),
        out_shape=jax.ShapeDtypeStruct((m, n), out_dtype),
        compiler_params=pltpu.CompilerParams(dimension_semantics=("parallel",)),
        cost_estimate=pl.CostEstimate(
            flops=int(2 * m * kdim * n), transcendentals=0,
            bytes_accessed=int(dsz * (m * kdim + kdim * n + m * n))),
    )(x, w)


def pallas_outproj_residual(a, w, res):
    m, hd = a.shape
    e = w.shape[1]
    tm = _row_tile(m)
    dsz = jnp.dtype(a.dtype).itemsize
    return pl.pallas_call(
        _outproj_residual_kernel,
        grid=(m // tm,),
        in_specs=[pl.BlockSpec((tm, hd), lambda i: (i, 0)),
                  pl.BlockSpec((hd, e), lambda i: (0, 0)),
                  pl.BlockSpec((tm, e), lambda i: (i, 0))],
        out_specs=pl.BlockSpec((tm, e), lambda i: (i, 0)),
        out_shape=jax.ShapeDtypeStruct((m, e), jnp.float32),
        compiler_params=pltpu.CompilerParams(dimension_semantics=("parallel",)),
        cost_estimate=pl.CostEstimate(
            flops=int(2 * m * hd * e + m * e), transcendentals=0,
            bytes_accessed=int(dsz * (m * hd + hd * e) + 4 * 2 * m * e)),
    )(a, w, res)


def pallas_fused_attention(eff_lens, qkv, r, rw, rr, *, scale, n_head,
                           d_head, out_dtype, approx_recip):
    bsz, t, three_hd = qkv.shape
    h, d = n_head, d_head
    hd = h * d
    assert three_hd == 3 * hd
    k_len = r.shape[0]
    dsz = jnp.dtype(qkv.dtype).itemsize

    # Explicit VMEM budget: double-buffered in/out blocks + f32 score temps.
    # TODO(synk): for v7x (64 MiB physical) and long T, switch to the flash-style
    # q/k tiling before this budget grows past ~48 MiB.
    block_bytes = 2 * dsz * (t * 3 * hd + t * hd) + 2 * dsz * (k_len * hd + 2 * h * d)
    temp_bytes = 10 * t * k_len * 4 + 6 * t * d * 4
    vmem_limit = int(min(100 * 1024 * 1024,
                         max(32 * 1024 * 1024, 2 * (block_bytes + temp_bytes))))

    grid_spec = pltpu.PrefetchScalarGridSpec(
        num_scalar_prefetch=1,
        grid=(bsz,),
        in_specs=[
            pl.BlockSpec((None, t, three_hd), lambda i, lens: (i, 0, 0)),  # fused q|k|v
            pl.BlockSpec((k_len, hd), lambda i, lens: (0, 0)),             # r (reused)
            pl.BlockSpec((h, 1, d), lambda i, lens: (0, 0, 0)),            # r_w_bias
            pl.BlockSpec((h, 1, d), lambda i, lens: (0, 0, 0)),            # r_r_bias
        ],
        out_specs=pl.BlockSpec((None, t, hd), lambda i, lens: (i, 0, 0)),
    )
    return pl.pallas_call(
        functools.partial(_attn_kernel, n_head=h, d_head=d, scale=scale,
                          approx_recip=approx_recip),
        grid_spec=grid_spec,
        out_shape=jax.ShapeDtypeStruct((bsz, t, hd), out_dtype),
        compiler_params=pltpu.CompilerParams(
            dimension_semantics=("parallel",),
            vmem_limit_bytes=vmem_limit),
        cost_estimate=pl.CostEstimate(
            flops=int(6 * bsz * h * t * k_len * d),
            transcendentals=int(bsz * h * t * k_len),
            bytes_accessed=int(dsz * (bsz * t * 4 * hd + k_len * hd))),
    )(eff_lens, qkv, r, rw, rr)


# ----------------------------- JAX glue ---------------------------------------

def sinusoidal_pos_enc(len_k, demb):
    # TODO(synk): `self.pe` is None in __init__ (injected externally upstream);
    # use a deterministic Transformer-XL sinusoidal positional encoding here.
    # Assumes an even embedding dim.
    pos_seq = jnp.arange(len_k - 1, -1, -1, dtype=jnp.float32)
    inv_freq = 1.0 / (10000.0 ** (jnp.arange(0, demb, 2, dtype=jnp.float32) / demb))
    sinusoid = pos_seq[:, None] * inv_freq[None, :]
    return jnp.concatenate([jnp.sin(sinusoid), jnp.cos(sinusoid)], axis=-1)


def init_params(key, idim, n_head, d_head):
    E, H, D = idim, n_head, d_head
    ks = jax.random.split(key, 5)

    def uni(k, shape, bound):
        return jax.random.uniform(k, shape, jnp.float32, -bound, bound)

    return {
        "gamma": jnp.ones((1, E), jnp.float32),
        "beta": jnp.zeros((1, E), jnp.float32),
        # linear weights stored as [in, out] so y = x @ W
        "w_qkv": uni(ks[0], (E, 3 * H * D), 1.0 / math.sqrt(E)),
        "w_pos": uni(ks[1], (E, H * D), 1.0 / math.sqrt(E)),
        "w_out": uni(ks[2], (H * D, E), 1.0 / math.sqrt(H * D)),
        # xavier_uniform for the relative-position biases
        "r_r_bias": uni(ks[3], (H, D), math.sqrt(6.0 / (H + D))),
        "r_w_bias": uni(ks[4], (H, D), math.sqrt(6.0 / (H + D))),
    }


def mhsa_forward(params, x, lens, *, n_head, d_head,
                 compute_dtype=jnp.bfloat16):
    # TODO(synk): mems (memory context) path not implemented; assumes mems=None.
    bsz, t, e = x.shape
    h, d = n_head, d_head
    hd = h * d
    k_len = t
    scale = 1.0 / math.sqrt(d)
    cdt = compute_dtype

    xf = x.reshape(bsz * t, e)                            # free (leading-dim) reshape

    # LayerNorm fused with ONE wide QKV projection (xn never hits HBM).
    qkv2 = pallas_ln_qkv(xf, params["gamma"], params["beta"],
                         params["w_qkv"].astype(cdt))
    qkv = qkv2.reshape(bsz, t, 3 * hd)                    # free reshape, no copy

    # Positional-key projection.
    pos_enc = sinusoidal_pos_enc(k_len, e).astype(cdt)
    r = pallas_matmul(pos_enc, params["w_pos"].astype(cdt), cdt)   # [K, H*D]

    rw = params["r_w_bias"].reshape(h, 1, d).astype(cdt)
    rr = params["r_r_bias"].reshape(h, 1, d).astype(cdt)

    # PyTorch disables masking entirely when all lens are equal.
    all_equal = jnp.all(lens == lens[0])
    eff_lens = jnp.where(all_equal, jnp.full_like(lens, k_len), lens).astype(jnp.int32)

    # Exact softmax normalization on the f32 path, EUP approx on the bf16 path.
    approx = jnp.dtype(cdt) != jnp.dtype(jnp.float32)

    # Fused scores + rel-shift + mask + softmax + P@V; lane-dense [B, T, H*D].
    attn = pallas_fused_attention(eff_lens, qkv, r, rw, rr, scale=scale,
                                  n_head=h, d_head=d, out_dtype=cdt,
                                  approx_recip=approx)

    # Output projection fused with the residual add (dropouts are p=0.0).
    out = pallas_outproj_residual(attn.reshape(bsz * t, hd),
                                  params["w_out"].astype(cdt), xf)
    return out.reshape(bsz, t, e), lens


# --------------------------- pure-JAX reference --------------------------------

def reference_forward(params, x, lens, n_head, d_head):
    B, T, E = x.shape
    H, D = n_head, d_head
    K = T
    scale = 1.0 / math.sqrt(D)
    gamma = params["gamma"].reshape(E)
    beta = params["beta"].reshape(E)
    mean = x.mean(-1, keepdims=True)
    var = ((x - mean) ** 2).mean(-1, keepdims=True)
    xn = (x - mean) / jnp.sqrt(var + 1e-5) * gamma + beta
    we = jnp.transpose(xn, (1, 0, 2))                     # [T, B, E]
    heads = we @ params["w_qkv"]
    q, k, v = jnp.split(heads, 3, axis=-1)
    q = q.reshape(T, B, H, D)
    k = k.reshape(K, B, H, D)
    v = v.reshape(K, B, H, D)
    r = (sinusoidal_pos_enc(K, E) @ params["w_pos"]).reshape(K, H, D)
    rwq = q + params["r_w_bias"]
    rrq = q + params["r_r_bias"]
    AC = jnp.einsum("ibnd,jbnd->ijbn", rwq, k)
    BD = jnp.einsum("ibnd,jnd->ijbn", rrq, r)
    zp = jnp.zeros((T, 1, B, H), BD.dtype)
    BDp = jnp.concatenate([zp, BD], axis=1).reshape(K + 1, T, B, H)
    BD = BDp[1:].reshape(T, K, B, H)
    score = (AC + BD) * scale
    all_equal = jnp.all(lens == lens[0])
    eff_lens = jnp.where(all_equal, jnp.full_like(lens, K), lens)
    mask = jnp.arange(K)[:, None] >= eff_lens[None, :]
    score = jnp.where(mask[None, :, :, None], -10000.0, score)
    prob = jax.nn.softmax(score, axis=1)
    av = jnp.einsum("ijbn,jbnd->ibnd", prob, v).reshape(T, B, H * D)
    out = jnp.transpose(av @ params["w_out"], (1, 0, 2))
    return x + out, lens


# --------------------------------- main ----------------------------------------

if __name__ == "__main__":
    B, T, E = 2, 8, 32          # batch, seq, idim
    H, D = 2, 8                 # num_heads, d_head

    key = jax.random.PRNGKey(0)
    kx, kp = jax.random.split(key)
    x = jax.random.normal(kx, (B, T, E), jnp.float32)
    lens = jnp.array([8, 6], jnp.int32)      # unequal -> exercises the mask path
    params = init_params(kp, E, H, D)

    ref, _ = reference_forward(params, x, lens, H, D)

    # f32 compute path: tight structural-correctness check (masked + unmasked).
    fwd32 = jax.jit(functools.partial(mhsa_forward, n_head=H, d_head=D,
                                      compute_dtype=jnp.float32))
    out32, _ = fwd32(params, x, lens)
    out32 = jax.block_until_ready(out32)
    err32 = float(jnp.max(jnp.abs(out32 - ref)))
    assert jnp.allclose(out32, ref, atol=5e-3, rtol=5e-3), f"f32 max abs err {err32}"

    lens_eq = jnp.array([8, 8], jnp.int32)   # equal lens -> PyTorch disables mask
    out_eq, _ = fwd32(params, x, lens_eq)
    out_eq = jax.block_until_ready(out_eq)
    ref_eq, _ = reference_forward(params, x, lens_eq, H, D)
    err_eq = float(jnp.max(jnp.abs(out_eq - ref_eq)))
    assert jnp.allclose(out_eq, ref_eq, atol=5e-3, rtol=5e-3), \
        f"f32 (equal lens) max abs err {err_eq}"

    # bf16 MXU-operand path (default / perf): looser numerical check.
    fwd16 = jax.jit(functools.partial(mhsa_forward, n_head=H, d_head=D,
                                      compute_dtype=jnp.bfloat16))
    out16, out_lens = fwd16(params, x, lens)
    out16 = jax.block_until_ready(out16)
    err16 = float(jnp.max(jnp.abs(out16 - ref)))
    assert out16.shape == (B, T, E)
    assert jnp.allclose(out16, ref, atol=5e-2, rtol=5e-2), f"bf16 max abs err {err16}"

    print("KERNEL_OK")
</pallas_src>

<mosaic_0001>
module attributes {stable_mosaic.version = 11 : i64} {
  func.func @_matmul_kernel(%arg0: i32, %arg1: memref<8x32xf32, #tpu.memory_space<vmem>>, %arg2: memref<32x16xf32, #tpu.memory_space<vmem>>, %arg3: memref<8x16xf32, #tpu.memory_space<vmem>>) attributes {dimension_semantics = [#tpu.dimension_semantics<parallel>], iteration_bounds = array<i64: 1>, scalar_prefetch = 0 : i64, scratch_operands = 0 : i64, tpu.core_type = #tpu.core_type<tc>, window_params = [{transform_indices = @transform_0, window_bounds = array<i64: 8, 32>}, {pipeline_mode = #tpu.pipeline_mode<synchronous>, transform_indices = @transform_1, window_bounds = array<i64: 32, 16>}, {transform_indices = @transform_2, window_bounds = array<i64: 8, 16>}]} {
    %c0 = arith.constant 0 : index
    %c0_0 = arith.constant 0 : index
    %0 = vector.load %arg1[%c0, %c0_0] : memref<8x32xf32, #tpu.memory_space<vmem>>, vector<8x32xf32>
    %c0_1 = arith.constant 0 : index
    %c0_2 = arith.constant 0 : index
    %1 = vector.load %arg2[%c0_1, %c0_2] : memref<32x16xf32, #tpu.memory_space<vmem>>, vector<32x16xf32>
    %cst = arith.constant dense<0.000000e+00> : vector<8x16xf32>
    %2 = tpu.matmul %0, %1, %cst {dimension_numbers = #tpu.dot_dimension_numbers<[1], [0], [0], [1], [0, 0, 1, 1], [], []>, precision = #tpu.contract_precision<fp32>} : vector<8x32xf32>, vector<32x16xf32>, vector<8x16xf32> -> vector<8x16xf32>
    %c0_3 = arith.constant 0 : index
    %c0_4 = arith.constant 0 : index
    %3 = vector.load %arg3[%c0_3, %c0_4] : memref<8x16xf32, #tpu.memory_space<vmem>>, vector<8x16xf32>
    tpu.vector_store %arg3[%c0_3, %c0_4], %2 {strides = array<i32>} : memref<8x16xf32, #tpu.memory_space<vmem>>, vector<8x16xf32>,
    return
  }
  func.func @transform_0(%arg0: i32) -> (i32, i32) {
    %c0_i32 = arith.constant 0 : i32
    %c0_i32_0 = arith.constant 0 : i32
    return %arg0, %c0_i32 : i32, i32
  }
  func.func @transform_1(%arg0: i32) -> (i32, i32) {
    %c0_i32 = arith.constant 0 : i32
    %c0_i32_0 = arith.constant 0 : i32
    %c0_i32_1 = arith.constant 0 : i32
    return %c0_i32, %c0_i32_0 : i32, i32
  }
  func.func @transform_2(%arg0: i32) -> (i32, i32) {
    %c0_i32 = arith.constant 0 : i32
    %c0_i32_0 = arith.constant 0 : i32
    return %arg0, %c0_i32 : i32, i32
  }
}

module attributes {stable_mosaic.version = 11 : i64} {
  func.func @_outproj_residual_kernel(%arg0: i32, %arg1: memref<16x16xf32, #tpu.memory_space<vmem>>, %arg2: memref<16x32xf32, #tpu.memory_space<vmem>>, %arg3: memref<16x32xf32, #tpu.memory_space<vmem>>, %arg4: memref<16x32xf32, #tpu.memory_space<vmem>>) attributes {dimension_semantics = [#tpu.dimension_semantics<parallel>], iteration_bounds = array<i64: 1>, scalar_prefetch = 0 : i64, scratch_operands = 0 : i64, tpu.core_type = #tpu.core_type<tc>, window_params = [{transform_indices = @transform_0, window_bounds = array<i64: 16, 16>}, {pipeline_mode = #tpu.pipeline_mode<synchronous>, transform_indices = @transform_1, window_bounds = array<i64: 16, 32>}, {transform_indices = @transform_2, window_bounds = array<i64: 16, 32>}, {transform_indices = @transform_3, window_bounds = array<i64: 16, 32>}]} {
    %c0 = arith.constant 0 : index
    %c0_0 = arith.constant 0 : index
    %0 = vector.load %arg3[%c0, %c0_0] : memref<16x32xf32, #tpu.memory_space<vmem>>, vector<16x32xf32>
    %c0_1 = arith.constant 0 : index
    %c0_2 = arith.constant 0 : index
    %1 = vector.load %arg1[%c0_1, %c0_2] : memref<16x16xf32, #tpu.memory_space<vmem>>, vector<16x16xf32>
    %c0_3 = arith.constant 0 : index
    %c0_4 = arith.constant 0 : index
    %2 = vector.load %arg2[%c0_3, %c0_4] : memref<16x32xf32, #tpu.memory_space<vmem>>, vector<16x32xf32>
    %cst = arith.constant dense<0.000000e+00> : vector<16x32xf32>
    %3 = tpu.matmul %1, %2, %cst {dimension_numbers = #tpu.dot_dimension_numbers<[1], [0], [0], [1], [0, 0, 1, 1], [], []>, precision = #tpu.contract_precision<fp32>} : vector<16x16xf32>, vector<16x32xf32>, vector<16x32xf32> -> vector<16x32xf32>
    %4 = arith.addf %0, %3 : vector<16x32xf32>
    %c0_5 = arith.constant 0 : index
    %c0_6 = arith.constant 0 : index
    %5 = vector.load %arg4[%c0_5, %c0_6] : memref<16x32xf32, #tpu.memory_space<vmem>>, vector<16x32xf32>
    tpu.vector_store %arg4[%c0_5, %c0_6], %4 {strides = array<i32>} : memref<16x32xf32, #tpu.memory_space<vmem>>, vector<16x32xf32>,
    return
  }
  func.func @transform_0(%arg0: i32) -> (i32, i32) {
    %c0_i32 = arith.constant 0 : i32
    %c0_i32_0 = arith.constant 0 : i32
    return %arg0, %c0_i32 : i32, i32
  }
  func.func @transform_1(%arg0: i32) -> (i32, i32) {
    %c0_i32 = arith.constant 0 : i32
    %c0_i32_0 = arith.constant 0 : i32
    %c0_i32_1 = arith.constant 0 : i32
    return %c0_i32, %c0_i32_0 : i32, i32
  }
  func.func @transform_2(%arg0: i32) -> (i32, i32) {
    %c0_i32 = arith.constant 0 : i32
    %c0_i32_0 = arith.constant 0 : i32
    return %arg0, %c0_i32 : i32, i32
  }
  func.func @transform_3(%arg0: i32) -> (i32, i32) {
    %c0_i32 = arith.constant 0 : i32
    %c0_i32_0 = arith.constant 0 : i32
    return %arg0, %c0_i32 : i32, i32
  }
}

module attributes {stable_mosaic.version = 11 : i64} {
  func.func @_ln_qkv_kernel(%arg0: i32, %arg1: memref<16x32xf32, #tpu.memory_space<vmem>>, %arg2: memref<1x32xf32, #tpu.memory_space<vmem>>, %arg3: memref<1x32xf32, #tpu.memory_space<vmem>>, %arg4: memref<32x48xf32, #tpu.memory_space<vmem>>, %arg5: memref<16x48xf32, #tpu.memory_space<vmem>>) attributes {dimension_semantics = [#tpu.dimension_semantics<parallel>], iteration_bounds = array<i64: 1>, scalar_prefetch = 0 : i64, scratch_operands = 0 : i64, tpu.core_type = #tpu.core_type<tc>, window_params = [{transform_indices = @transform_0, window_bounds = array<i64: 16, 32>}, {pipeline_mode = #tpu.pipeline_mode<synchronous>, transform_indices = @transform_1, window_bounds = array<i64: 1, 32>}, {pipeline_mode = #tpu.pipeline_mode<synchronous>, transform_indices = @transform_2, window_bounds = array<i64: 1, 32>}, {pipeline_mode = #tpu.pipeline_mode<synchronous>, transform_indices = @transform_3, window_bounds = array<i64: 32, 48>}, {transform_indices = @transform_4, window_bounds = array<i64: 16, 48>}]} {
    %c0 = arith.constant 0 : index
    %c0_0 = arith.constant 0 : index
    %0 = vector.load %arg1[%c0, %c0_0] : memref<16x32xf32, #tpu.memory_space<vmem>>, vector<16x32xf32>
    %cst = arith.constant dense<0.000000e+00> : vector<16xf32>
    %1 = vector.multi_reduction <add>, %0, %cst [1] : vector<16x32xf32> to vector<16xf32>
    %2 = vector.shape_cast %1 : vector<16xf32> to vector<16x1xf32>
    %cst_1 = arith.constant 3.200000e+01 : f32
    %3 = vector.broadcast %cst_1 : f32 to vector<16x1xf32>
    %4 = arith.divf %2, %3 : vector<16x1xf32>
    %5 = vector.broadcast %4 : vector<16x1xf32> to vector<16x32xf32>
    %6 = arith.subf %0, %5 : vector<16x32xf32>
    %7 = arith.mulf %6, %6 : vector<16x32xf32>
    %cst_2 = arith.constant dense<0.000000e+00> : vector<16xf32>
    %8 = vector.multi_reduction <add>, %7, %cst_2 [1] : vector<16x32xf32> to vector<16xf32>
    %9 = vector.shape_cast %8 : vector<16xf32> to vector<16x1xf32>
    %cst_3 = arith.constant 3.200000e+01 : f32
    %10 = vector.broadcast %cst_3 : f32 to vector<16x1xf32>
    %11 = arith.divf %9, %10 : vector<16x1xf32>
    %cst_4 = arith.constant 9.99999974E-6 : f32
    %12 = vector.broadcast %cst_4 : f32 to vector<16x1xf32>
    %13 = arith.addf %11, %12 : vector<16x1xf32>
    %14 = math.rsqrt %13 : vector<16x1xf32>
    %15 = vector.broadcast %14 : vector<16x1xf32> to vector<16x32xf32>
    %16 = arith.mulf %6, %15 : vector<16x32xf32>
    %c0_5 = arith.constant 0 : index
    %c0_6 = arith.constant 0 : index
    %17 = vector.load %arg2[%c0_5, %c0_6] : memref<1x32xf32, #tpu.memory_space<vmem>>, vector<1x32xf32>
    %18 = vector.broadcast %17 : vector<1x32xf32> to vector<16x32xf32>
    %19 = arith.mulf %16, %18 : vector<16x32xf32>
    %c0_7 = arith.constant 0 : index
    %c0_8 = arith.constant 0 : index
    %20 = vector.load %arg3[%c0_7, %c0_8] : memref<1x32xf32, #tpu.memory_space<vmem>>, vector<1x32xf32>
    %21 = vector.broadcast %20 : vector<1x32xf32> to vector<16x32xf32>
    %22 = arith.addf %19, %21 : vector<16x32xf32>
    %c0_9 = arith.constant 0 : index
    %c0_10 = arith.constant 0 : index
    %23 = vector.load %arg4[%c0_9, %c0_10] : memref<32x48xf32, #tpu.memory_space<vmem>>, vector<32x48xf32>
    %cst_11 = arith.constant dense<0.000000e+00> : vector<16x48xf32>
    %24 = tpu.matmul %22, %23, %cst_11 {dimension_numbers = #tpu.dot_dimension_numbers<[1], [0], [0], [1], [0, 0, 1, 1], [], []>, precision = #tpu.contract_precision<fp32>} : vector<16x32xf32>, vector<32x48xf32>, vector<16x48xf32> -> vector<16x48xf32>
    %c0_12 = arith.constant 0 : index
    %c0_13 = arith.constant 0 : index
    %25 = vector.load %arg5[%c0_12, %c0_13] : memref<16x48xf32, #tpu.memory_space<vmem>>, vector<16x48xf32>
    tpu.vector_store %arg5[%c0_12, %c0_13], %24 {strides = array<i32>} : memref<16x48xf32, #tpu.memory_space<vmem>>, vector<16x48xf32>,
    return
  }
  func.func @transform_0(%arg0: i32) -> (i32, i32) {
    %c0_i32 = arith.constant 0 : i32
    %c0_i32_0 = arith.constant 0 : i32
    return %arg0, %c0_i32 : i32, i32
  }
  func.func @transform_1(%arg0: i32) -> (i32, i32) {
    %c0_i32 = arith.constant 0 : i32
    %c0_i32_0 = arith.constant 0 : i32
    %c0_i32_1 = arith.constant 0 : i32
    return %c0_i32, %c0_i32_0 : i32, i32
  }
  func.func @transform_2(%arg0: i32) -> (i32, i32) {
    %c0_i32 = arith.constant 0 : i32
    %c0_i32_0 = arith.constant 0 : i32
    %c0_i32_1 = arith.constant 0 : i32
    return %c0_i32, %c0_i32_0 : i32, i32
  }
  func.func @transform_3(%arg0: i32) -> (i32, i32) {
    %c0_i32 = arith.constant 0 : i32
    %c0_i32_0 = arith.constant 0 : i32
    %c0_i32_1 = arith.constant 0 : i32
    return %c0_i32, %c0_i32_0 : i32, i32
  }
  func.func @transform_4(%arg0: i32) -> (i32, i32) {
    %c0_i32 = arith.constant 0 : i32
    %c0_i32_0 = arith.constant 0 : i32
    return %arg0, %c0_i32 : i32, i32
  }
}

module attributes {stable_mosaic.version = 11 : i64} {
  func.func @_attn_kernel(%arg0: i32, %arg1: memref<2xi32, #tpu.memory_space<smem>>, %arg2: memref<1x8x48xf32, #tpu.memory_space<vmem>>, %arg3: memref<8x16xf32, #tpu.memory_space<vmem>>, %arg4: memref<2x1x8xf32, #tpu.memory_space<vmem>>, %arg5: memref<2x1x8xf32, #tpu.memory_space<vmem>>, %arg6: memref<1x8x16xf32, #tpu.memory_space<vmem>>) attributes {dimension_semantics = [#tpu.dimension_semantics<parallel>], iteration_bounds = array<i64: 2>, scalar_prefetch = 1 : i64, scratch_operands = 0 : i64, tpu.core_type = #tpu.core_type<tc>, window_params = [{transform_indices = @transform_0, window_bounds = array<i64: 1, 8, 48>}, {pipeline_mode = #tpu.pipeline_mode<synchronous>, transform_indices = @transform_1, window_bounds = array<i64: 8, 16>}, {pipeline_mode = #tpu.pipeline_mode<synchronous>, transform_indices = @transform_2, window_bounds = array<i64: 2, 1, 8>}, {pipeline_mode = #tpu.pipeline_mode<synchronous>, transform_indices = @transform_3, window_bounds = array<i64: 2, 1, 8>}, {transform_indices = @transform_4, window_bounds = array<i64: 1, 8, 16>}]} {
    %0 = arith.index_cast %arg0 : i32 to index
    %1 = memref.load %arg1[%0] : memref<2xi32, #tpu.memory_space<smem>>
    %2 = tpu.iota {dimensions = array<i32: 0>} : vector<8x8xi32>
    %3 = tpu.iota {dimensions = array<i32: 1>} : vector<8x8xi32>
    %4 = vector.broadcast %1 : i32 to vector<8x8xi32>
    %5 = arith.cmpi slt, %3, %4 : vector<8x8xi32>
    %6 = arith.cmpi sle, %3, %2 : vector<8x8xi32>
    %c1_i32 = arith.constant 1 : i32
    %7 = vector.broadcast %c1_i32 : i32 to vector<8x8xi32>
    %8 = arith.addi %2, %7 : vector<8x8xi32>
    %9 = arith.cmpi eq, %3, %8 : vector<8x8xi32>
    %c0_i32 = arith.constant 0 : i32
    %10 = vector.broadcast %c0_i32 : i32 to vector<8x8xi32>
    %11 = arith.shrsi %2, %10 : vector<8x8xi32>
    %c1_i32_0 = arith.constant 1 : i32
    %12 = vector.broadcast %c1_i32_0 : i32 to vector<8x8xi32>
    %13 = arith.andi %11, %12 : vector<8x8xi32>
    %c1_i32_1 = arith.constant 1 : i32
    %14 = vector.broadcast %c1_i32_1 : i32 to vector<8x8xi32>
    %15 = arith.cmpi eq, %13, %14 : vector<8x8xi32>
    %c1_i32_2 = arith.constant 1 : i32
    %16 = vector.broadcast %c1_i32_2 : i32 to vector<8x8xi32>
    %17 = arith.shrsi %2, %16 : vector<8x8xi32>
    %c1_i32_3 = arith.constant 1 : i32
    %18 = vector.broadcast %c1_i32_3 : i32 to vector<8x8xi32>
    %19 = arith.andi %17, %18 : vector<8x8xi32>
    %c1_i32_4 = arith.constant 1 : i32
    %20 = vector.broadcast %c1_i32_4 : i32 to vector<8x8xi32>
    %21 = arith.cmpi eq, %19, %20 : vector<8x8xi32>
    %c2_i32 = arith.constant 2 : i32
    %22 = vector.broadcast %c2_i32 : i32 to vector<8x8xi32>
    %23 = arith.shrsi %2, %22 : vector<8x8xi32>
    %c1_i32_5 = arith.constant 1 : i32
    %24 = vector.broadcast %c1_i32_5 : i32 to vector<8x8xi32>
    %25 = arith.andi %23, %24 : vector<8x8xi32>
    %c1_i32_6 = arith.constant 1 : i32
    %26 = vector.broadcast %c1_i32_6 : i32 to vector<8x8xi32>
    %27 = arith.cmpi eq, %25, %26 : vector<8x8xi32>
    %c0 = arith.constant 0 : index
    %c0_7 = arith.constant 0 : index
    %c0_8 = arith.constant 0 : index
    %28 = vector.load %arg2[%c0, %c0_7, %c0_8] : memref<1x8x48xf32, #tpu.memory_space<vmem>>, vector<1x8x48xf32>
    %29 = vector.shape_cast %28 : vector<1x8x48xf32> to vector<8x48xf32>
    %c0_9 = arith.constant 0 : index
    %c0_10 = arith.constant 0 : index
    %30 = vector.load %arg3[%c0_9, %c0_10] : memref<8x16xf32, #tpu.memory_space<vmem>>, vector<8x16xf32>
    %31 = vector.extract_strided_slice %29 {offsets = [0, 0], sizes = [8, 8], strides = [1, 1]} : vector<8x48xf32> to vector<8x8xf32>
    %32 = vector.extract_strided_slice %29 {offsets = [0, 16], sizes = [8, 8], strides = [1, 1]} : vector<8x48xf32> to vector<8x8xf32>
    %33 = vector.extract_strided_slice %29 {offsets = [0, 32], sizes = [8, 8], strides = [1, 1]} : vector<8x48xf32> to vector<8x8xf32>
    %34 = vector.extract_strided_slice %30 {offsets = [0, 0], sizes = [8, 8], strides = [1, 1]} : vector<8x16xf32> to vector<8x8xf32>
    %c0_11 = arith.constant 0 : index
    %c0_12 = arith.constant 0 : index
    %c0_13 = arith.constant 0 : index
    %35 = vector.load %arg4[%c0_11, %c0_12, %c0_13] : memref<2x1x8xf32, #tpu.memory_space<vmem>>, vector<1x1x8xf32>
    %36 = vector.shape_cast %35 : vector<1x1x8xf32> to vector<1x8xf32>
    %37 = vector.broadcast %36 : vector<1x8xf32> to vector<8x8xf32>
    %38 = arith.addf %31, %37 : vector<8x8xf32>
    %c0_14 = arith.constant 0 : index
    %c0_15 = arith.constant 0 : index
    %c0_16 = arith.constant 0 : index
    %39 = vector.load %arg5[%c0_14, %c0_15, %c0_16] : memref<2x1x8xf32, #tpu.memory_space<vmem>>, vector<1x1x8xf32>
    %40 = vector.shape_cast %39 : vector<1x1x8xf32> to vector<1x8xf32>
    %41 = vector.broadcast %40 : vector<1x8xf32> to vector<8x8xf32>
    %42 = arith.addf %31, %41 : vector<8x8xf32>
    %cst = arith.constant dense<0.000000e+00> : vector<8x8xf32>
    %43 = tpu.matmul %38, %32, %cst {dimension_numbers = #tpu.dot_dimension_numbers<[1], [1], [0], [0], [0, 0, 1, 0], [], []>, precision = #tpu.contract_precision<fp32>} : vector<8x8xf32>, vector<8x8xf32>, vector<8x8xf32> -> vector<8x8xf32>
    %cst_17 = arith.constant dense<0.000000e+00> : vector<8x8xf32>
    %44 = tpu.matmul %42, %34, %cst_17 {dimension_numbers = #tpu.dot_dimension_numbers<[1], [1], [0], [0], [0, 0, 1, 0], [], []>, precision = #tpu.contract_precision<fp32>} : vector<8x8xf32>, vector<8x8xf32>, vector<8x8xf32> -> vector<8x8xf32>
    %45 = vector.extract_strided_slice %44 {offsets = [0, 7], sizes = [8, 1], strides = [1, 1]} : vector<8x8xf32> to vector<8x1xf32>
    %46 = vector.extract_strided_slice %44 {offsets = [0, 0], sizes = [8, 7], strides = [1, 1]} : vector<8x8xf32> to vector<8x7xf32>
    %47 = tpu.concatenate %45, %46 in 1 : vector<8x1xf32>, vector<8x7xf32> -> vector<8x8xf32>
    %48 = vector.extract_strided_slice %47 {offsets = [0, 7], sizes = [8, 1], strides = [1, 1]} : vector<8x8xf32> to vector<8x1xf32>
    %49 = vector.extract_strided_slice %47 {offsets = [0, 0], sizes = [8, 7], strides = [1, 1]} : vector<8x8xf32> to vector<8x7xf32>
    %50 = tpu.concatenate %48, %49 in 1 : vector<8x1xf32>, vector<8x7xf32> -> vector<8x8xf32>
    %51 = arith.select %15, %50, %47 : vector<8x8xi1>, vector<8x8xf32>
    %52 = vector.extract_strided_slice %51 {offsets = [0, 6], sizes = [8, 2], strides = [1, 1]} : vector<8x8xf32> to vector<8x2xf32>
    %53 = vector.extract_strided_slice %51 {offsets = [0, 0], sizes = [8, 6], strides = [1, 1]} : vector<8x8xf32> to vector<8x6xf32>
    %54 = tpu.concatenate %52, %53 in 1 : vector<8x2xf32>, vector<8x6xf32> -> vector<8x8xf32>
    %55 = arith.select %21, %54, %51 : vector<8x8xi1>, vector<8x8xf32>
    %56 = vector.extract_strided_slice %55 {offsets = [0, 4], sizes = [8, 4], strides = [1, 1]} : vector<8x8xf32> to vector<8x4xf32>
    %57 = vector.extract_strided_slice %55 {offsets = [0, 0], sizes = [8, 4], strides = [1, 1]} : vector<8x8xf32> to vector<8x4xf32>
    %58 = tpu.concatenate %56, %57 in 1 : vector<8x4xf32>, vector<8x4xf32> -> vector<8x8xf32>
    %59 = arith.select %27, %58, %55 : vector<8x8xi1>, vector<8x8xf32>
    %60 = vector.extract_strided_slice %59 {offsets = [1, 0], sizes = [7, 8], strides = [1, 1]} : vector<8x8xf32> to vector<7x8xf32>
    %61 = vector.extract_strided_slice %59 {offsets = [0, 0], sizes = [1, 8], strides = [1, 1]} : vector<8x8xf32> to vector<1x8xf32>
    %62 = tpu.concatenate %60, %61 in 0 : vector<7x8xf32>, vector<1x8xf32> -> vector<8x8xf32>
    %cst_18 = arith.constant 0.000000e+00 : f32
    %63 = vector.broadcast %cst_18 : f32 to vector<8x8xf32>
    %64 = arith.select %9, %63, %62 : vector<8x8xi1>, vector<8x8xf32>
    %65 = arith.select %6, %59, %64 : vector<8x8xi1>, vector<8x8xf32>
    %66 = arith.addf %43, %65 : vector<8x8xf32>
    %cst_19 = arith.constant 0.353553385 : f32
    %67 = vector.broadcast %cst_19 : f32 to vector<8x8xf32>
    %68 = arith.mulf %66, %67 : vector<8x8xf32>
    %cst_20 = arith.constant -1.000000e+04 : f32
    %69 = vector.broadcast %cst_20 : f32 to vector<8x8xf32>
    %70 = arith.select %5, %68, %69 : vector<8x8xi1>, vector<8x8xf32>
    %cst_21 = arith.constant dense<0xFF800000> : vector<8xf32>
    %71 = vector.multi_reduction <maximumf>, %70, %cst_21 [1] : vector<8x8xf32> to vector<8xf32>
    %72 = vector.shape_cast %71 : vector<8xf32> to vector<8x1xf32>
    %73 = vector.broadcast %72 : vector<8x1xf32> to vector<8x8xf32>
    %74 = arith.subf %70, %73 : vector<8x8xf32>
    %75 = math.exp %74 : vector<8x8xf32>
    %cst_22 = arith.constant dense<0.000000e+00> : vector<8xf32>
    %76 = vector.multi_reduction <add>, %75, %cst_22 [1] : vector<8x8xf32> to vector<8xf32>
    %77 = vector.shape_cast %76 : vector<8xf32> to vector<8x1xf32>
    %cst_23 = arith.constant dense<0.000000e+00> : vector<8x8xf32>
    %78 = tpu.matmul %75, %33, %cst_23 {dimension_numbers = #tpu.dot_dimension_numbers<[1], [0], [0], [1], [0, 0, 1, 1], [], []>, precision = #tpu.contract_precision<fp32>} : vector<8x8xf32>, vector<8x8xf32>, vector<8x8xf32> -> vector<8x8xf32>
    %cst_24 = arith.constant 1.000000e+00 : f32
    %79 = vector.broadcast %cst_24 : f32 to vector<8x1xf32>
    %80 = arith.divf %79, %77 : vector<8x1xf32>
    %81 = vector.broadcast %80 : vector<8x1xf32> to vector<8x8xf32>
    %82 = arith.mulf %78, %81 : vector<8x8xf32>
    %c0_25 = arith.constant 0 : index
    %c0_26 = arith.constant 0 : index
    %c0_27 = arith.constant 0 : index
    %83 = vector.load %arg6[%c0_25, %c0_26, %c0_27] : memref<1x8x16xf32, #tpu.memory_space<vmem>>, vector<1x8x8xf32>
    %84 = vector.shape_cast %83 : vector<1x8x8xf32> to vector<8x8xf32>
    %85 = vector.shape_cast %82 : vector<8x8xf32> to vector<1x8x8xf32>
    tpu.vector_store %arg6[%c0_25, %c0_26, %c0_27], %85 {strides = array<i32>} : memref<1x8x16xf32, #tpu.memory_space<vmem>>, vector<1x8x8xf32>,
    %86 = vector.extract_strided_slice %29 {offsets = [0, 8], sizes = [8, 8], strides = [1, 1]} : vector<8x48xf32> to vector<8x8xf32>
    %87 = vector.extract_strided_slice %29 {offsets = [0, 24], sizes = [8, 8], strides = [1, 1]} : vector<8x48xf32> to vector<8x8xf32>
    %88 = vector.extract_strided_slice %29 {offsets = [0, 40], sizes = [8, 8], strides = [1, 1]} : vector<8x48xf32> to vector<8x8xf32>
    %89 = vector.extract_strided_slice %30 {offsets = [0, 8], sizes = [8, 8], strides = [1, 1]} : vector<8x16xf32> to vector<8x8xf32>
    %c1 = arith.constant 1 : index
    %c0_28 = arith.constant 0 : index
    %c0_29 = arith.constant 0 : index
    %90 = vector.load %arg4[%c1, %c0_28, %c0_29] : memref<2x1x8xf32, #tpu.memory_space<vmem>>, vector<1x1x8xf32>
    %91 = vector.shape_cast %90 : vector<1x1x8xf32> to vector<1x8xf32>
    %92 = vector.broadcast %91 : vector<1x8xf32> to vector<8x8xf32>
    %93 = arith.addf %86, %92 : vector<8x8xf32>
    %c1_30 = arith.constant 1 : index
    %c0_31 = arith.constant 0 : index
    %c0_32 = arith.constant 0 : index
    %94 = vector.load %arg5[%c1_30, %c0_31, %c0_32] : memref<2x1x8xf32, #tpu.memory_space<vmem>>, vector<1x1x8xf32>
    %95 = vector.shape_cast %94 : vector<1x1x8xf32> to vector<1x8xf32>
    %96 = vector.broadcast %95 : vector<1x8xf32> to vector<8x8xf32>
    %97 = arith.addf %86, %96 : vector<8x8xf32>
    %cst_33 = arith.constant dense<0.000000e+00> : vector<8x8xf32>
    %98 = tpu.matmul %93, %87, %cst_33 {dimension_numbers = #tpu.dot_dimension_numbers<[1], [1], [0], [0], [0, 0, 1, 0], [], []>, precision = #tpu.contract_precision<fp32>} : vector<8x8xf32>, vector<8x8xf32>, vector<8x8xf32> -> vector<8x8xf32>
    %cst_34 = arith.constant dense<0.000000e+00> : vector<8x8xf32>
    %99 = tpu.matmul %97, %89, %cst_34 {dimension_numbers = #tpu.dot_dimension_numbers<[1], [1], [0], [0], [0, 0, 1, 0], [], []>, precision = #tpu.contract_precision<fp32>} : vector<8x8xf32>, vector<8x8xf32>, vector<8x8xf32> -> vector<8x8xf32>
    %100 = vector.extract_strided_slice %99 {offsets = [0, 7], sizes = [8, 1], strides = [1, 1]} : vector<8x8xf32> to vector<8x1xf32>
    %101 = vector.extract_strided_slice %99 {offsets = [0, 0], sizes = [8, 7], strides = [1, 1]} : vector<8x8xf32> to vector<8x7xf32>
    %102 = tpu.concatenate %100, %101 in 1 : vector<8x1xf32>, vector<8x7xf32> -> vector<8x8xf32>
    %103 = vector.extract_strided_slice %102 {offsets = [0, 7], sizes = [8, 1], strides = [1, 1]} : vector<8x8xf32> to vector<8x1xf32>
    %104 = vector.extract_strided_slice %102 {offsets = [0, 0], sizes = [8, 7], strides = [1, 1]} : vector<8x8xf32> to vector<8x7xf32>
    %105 = tpu.concatenate %103, %104 in 1 : vector<8x1xf32>, vector<8x7xf32> -> vector<8x8xf32>
    %106 = arith.select %15, %105, %102 : vector<8x8xi1>, vector<8x8xf32>
    %107 = vector.extract_strided_slice %106 {offsets = [0, 6], sizes = [8, 2], strides = [1, 1]} : vector<8x8xf32> to vector<8x2xf32>
    %108 = vector.extract_strided_slice %106 {offsets = [0, 0], sizes = [8, 6], strides = [1, 1]} : vector<8x8xf32> to vector<8x6xf32>
    %109 = tpu.concatenate %107, %108 in 1 : vector<8x2xf32>, vector<8x6xf32> -> vector<8x8xf32>
    %110 = arith.select %21, %109, %106 : vector<8x8xi1>, vector<8x8xf32>
    %111 = vector.extract_strided_slice %110 {offsets = [0, 4], sizes = [8, 4], strides = [1, 1]} : vector<8x8xf32> to vector<8x4xf32>
    %112 = vector.extract_strided_slice %110 {offsets = [0, 0], sizes = [8, 4], strides = [1, 1]} : vector<8x8xf32> to vector<8x4xf32>
    %113 = tpu.concatenate %111, %112 in 1 : vector<8x4xf32>, vector<8x4xf32> -> vector<8x8xf32>
    %114 = arith.select %27, %113, %110 : vector<8x8xi1>, vector<8x8xf32>
    %115 = vector.extract_strided_slice %114 {offsets = [1, 0], sizes = [7, 8], strides = [1, 1]} : vector<8x8xf32> to vector<7x8xf32>
    %116 = vector.extract_strided_slice %114 {offsets = [0, 0], sizes = [1, 8], strides = [1, 1]} : vector<8x8xf32> to vector<1x8xf32>
    %117 = tpu.concatenate %115, %116 in 0 : vector<7x8xf32>, vector<1x8xf32> -> vector<8x8xf32>
    %cst_35 = arith.constant 0.000000e+00 : f32
    %118 = vector.broadcast %cst_35 : f32 to vector<8x8xf32>
    %119 = arith.select %9, %118, %117 : vector<8x8xi1>, vector<8x8xf32>
    %120 = arith.select %6, %114, %119 : vector<8x8xi1>, vector<8x8xf32>
    %121 = arith.addf %98, %120 : vector<8x8xf32>
    %cst_36 = arith.constant 0.353553385 : f32
    %122 = vector.broadcast %cst_36 : f32 to vector<8x8xf32>
    %123 = arith.mulf %121, %122 : vector<8x8xf32>
    %cst_37 = arith.constant -1.000000e+04 : f32
    %124 = vector.broadcast %cst_37 : f32 to vector<8x8xf32>
    %125 = arith.select %5, %123, %124 : vector<8x8xi1>, vector<8x8xf32>
    %cst_38 = arith.constant dense<0xFF800000> : vector<8xf32>
    %126 = vector.multi_reduction <maximumf>, %125, %cst_38 [1] : vector<8x8xf32> to vector<8xf32>
    %127 = vector.shape_cast %126 : vector<8xf32> to vector<8x1xf32>
    %128 = vector.broadcast %127 : vector<8x1xf32> to vector<8x8xf32>
    %129 = arith.subf %125, %128 : vector<8x8xf32>
    %130 = math.exp %129 : vector<8x8xf32>
    %cst_39 = arith.constant dense<0.000000e+00> : vector<8xf32>
    %131 = vector.multi_reduction <add>, %130, %cst_39 [1] : vector<8x8xf32> to vector<8xf32>
    %132 = vector.shape_cast %131 : vector<8xf32> to vector<8x1xf32>
    %cst_40 = arith.constant dense<0.000000e+00> : vector<8x8xf32>
    %133 = tpu.matmul %130, %88, %cst_40 {dimension_numbers = #tpu.dot_dimension_numbers<[1], [0], [0], [1], [0, 0, 1, 1], [], []>, precision = #tpu.contract_precision<fp32>} : vector<8x8xf32>, vector<8x8xf32>, vector<8x8xf32> -> vector<8x8xf32>
    %cst_41 = arith.constant 1.000000e+00 : f32
    %134 = vector.broadcast %cst_41 : f32 to vector<8x1xf32>
    %135 = arith.divf %134, %132 : vector<8x1xf32>
    %136 = vector.broadcast %135 : vector<8x1xf32> to vector<8x8xf32>
    %137 = arith.mulf %133, %136 : vector<8x8xf32>
    %c0_42 = arith.constant 0 : index
    %c0_43 = arith.constant 0 : index
    %c8 = arith.constant 8 : index
    %138 = vector.load %arg6[%c0_42, %c0_43, %c8] : memref<1x8x16xf32, #tpu.memory_space<vmem>>, vector<1x8x8xf32>
    %139 = vector.shape_cast %138 : vector<1x8x8xf32> to vector<8x8xf32>
    %140 = vector.shape_cast %137 : vector<8x8xf32> to vector<1x8x8xf32>
    tpu.vector_store %arg6[%c0_42, %c0_43, %c8], %140 {strides = array<i32>} : memref<1x8x16xf32, #tpu.memory_space<vmem>>, vector<1x8x8xf32>,
    return
  }
  func.func @transform_0(%arg0: i32, %arg1: memref<2xi32, #tpu.memory_space<smem>>) -> (i32, i32, i32) {
    %c0_i32 = arith.constant 0 : i32
    %c0_i32_0 = arith.constant 0 : i32
    %c0_i32_1 = arith.constant 0 : i32
    return %arg0, %c0_i32, %c0_i32_0 : i32, i32, i32
  }
  func.func @transform_1(%arg0: i32, %arg1: memref<2xi32, #tpu.memory_space<smem>>) -> (i32, i32) {
    %c0_i32 = arith.constant 0 : i32
    %c0_i32_0 = arith.constant 0 : i32
    %c0_i32_1 = arith.constant 0 : i32
    return %c0_i32, %c0_i32_0 : i32, i32
  }
  func.func @transform_2(%arg0: i32, %arg1: memref<2xi32, #tpu.memory_space<smem>>) -> (i32, i32, i32) {
    %c0_i32 = arith.constant 0 : i32
    %c0_i32_0 = arith.constant 0 : i32
    %c0_i32_1 = arith.constant 0 : i32
    %c0_i32_2 = arith.constant 0 : i32
    return %c0_i32, %c0_i32_0, %c0_i32_1 : i32, i32, i32
  }
  func.func @transform_3(%arg0: i32, %arg1: memref<2xi32, #tpu.memory_space<smem>>) -> (i32, i32, i32) {
    %c0_i32 = arith.constant 0 : i32
    %c0_i32_0 = arith.constant 0 : i32
    %c0_i32_1 = arith.constant 0 : i32
    %c0_i32_2 = arith.constant 0 : i32
    return %c0_i32, %c0_i32_0, %c0_i32_1 : i32, i32, i32
  }
  func.func @transform_4(%arg0: i32, %arg1: memref<2xi32, #tpu.memory_space<smem>>) -> (i32, i32, i32) {
    %c0_i32 = arith.constant 0 : i32
    %c0_i32_0 = arith.constant 0 : i32
    %c0_i32_1 = arith.constant 0 : i32
    return %arg0, %c0_i32, %c0_i32_0 : i32, i32, i32
  }
}

</mosaic_0001>

<llo_original>
// kernel: mhsa_forward.5
$region0: #{mhsa_forward.5}
  #allocation0 [shape = 'u32[]', space=smem, size = 0x4, offset = 0x4, fixed_abs, tag = 'smem constant byte address 0x4 - core index']
  #allocation1 [shape = 'u32[144,128]{1,0:T(1,128)}', space=vmem, size = 0x12000, scoped, tag = 'internal scratch']
  %s0 = inlined_call_operand.vmem [shape: f32[8,32], index: 0, kind: input, shape index: {}]
  %s1 = inlined_call_operand.vmem [shape: f32[32,16], index: 1, kind: input, shape index: {}]
  %s2 = inlined_call_operand.vmem [shape: f32[8,16], index: 2, kind: output, shape index: {}]
  %s3 = sld [smem:[#allocation0]]
  $region18: #{mhsa_forward.5} parent=0
    _
  %s5 = ssub.s32 1, %s3
  %s6 = scalar_select 0, %s5, %s3
  // Predicated region
  $region2: #{mhsa_forward.5} parent=0 // pred_check
    _
  $region3: #{mhsa_forward.5} parent=0 // pred_check_branch
    %8 = sbr.rel (0) target = $region5
  $region4: #{mhsa_forward.5} parent=0 // pred_region
    _
  $region5: #{mhsa_forward.5} parent=0 // pred_fallthru
    _
  // Predicated region
  $region6: #{mhsa_forward.5} parent=0 // pred_check
    _
  $region7: #{mhsa_forward.5} parent=0 // pred_check_branch
    %10 = sbr.rel (0) target = $region9
  $region8: #{mhsa_forward.5} parent=0 // pred_region
    _
  $region9: #{mhsa_forward.5} parent=0 // pred_fallthru
    _
  %v11 = vld [vmem:[%s0] sm:$0xff]
  %v12 = vld [vmem:[%s1] sm:$0xff]
  %v13 = vld [vmem:[%s1 + $0x8] sm:$0xff]
  %v14 = vld [vmem:[%s1 + $0x10] sm:$0xff]
  %v15 = vld [vmem:[%s1 + $0x18] sm:$0xff]
  %vm16 = vcmask 261120
  %v18 = vsel %vm16, %v11, 0
  %20 = vmatprep.subr.mxu0 0.0
  %21 = vmatpush1.msra.mxu0 0.0
  %22 = vmatprep.subr.mxu0 0.0
  %23 = vmatpush1.msra.mxu0 0.0
  %24 = vmatprep.subr.mxu0 0.0
  %25 = vmatpush1.msra.mxu0 0.0
  %26 = vmatprep.subr.mxu0 0.0
  %27 = vmatpush1.msra.mxu0 0.0
  %28 = vmatprep.subr.mxu0 0.0
  %29 = vmatpush1.msra.mxu0 0.0
  %30 = vmatprep.subr.mxu0 0.0
  %31 = vmatpush1.msra.mxu0 0.0
  %32 = vmatprep.subr.mxu0 0.0
  %33 = vmatpush1.msra.mxu0 0.0
  %34 = vmatprep.subr.mxu0 0.0
  %35 = vmatpush1.msra.mxu0 0.0
  %36 = vmatprep.subr.mxu0 0.0
  %37 = vmatpush1.msra.mxu0 0.0
  %38 = vmatprep.subr.mxu0 0.0
  %39 = vmatpush1.msra.mxu0 0.0
  %40 = vmatprep.subr.mxu0 0.0
  %41 = vmatpush1.msra.mxu0 0.0
  %42 = vmatprep.subr.mxu0 0.0
  %43 = vmatpush1.msra.mxu0 0.0
  %44 = vmatprep.subr.mxu0 0.0
  %v45 = vand.u32 %v15, 4294901760
  %46 = vmatpush1.msra.mxu0 %v45
  %47 = vmatprep.subr.mxu0 0.0
  %v48 = vand.u32 %v14, 4294901760
  %49 = vmatpush1.msra.mxu0 %v48
  %50 = vmatprep.subr.mxu0 0.0
  %v51 = vand.u32 %v13, 4294901760
  %52 = vmatpush1.msra.mxu0 %v51
  %53 = vmatprep.subr.mxu0 0.0
  %v54 = vand.u32 %v12, 4294901760
  %55 = vmatpush1.msra.mxu0 %v54
  %56 = vmatprep.subr.mxu0 0.0
  %57 = vmatpush2.msra.mxu0 0.0
  %58 = vmatprep.subr.mxu0 0.0
  %59 = vmatpush2.msra.mxu0 0.0
  %60 = vmatprep.subr.mxu0 0.0
  %61 = vmatpush2.msra.mxu0 0.0
  %62 = vmatprep.subr.mxu0 0.0
  %63 = vmatpush2.msra.mxu0 0.0
  %64 = vmatprep.subr.mxu0 0.0
  %65 = vmatpush2.msra.mxu0 0.0
  %66 = vmatprep.subr.mxu0 0.0
  %67 = vmatpush2.msra.mxu0 0.0
  %68 = vmatprep.subr.mxu0 0.0
  %69 = vmatpush2.msra.mxu0 0.0
  %70 = vmatprep.subr.mxu0 0.0
  %71 = vmatpush2.msra.mxu0 0.0
  %72 = vmatprep.subr.mxu0 0.0
  %73 = vmatpush2.msra.mxu0 0.0
  %74 = vmatprep.subr.mxu0 0.0
  %75 = vmatpush2.msra.mxu0 0.0
  %76 = vmatprep.subr.mxu0 0.0
  %77 = vmatpush2.msra.mxu0 0.0
  %78 = vmatprep.subr.mxu0 0.0
  %79 = vmatpush2.msra.mxu0 0.0
  %80 = vmatprep.subr.mxu0 0.0
  %81 = vmatpush2.msra.mxu0 0.0
  %82 = vmatprep.subr.mxu0 0.0
  %83 = vmatpush2.msra.mxu0 0.0
  %84 = vmatprep.subr.mxu0 0.0
  %85 = vmatpush2.msra.mxu0 0.0
  %86 = vmatprep.subr.mxu0 0.0
  %87 = vmatpush2.msra.mxu0 0.0
  %88 = vmatprep.mubr.f32.mxu0 0.0
  %v89 = vand.u32 %v18, 4294901760
  %v90 = vsub.f32 %v18, %v89
  %v91 = vand.u32 %v90, 4294901760
  %v92 = vsub.f32 %v90, %v91
  %v93 = vand.u32 %v92, 4294901760
  %94 = vmatmul.mubr.f32.gmra.mxu0 %v93
  %v95 = vpop.f32.mrf.mxu0
  %v96 = vadd.f32 0.0, %v95
  %v97 = vpop.f32.mrf.mxu0
  %98 = vdwg.mxu0
  %99 = vmatprep.subr.mxu0 0.0
  %100 = vmatpush1.msra.mxu0 0.0
  %101 = vmatprep.subr.mxu0 0.0
  %102 = vmatpush1.msra.mxu0 0.0
  %103 = vmatprep.subr.mxu0 0.0
  %104 = vmatpush1.msra.mxu0 0.0
  %105 = vmatprep.subr.mxu0 0.0
  %106 = vmatpush1.msra.mxu0 0.0
  %107 = vmatprep.subr.mxu0 0.0
  %108 = vmatpush1.msra.mxu0 0.0
  %109 = vmatprep.subr.mxu0 0.0
  %110 = vmatpush1.msra.mxu0 0.0
  %111 = vmatprep.subr.mxu0 0.0
  %112 = vmatpush1.msra.mxu0 0.0
  %113 = vmatprep.subr.mxu0 0.0
  %114 = vmatpush1.msra.mxu0 0.0
  %115 = vmatprep.subr.mxu0 0.0
  %116 = vmatpush1.msra.mxu0 0.0
  %117 = vmatprep.subr.mxu0 0.0
  %118 = vmatpush1.msra.mxu0 0.0
  %119 = vmatprep.subr.mxu0 0.0
  %120 = vmatpush1.msra.mxu0 0.0
  %121 = vmatprep.subr.mxu0 0.0
  %122 = vmatpush1.msra.mxu0 0.0
  %123 = vmatprep.subr.mxu0 0.0
  %v124 = vand.u32 %v15, 4294901760
  %v125 = vsub.f32 %v15, %v124
  %v126 = vand.u32 %v125, 4294901760
  %v127 = vsub.f32 %v125, %v126
  %v128 = vand.u32 %v127, 4294901760
  %129 = vmatpush1.msra.mxu0 %v128
  %130 = vmatprep.subr.mxu0 0.0
  %v131 = vand.u32 %v14, 4294901760
  %v132 = vsub.f32 %v14, %v131
  %v133 = vand.u32 %v132, 4294901760
  %v134 = vsub.f32 %v132, %v133
  %v135 = vand.u32 %v134, 4294901760
  %136 = vmatpush1.msra.mxu0 %v135
  %137 = vmatprep.subr.mxu0 0.0
  %v138 = vand.u32 %v13, 4294901760
  %v139 = vsub.f32 %v13, %v138
  %v140 = vand.u32 %v139, 4294901760
  %v141 = vsub.f32 %v139, %v140
  %v142 = vand.u32 %v141, 4294901760
  %143 = vmatpush1.msra.mxu0 %v142
  %144 = vmatprep.subr.mxu0 0.0
  %v145 = vand.u32 %v12, 4294901760
  %v146 = vsub.f32 %v12, %v145
  %v147 = vand.u32 %v146, 4294901760
  %v148 = vsub.f32 %v146, %v147
  %v149 = vand.u32 %v148, 4294901760
  %150 = vmatpush1.msra.mxu0 %v149
  %151 = vmatprep.subr.mxu0 0.0
  %152 = vmatpush2.msra.mxu0 0.0
  %153 = vmatprep.subr.mxu0 0.0
  %154 = vmatpush2.msra.mxu0 0.0
  %155 = vmatprep.subr.mxu0 0.0
  %156 = vmatpush2.msra.mxu0 0.0
  %157 = vmatprep.subr.mxu0 0.0
  %158 = vmatpush2.msra.mxu0 0.0
  %159 = vmatprep.subr.mxu0 0.0
  %160 = vmatpush2.msra.mxu0 0.0
  %161 = vmatprep.subr.mxu0 0.0
  %162 = vmatpush2.msra.mxu0 0.0
  %163 = vmatprep.subr.mxu0 0.0
  %164 = vmatpush2.msra.mxu0 0.0
  %165 = vmatprep.subr.mxu0 0.0
  %166 = vmatpush2.msra.mxu0 0.0
  %167 = vmatprep.subr.mxu0 0.0
  %168 = vmatpush2.msra.mxu0 0.0
  %169 = vmatprep.subr.mxu0 0.0
  %170 = vmatpush2.msra.mxu0 0.0
  %171 = vmatprep.subr.mxu0 0.0
  %172 = vmatpush2.msra.mxu0 0.0
  %173 = vmatprep.subr.mxu0 0.0
  %174 = vmatpush2.msra.mxu0 0.0
  %175 = vmatprep.subr.mxu0 0.0
  %176 = vmatpush2.msra.mxu0 0.0
  %177 = vmatprep.subr.mxu0 0.0
  %178 = vmatpush2.msra.mxu0 0.0
  %179 = vmatprep.subr.mxu0 0.0
  %180 = vmatpush2.msra.mxu0 0.0
  %181 = vmatprep.subr.mxu0 0.0
  %182 = vmatpush2.msra.mxu0 0.0
  %183 = vmatprep.mubr.f32.mxu0 0.0
  %v184 = vand.u32 %v18, 4294901760
  %185 = vmatmul.mubr.f32.gmra.mxu0 %v184
  %v186 = vpop.f32.mrf.mxu0
  %v187 = vadd.f32 %v96, %v186
  %v188 = vpop.f32.mrf.mxu0
  %189 = vdwg.mxu0
  %190 = vmatprep.subr.mxu0 0.0
  %191 = vmatpush1.msra.mxu0 0.0
  %192 = vmatprep.subr.mxu0 0.0
  %193 = vmatpush1.msra.mxu0 0.0
  %194 = vmatprep.subr.mxu0 0.0
  %195 = vmatpush1.msra.mxu0 0.0
  %196 = vmatprep.subr.mxu0 0.0
  %197 = vmatpush1.msra.mxu0 0.0
  %198 = vmatprep.subr.mxu0 0.0
  %199 = vmatpush1.msra.mxu0 0.0
  %200 = vmatprep.subr.mxu0 0.0
  %201 = vmatpush1.msra.mxu0 0.0
  %202 = vmatprep.subr.mxu0 0.0
  %203 = vmatpush1.msra.mxu0 0.0
  %204 = vmatprep.subr.mxu0 0.0
  %205 = vmatpush1.msra.mxu0 0.0
  %206 = vmatprep.subr.mxu0 0.0
  %207 = vmatpush1.msra.mxu0 0.0
  %208 = vmatprep.subr.mxu0 0.0
  %209 = vmatpush1.msra.mxu0 0.0
  %210 = vmatprep.subr.mxu0 0.0
  %211 = vmatpush1.msra.mxu0 0.0
  %212 = vmatprep.subr.mxu0 0.0
  %213 = vmatpush1.msra.mxu0 0.0
  %214 = vmatprep.subr.mxu0 0.0
  %v215 = vand.u32 %v15, 4294901760
  %v216 = vsub.f32 %v15, %v215
  %217 = vmatpush1.msra.mxu0 %v216
  %218 = vmatprep.subr.mxu0 0.0
  %v219 = vand.u32 %v14, 4294901760
  %v220 = vsub.f32 %v14, %v219
  %221 = vmatpush1.msra.mxu0 %v220
  %222 = vmatprep.subr.mxu0 0.0
  %v223 = vand.u32 %v13, 4294901760
  %v224 = vsub.f32 %v13, %v223
  %225 = vmatpush1.msra.mxu0 %v224
  %226 = vmatprep.subr.mxu0 0.0
  %v227 = vand.u32 %v12, 4294901760
  %v228 = vsub.f32 %v12, %v227
  %229 = vmatpush1.msra.mxu0 %v228
  %230 = vmatprep.subr.mxu0 0.0
  %231 = vmatpush2.msra.mxu0 0.0
  %232 = vmatprep.subr.mxu0 0.0
  %233 = vmatpush2.msra.mxu0 0.0
  %234 = vmatprep.subr.mxu0 0.0
  %235 = vmatpush2.msra.mxu0 0.0
  %236 = vmatprep.subr.mxu0 0.0
  %237 = vmatpush2.msra.mxu0 0.0
  %238 = vmatprep.subr.mxu0 0.0
  %239 = vmatpush2.msra.mxu0 0.0
  %240 = vmatprep.subr.mxu0 0.0
  %241 = vmatpush2.msra.mxu0 0.0
  %242 = vmatprep.subr.mxu0 0.0
  %243 = vmatpush2.msra.mxu0 0.0
  %244 = vmatprep.subr.mxu0 0.0
  %245 = vmatpush2.msra.mxu0 0.0
  %246 = vmatprep.subr.mxu0 0.0
  %247 = vmatpush2.msra.mxu0 0.0
  %248 = vmatprep.subr.mxu0 0.0
  %249 = vmatpush2.msra.mxu0 0.0
  %250 = vmatprep.subr.mxu0 0.0
  %251 = vmatpush2.msra.mxu0 0.0
  %252 = vmatprep.subr.mxu0 0.0
  %253 = vmatpush2.msra.mxu0 0.0
  %254 = vmatprep.subr.mxu0 0.0
  %255 = vmatpush2.msra.mxu0 0.0
  %256 = vmatprep.subr.mxu0 0.0
  %257 = vmatpush2.msra.mxu0 0.0
  %258 = vmatprep.subr.mxu0 0.0
  %259 = vmatpush2.msra.mxu0 0.0
  %260 = vmatprep.subr.mxu0 0.0
  %261 = vmatpush2.msra.mxu0 0.0
  %262 = vmatprep.mubr.f32.mxu0 0.0
  %v263 = vand.u32 %v18, 4294901760
  %v264 = vsub.f32 %v18, %v263
  %265 = vmatmul.mubr.f32.gmra.mxu0 %v264
  %v266 = vpop.f32.mrf.mxu0
  %v267 = vadd.f32 %v187, %v266
  %v268 = vpop.f32.mrf.mxu0
  %269 = vdwg.mxu0
  %270 = vmatprep.subr.mxu0 0.0
  %271 = vmatpush1.msra.mxu0 0.0
  %272 = vmatprep.subr.mxu0 0.0
  %273 = vmatpush1.msra.mxu0 0.0
  %274 = vmatprep.subr.mxu0 0.0
  %275 = vmatpush1.msra.mxu0 0.0
  %276 = vmatprep.subr.mxu0 0.0
  %277 = vmatpush1.msra.mxu0 0.0
  %278 = vmatprep.subr.mxu0 0.0
  %279 = vmatpush1.msra.mxu0 0.0
  %280 = vmatprep.subr.mxu0 0.0
  %281 = vmatpush1.msra.mxu0 0.0
  %282 = vmatprep.subr.mxu0 0.0
  %283 = vmatpush1.msra.mxu0 0.0
  %284 = vmatprep.subr.mxu0 0.0
  %285 = vmatpush1.msra.mxu0 0.0
  %286 = vmatprep.subr.mxu0 0.0
  %287 = vmatpush1.msra.mxu0 0.0
  %288 = vmatprep.subr.mxu0 0.0
  %289 = vmatpush1.msra.mxu0 0.0
  %290 = vmatprep.subr.mxu0 0.0
  %291 = vmatpush1.msra.mxu0 0.0
  %292 = vmatprep.subr.mxu0 0.0
  %293 = vmatpush1.msra.mxu0 0.0
  %294 = vmatprep.subr.mxu0 0.0
  %v295 = vand.u32 %v15, 4294901760
  %296 = vmatpush1.msra.mxu0 %v295
  %297 = vmatprep.subr.mxu0 0.0
  %v298 = vand.u32 %v14, 4294901760
  %299 = vmatpush1.msra.mxu0 %v298
  %300 = vmatprep.subr.mxu0 0.0
  %v301 = vand.u32 %v13, 4294901760
  %302 = vmatpush1.msra.mxu0 %v301
  %303 = vmatprep.subr.mxu0 0.0
  %v304 = vand.u32 %v12, 4294901760
  %305 = vmatpush1.msra.mxu0 %v304
  %306 = vmatprep.subr.mxu0 0.0
  %307 = vmatpush2.msra.mxu0 0.0
  %308 = vmatprep.subr.mxu0 0.0
  %309 = vmatpush2.msra.mxu0 0.0
  %310 = vmatprep.subr.mxu0 0.0
  %311 = vmatpush2.msra.mxu0 0.0
  %312 = vmatprep.subr.mxu0 0.0
  %313 = vmatpush2.msra.mxu0 0.0
  %314 = vmatprep.subr.mxu0 0.0
  %315 = vmatpush2.msra.mxu0 0.0
  %316 = vmatprep.subr.mxu0 0.0
  %317 = vmatpush2.msra.mxu0 0.0
  %318 = vmatprep.subr.mxu0 0.0
  %319 = vmatpush2.msra.mxu0 0.0
  %320 = vmatprep.subr.mxu0 0.0
  %321 = vmatpush2.msra.mxu0 0.0
  %322 = vmatprep.subr.mxu0 0.0
  %323 = vmatpush2.msra.mxu0 0.0
  %324 = vmatprep.subr.mxu0 0.0
  %325 = vmatpush2.msra.mxu0 0.0
  %326 = vmatprep.subr.mxu0 0.0
  %327 = vmatpush2.msra.mxu0 0.0
  %328 = vmatprep.subr.mxu0 0.0
  %329 = vmatpush2.msra.mxu0 0.0
  %330 = vmatprep.subr.mxu0 0.0
  %331 = vmatpush2.msra.mxu0 0.0
  %332 = vmatprep.subr.mxu0 0.0
  %333 = vmatpush2.msra.mxu0 0.0
  %334 = vmatprep.subr.mxu0 0.0
  %335 = vmatpush2.msra.mxu0 0.0
  %336 = vmatprep.subr.mxu0 0.0
  %337 = vmatpush2.msra.mxu0 0.0
  %338 = vmatprep.mubr.f32.mxu0 0.0
  %v339 = vand.u32 %v18, 4294901760
  %v340 = vsub.f32 %v18, %v339
  %v341 = vand.u32 %v340, 4294901760
  %342 = vmatmul.mubr.f32.gmra.mxu0 %v341
  %v343 = vpop.f32.mrf.mxu0
  %v344 = vadd.f32 %v267, %v343
  %v345 = vpop.f32.mrf.mxu0
  %346 = vdwg.mxu0
  %347 = vmatprep.subr.mxu0 0.0
  %348 = vmatpush1.msra.mxu0 0.0
  %349 = vmatprep.subr.mxu0 0.0
  %350 = vmatpush1.msra.mxu0 0.0
  %351 = vmatprep.subr.mxu0 0.0
  %352 = vmatpush1.msra.mxu0 0.0
  %353 = vmatprep.subr.mxu0 0.0
  %354 = vmatpush1.msra.mxu0 0.0
  %355 = vmatprep.subr.mxu0 0.0
  %356 = vmatpush1.msra.mxu0 0.0
  %357 = vmatprep.subr.mxu0 0.0
  %358 = vmatpush1.msra.mxu0 0.0
  %359 = vmatprep.subr.mxu0 0.0
  %360 = vmatpush1.msra.mxu0 0.0
  %361 = vmatprep.subr.mxu0 0.0
  %362 = vmatpush1.msra.mxu0 0.0
  %363 = vmatprep.subr.mxu0 0.0
  %364 = vmatpush1.msra.mxu0 0.0
  %365 = vmatprep.subr.mxu0 0.0
  %366 = vmatpush1.msra.mxu0 0.0
  %367 = vmatprep.subr.mxu0 0.0
  %368 = vmatpush1.msra.mxu0 0.0
  %369 = vmatprep.subr.mxu0 0.0
  %370 = vmatpush1.msra.mxu0 0.0
  %371 = vmatprep.subr.mxu0 0.0
  %v372 = vand.u32 %v15, 4294901760
  %v373 = vsub.f32 %v15, %v372
  %v374 = vand.u32 %v373, 4294901760
  %375 = vmatpush1.msra.mxu0 %v374
  %376 = vmatprep.subr.mxu0 0.0
  %v377 = vand.u32 %v14, 4294901760
  %v378 = vsub.f32 %v14, %v377
  %v379 = vand.u32 %v378, 4294901760
  %380 = vmatpush1.msra.mxu0 %v379
  %381 = vmatprep.subr.mxu0 0.0
  %v382 = vand.u32 %v13, 4294901760
  %v383 = vsub.f32 %v13, %v382
  %v384 = vand.u32 %v383, 4294901760
  %385 = vmatpush1.msra.mxu0 %v384
  %386 = vmatprep.subr.mxu0 0.0
  %v387 = vand.u32 %v12, 4294901760
  %v388 = vsub.f32 %v12, %v387
  %v389 = vand.u32 %v388, 4294901760
  %390 = vmatpush1.msra.mxu0 %v389
  %391 = vmatprep.subr.mxu0 0.0
  %392 = vmatpush2.msra.mxu0 0.0
  %393 = vmatprep.subr.mxu0 0.0
  %394 = vmatpush2.msra.mxu0 0.0
  %395 = vmatprep.subr.mxu0 0.0
  %396 = vmatpush2.msra.mxu0 0.0
  %397 = vmatprep.subr.mxu0 0.0
  %398 = vmatpush2.msra.mxu0 0.0
  %399 = vmatprep.subr.mxu0 0.0
  %400 = vmatpush2.msra.mxu0 0.0
  %401 = vmatprep.subr.mxu0 0.0
  %402 = vmatpush2.msra.mxu0 0.0
  %403 = vmatprep.subr.mxu0 0.0
  %404 = vmatpush2.msra.mxu0 0.0
  %405 = vmatprep.subr.mxu0 0.0
  %406 = vmatpush2.msra.mxu0 0.0
  %407 = vmatprep.subr.mxu0 0.0
  %408 = vmatpush2.msra.mxu0 0.0
  %409 = vmatprep.subr.mxu0 0.0
  %410 = vmatpush2.msra.mxu0 0.0
  %411 = vmatprep.subr.mxu0 0.0
  %412 = vmatpush2.msra.mxu0 0.0
  %413 = vmatprep.subr.mxu0 0.0
  %414 = vmatpush2.msra.mxu0 0.0
  %415 = vmatprep.subr.mxu0 0.0
  %416 = vmatpush2.msra.mxu0 0.0
  %417 = vmatprep.subr.mxu0 0.0
  %418 = vmatpush2.msra.mxu0 0.0
  %419 = vmatprep.subr.mxu0 0.0
  %420 = vmatpush2.msra.mxu0 0.0
  %421 = vmatprep.subr.mxu0 0.0
  %422 = vmatpush2.msra.mxu0 0.0
  %423 = vmatprep.mubr.f32.mxu0 0.0
  %v424 = vand.u32 %v18, 4294901760
  %425 = vmatmul.mubr.f32.gmra.mxu0 %v424
  %v426 = vpop.f32.mrf.mxu0
  %v427 = vadd.f32 %v344, %v426
  %v428 = vpop.f32.mrf.mxu0
  %429 = vdwg.mxu0
  %430 = vmatprep.subr.mxu0 0.0
  %431 = vmatpush1.msra.mxu0 0.0
  %432 = vmatprep.subr.mxu0 0.0
  %433 = vmatpush1.msra.mxu0 0.0
  %434 = vmatprep.subr.mxu0 0.0
  %435 = vmatpush1.msra.mxu0 0.0
  %436 = vmatprep.subr.mxu0 0.0
  %437 = vmatpush1.msra.mxu0 0.0
  %438 = vmatprep.subr.mxu0 0.0
  %439 = vmatpush1.msra.mxu0 0.0
  %440 = vmatprep.subr.mxu0 0.0
  %441 = vmatpush1.msra.mxu0 0.0
  %442 = vmatprep.subr.mxu0 0.0
  %443 = vmatpush1.msra.mxu0 0.0
  %444 = vmatprep.subr.mxu0 0.0
  %445 = vmatpush1.msra.mxu0 0.0
  %446 = vmatprep.subr.mxu0 0.0
  %447 = vmatpush1.msra.mxu0 0.0
  %448 = vmatprep.subr.mxu0 0.0
  %449 = vmatpush1.msra.mxu0 0.0
  %450 = vmatprep.subr.mxu0 0.0
  %451 = vmatpush1.msra.mxu0 0.0
  %452 = vmatprep.subr.mxu0 0.0
  %453 = vmatpush1.msra.mxu0 0.0
  %454 = vmatprep.subr.mxu0 0.0
  %v455 = vand.u32 %v15, 4294901760
  %456 = vmatpush1.msra.mxu0 %v455
  %457 = vmatprep.subr.mxu0 0.0
  %v458 = vand.u32 %v14, 4294901760
  %459 = vmatpush1.msra.mxu0 %v458
  %460 = vmatprep.subr.mxu0 0.0
  %v461 = vand.u32 %v13, 4294901760
  %462 = vmatpush1.msra.mxu0 %v461
  %463 = vmatprep.subr.mxu0 0.0
  %v464 = vand.u32 %v12, 4294901760
  %465 = vmatpush1.msra.mxu0 %v464
  %466 = vmatprep.subr.mxu0 0.0
  %467 = vmatpush2.msra.mxu0 0.0
  %468 = vmatprep.subr.mxu0 0.0
  %469 = vmatpush2.msra.mxu0 0.0
  %470 = vmatprep.subr.mxu0 0.0
  %471 = vmatpush2.msra.mxu0 0.0
  %472 = vmatprep.subr.mxu0 0.0
  %473 = vmatpush2.msra.mxu0 0.0
  %474 = vmatprep.subr.mxu0 0.0
  %475 = vmatpush2.msra.mxu0 0.0
  %476 = vmatprep.subr.mxu0 0.0
  %477 = vmatpush2.msra.mxu0 0.0
  %478 = vmatprep.subr.mxu0 0.0
  %479 = vmatpush2.msra.mxu0 0.0
  %480 = vmatprep.subr.mxu0 0.0
  %481 = vmatpush2.msra.mxu0 0.0
  %482 = vmatprep.subr.mxu0 0.0
  %483 = vmatpush2.msra.mxu0 0.0
  %484 = vmatprep.subr.mxu0 0.0
  %485 = vmatpush2.msra.mxu0 0.0
  %486 = vmatprep.subr.mxu0 0.0
  %487 = vmatpush2.msra.mxu0 0.0
  %488 = vmatprep.subr.mxu0 0.0
  %489 = vmatpush2.msra.mxu0 0.0
  %490 = vmatprep.subr.mxu0 0.0
  %491 = vmatpush2.msra.mxu0 0.0
  %492 = vmatprep.subr.mxu0 0.0
  %493 = vmatpush2.msra.mxu0 0.0
  %494 = vmatprep.subr.mxu0 0.0
  %495 = vmatpush2.msra.mxu0 0.0
  %496 = vmatprep.subr.mxu0 0.0
  %497 = vmatpush2.msra.mxu0 0.0
  %498 = vmatprep.mubr.f32.mxu0 0.0
  %v499 = vand.u32 %v18, 4294901760
  %500 = vmatmul.mubr.f32.gmra.mxu0 %v499
  %v501 = vpop.f32.mrf.mxu0
  %v502 = vadd.f32 %v427, %v501
  %v503 = vpop.f32.mrf.mxu0
  %504 = vdwg.mxu0
  %vm505 = vcmask 130048
  %506 = vst.msk [vmem:[%s2] sm:$0xff] %vm505, %v502
  // Predicated region
  $region10: #{mhsa_forward.5} parent=0 // pred_check
    _
  $region11: #{mhsa_forward.5} parent=0 // pred_check_branch
    %508 = sbr.rel (0) target = $region13
  $region12: #{mhsa_forward.5} parent=0 // pred_region
    _
  $region13: #{mhsa_forward.5} parent=0 // pred_fallthru
    _
  // Predicated region
  $region14: #{mhsa_forward.5} parent=0 // pred_check
    _
  $region15: #{mhsa_forward.5} parent=0 // pred_check_branch
    %510 = sbr.rel (0) target = $region17
  $region16: #{mhsa_forward.5} parent=0 // pred_region
    _
  $region17: #{mhsa_forward.5} parent=0 // pred_fallthru
    _

// kernel: mhsa_forward.7
$region0: #{mhsa_forward.7}
  #allocation0 [shape = 'u32[]', space=smem, size = 0x4, offset = 0x4, fixed_abs, tag = 'smem constant byte address 0x4 - core index']
  #allocation1 [shape = 'u32[144,128]{1,0:T(1,128)}', space=vmem, size = 0x12000, scoped, tag = 'internal scratch']
  %s0 = inlined_call_operand.vmem [shape: f32[16,16], index: 0, kind: input, shape index: {}]
  %s1 = inlined_call_operand.vmem [shape: f32[16,32], index: 1, kind: input, shape index: {}]
  %s2 = inlined_call_operand.vmem [shape: f32[16,32], index: 2, kind: input, shape index: {}]
  %s3 = inlined_call_operand.hbm [shape: f32[16,32], index: 3, kind: output, shape index: {}]
  %s4 = sld [smem:[#allocation0]]
  $region22: #{mhsa_forward.7} parent=0
    _
  %s6 = ssub.s32 1, %s4
  %s7 = scalar_select 0, %s6, %s4
  $region1: #{mhsa_forward.7} parent=0
    #allocation2 [shape = 'u8[8192]{0}', space=vmem, size = 0x2000, scoped, tag = 'output window, operand 0, single buffered']
    #allocation3 [shape = 's32[1]{0}', space=sflag, size = 0x4, scoped, tag = 'scoped memory for mhsa_forward.7']
    %8 = vsyncpa [#allocation3], 0
    // Predicated region
    $region2: #{mhsa_forward.7} parent=1 // pred_check
      _
    $region3: #{mhsa_forward.7} parent=1 // pred_check_branch
      %10 = sbr.rel (0) target = $region5
    $region4: #{mhsa_forward.7} parent=1 // pred_region
      _
    $region5: #{mhsa_forward.7} parent=1 // pred_fallthru
      _
    // Predicated region
    $region6: #{mhsa_forward.7} parent=1 // pred_check
      _
    $region7: #{mhsa_forward.7} parent=1 // pred_check_branch
      %12 = sbr.rel (0) target = $region9
    $region8: #{mhsa_forward.7} parent=1 // pred_region
      _
    $region9: #{mhsa_forward.7} parent=1 // pred_fallthru
      _
    // Predicated region
    $region10: #{mhsa_forward.7} parent=1 // pred_check
      _
    $region11: #{mhsa_forward.7} parent=1 // pred_check_branch
      %14 = sbr.rel (0) target = $region13
    $region12: #{mhsa_forward.7} parent=1 // pred_region
      _
    $region13: #{mhsa_forward.7} parent=1 // pred_fallthru
      _
    %v15 = vld [vmem:[%s2] sm:$0xff]
    %v16 = vld [vmem:[%s2 + $0x8] sm:$0xff]
    %v17 = vld [vmem:[%s0] sm:$0xff]
    %v18 = vld [vmem:[%s0 + $0x8] sm:$0xff]
    %v19 = vld [vmem:[%s1] sm:$0xff]
    %v20 = vld [vmem:[%s1 + $0x8] sm:$0xff]
    %vm21 = vcmask 130048
    %v23 = vsel %vm21, %v17, 0
    %v26 = vsel %vm21, %v18, 0
    %28 = vmatprep.subr.mxu0 0.0
    %29 = vmatpush1.msra.mxu0 0.0
    %30 = vmatprep.subr.mxu0 0.0
    %31 = vmatpush1.msra.mxu0 0.0
    %32 = vmatprep.subr.mxu0 0.0
    %33 = vmatpush1.msra.mxu0 0.0
    %34 = vmatprep.subr.mxu0 0.0
    %35 = vmatpush1.msra.mxu0 0.0
    %36 = vmatprep.subr.mxu0 0.0
    %37 = vmatpush1.msra.mxu0 0.0
    %38 = vmatprep.subr.mxu0 0.0
    %39 = vmatpush1.msra.mxu0 0.0
    %40 = vmatprep.subr.mxu0 0.0
    %41 = vmatpush1.msra.mxu0 0.0
    %42 = vmatprep.subr.mxu0 0.0
    %43 = vmatpush1.msra.mxu0 0.0
    %44 = vmatprep.subr.mxu0 0.0
    %45 = vmatpush1.msra.mxu0 0.0
    %46 = vmatprep.subr.mxu0 0.0
    %47 = vmatpush1.msra.mxu0 0.0
    %48 = vmatprep.subr.mxu0 0.0
    %49 = vmatpush1.msra.mxu0 0.0
    %50 = vmatprep.subr.mxu0 0.0
    %51 = vmatpush1.msra.mxu0 0.0
    %52 = vmatprep.subr.mxu0 0.0
    %53 = vmatpush1.msra.mxu0 0.0
    %54 = vmatprep.subr.mxu0 0.0
    %55 = vmatpush1.msra.mxu0 0.0
    %56 = vmatprep.subr.mxu0 0.0
    %v57 = vand.u32 %v20, 4294901760
    %58 = vmatpush1.msra.mxu0 %v57
    %59 = vmatprep.subr.mxu0 0.0
    %v60 = vand.u32 %v19, 4294901760
    %61 = vmatpush1.msra.mxu0 %v60
    %62 = vmatprep.subr.mxu0 0.0
    %63 = vmatpush2.msra.mxu0 0.0
    %64 = vmatprep.subr.mxu0 0.0
    %65 = vmatpush2.msra.mxu0 0.0
    %66 = vmatprep.subr.mxu0 0.0
    %67 = vmatpush2.msra.mxu0 0.0
    %68 = vmatprep.subr.mxu0 0.0
    %69 = vmatpush2.msra.mxu0 0.0
    %70 = vmatprep.subr.mxu0 0.0
    %71 = vmatpush2.msra.mxu0 0.0
    %72 = vmatprep.subr.mxu0 0.0
    %73 = vmatpush2.msra.mxu0 0.0
    %74 = vmatprep.subr.mxu0 0.0
    %75 = vmatpush2.msra.mxu0 0.0
    %76 = vmatprep.subr.mxu0 0.0
    %77 = vmatpush2.msra.mxu0 0.0
    %78 = vmatprep.subr.mxu0 0.0
    %79 = vmatpush2.msra.mxu0 0.0
    %80 = vmatprep.subr.mxu0 0.0
    %81 = vmatpush2.msra.mxu0 0.0
    %82 = vmatprep.subr.mxu0 0.0
    %83 = vmatpush2.msra.mxu0 0.0
    %84 = vmatprep.subr.mxu0 0.0
    %85 = vmatpush2.msra.mxu0 0.0
    %86 = vmatprep.subr.mxu0 0.0
    %87 = vmatpush2.msra.mxu0 0.0
    %88 = vmatprep.subr.mxu0 0.0
    %89 = vmatpush2.msra.mxu0 0.0
    %90 = vmatprep.subr.mxu0 0.0
    %91 = vmatpush2.msra.mxu0 0.0
    %92 = vmatprep.subr.mxu0 0.0
    %93 = vmatpush2.msra.mxu0 0.0
    %94 = vmatprep.mubr.f32.mxu0 0.0
    %v95 = vand.u32 %v23, 4294901760
    %v96 = vsub.f32 %v23, %v95
    %v97 = vand.u32 %v96, 4294901760
    %v98 = vsub.f32 %v96, %v97
    %v99 = vand.u32 %v98, 4294901760
    %100 = vmatmul.mubr.f32.gmra.mxu0 %v99
    %v101 = vpop.f32.mrf.mxu0
    %v102 = vadd.f32 0.0, %v101
    %v103 = vpop.f32.mrf.mxu0
    %104 = vmatprep.mubr.f32.mxu0 0.0
    %v105 = vand.u32 %v26, 4294901760
    %v106 = vsub.f32 %v26, %v105
    %v107 = vand.u32 %v106, 4294901760
    %v108 = vsub.f32 %v106, %v107
    %v109 = vand.u32 %v108, 4294901760
    %110 = vmatmul.mubr.f32.gmra.mxu0 %v109
    %v111 = vpop.f32.mrf.mxu0
    %v112 = vadd.f32 0.0, %v111
    %v113 = vpop.f32.mrf.mxu0
    %114 = vdwg.mxu0
    %115 = vmatprep.subr.mxu0 0.0
    %116 = vmatpush1.msra.mxu0 0.0
    %117 = vmatprep.subr.mxu0 0.0
    %118 = vmatpush1.msra.mxu0 0.0
    %119 = vmatprep.subr.mxu0 0.0
    %120 = vmatpush1.msra.mxu0 0.0
    %121 = vmatprep.subr.mxu0 0.0
    %122 = vmatpush1.msra.mxu0 0.0
    %123 = vmatprep.subr.mxu0 0.0
    %124 = vmatpush1.msra.mxu0 0.0
    %125 = vmatprep.subr.mxu0 0.0
    %126 = vmatpush1.msra.mxu0 0.0
    %127 = vmatprep.subr.mxu0 0.0
    %128 = vmatpush1.msra.mxu0 0.0
    %129 = vmatprep.subr.mxu0 0.0
    %130 = vmatpush1.msra.mxu0 0.0
    %131 = vmatprep.subr.mxu0 0.0
    %132 = vmatpush1.msra.mxu0 0.0
    %133 = vmatprep.subr.mxu0 0.0
    %134 = vmatpush1.msra.mxu0 0.0
    %135 = vmatprep.subr.mxu0 0.0
    %136 = vmatpush1.msra.mxu0 0.0
    %137 = vmatprep.subr.mxu0 0.0
    %138 = vmatpush1.msra.mxu0 0.0
    %139 = vmatprep.subr.mxu0 0.0
    %140 = vmatpush1.msra.mxu0 0.0
    %141 = vmatprep.subr.mxu0 0.0
    %142 = vmatpush1.msra.mxu0 0.0
    %143 = vmatprep.subr.mxu0 0.0
    %v144 = vand.u32 %v20, 4294901760
    %v145 = vsub.f32 %v20, %v144
    %v146 = vand.u32 %v145, 4294901760
    %v147 = vsub.f32 %v145, %v146
    %v148 = vand.u32 %v147, 4294901760
    %149 = vmatpush1.msra.mxu0 %v148
    %150 = vmatprep.subr.mxu0 0.0
    %v151 = vand.u32 %v19, 4294901760
    %v152 = vsub.f32 %v19, %v151
    %v153 = vand.u32 %v152, 4294901760
    %v154 = vsub.f32 %v152, %v153
    %v155 = vand.u32 %v154, 4294901760
    %156 = vmatpush1.msra.mxu0 %v155
    %157 = vmatprep.subr.mxu0 0.0
    %158 = vmatpush2.msra.mxu0 0.0
    %159 = vmatprep.subr.mxu0 0.0
    %160 = vmatpush2.msra.mxu0 0.0
    %161 = vmatprep.subr.mxu0 0.0
    %162 = vmatpush2.msra.mxu0 0.0
    %163 = vmatprep.subr.mxu0 0.0
    %164 = vmatpush2.msra.mxu0 0.0
    %165 = vmatprep.subr.mxu0 0.0
    %166 = vmatpush2.msra.mxu0 0.0
    %167 = vmatprep.subr.mxu0 0.0
    %168 = vmatpush2.msra.mxu0 0.0
    %169 = vmatprep.subr.mxu0 0.0
    %170 = vmatpush2.msra.mxu0 0.0
    %171 = vmatprep.subr.mxu0 0.0
    %172 = vmatpush2.msra.mxu0 0.0
    %173 = vmatprep.subr.mxu0 0.0
    %174 = vmatpush2.msra.mxu0 0.0
    %175 = vmatprep.subr.mxu0 0.0
    %176 = vmatpush2.msra.mxu0 0.0
    %177 = vmatprep.subr.mxu0 0.0
    %178 = vmatpush2.msra.mxu0 0.0
    %179 = vmatprep.subr.mxu0 0.0
    %180 = vmatpush2.msra.mxu0 0.0
    %181 = vmatprep.subr.mxu0 0.0
    %182 = vmatpush2.msra.mxu0 0.0
    %183 = vmatprep.subr.mxu0 0.0
    %184 = vmatpush2.msra.mxu0 0.0
    %185 = vmatprep.subr.mxu0 0.0
    %186 = vmatpush2.msra.mxu0 0.0
    %187 = vmatprep.subr.mxu0 0.0
    %188 = vmatpush2.msra.mxu0 0.0
    %189 = vmatprep.mubr.f32.mxu0 0.0
    %v190 = vand.u32 %v23, 4294901760
    %191 = vmatmul.mubr.f32.gmra.mxu0 %v190
    %v192 = vpop.f32.mrf.mxu0
    %v193 = vadd.f32 %v102, %v192
    %v194 = vpop.f32.mrf.mxu0
    %195 = vmatprep.mubr.f32.mxu0 0.0
    %v196 = vand.u32 %v26, 4294901760
    %197 = vmatmul.mubr.f32.gmra.mxu0 %v196
    %v198 = vpop.f32.mrf.mxu0
    %v199 = vadd.f32 %v112, %v198
    %v200 = vpop.f32.mrf.mxu0
    %201 = vdwg.mxu0
    %202 = vmatprep.subr.mxu0 0.0
    %203 = vmatpush1.msra.mxu0 0.0
    %204 = vmatprep.subr.mxu0 0.0
    %205 = vmatpush1.msra.mxu0 0.0
    %206 = vmatprep.subr.mxu0 0.0
    %207 = vmatpush1.msra.mxu0 0.0
    %208 = vmatprep.subr.mxu0 0.0
    %209 = vmatpush1.msra.mxu0 0.0
    %210 = vmatprep.subr.mxu0 0.0
    %211 = vmatpush1.msra.mxu0 0.0
    %212 = vmatprep.subr.mxu0 0.0
    %213 = vmatpush1.msra.mxu0 0.0
    %214 = vmatprep.subr.mxu0 0.0
    %215 = vmatpush1.msra.mxu0 0.0
    %216 = vmatprep.subr.mxu0 0.0
    %217 = vmatpush1.msra.mxu0 0.0
    %218 = vmatprep.subr.mxu0 0.0
    %219 = vmatpush1.msra.mxu0 0.0
    %220 = vmatprep.subr.mxu0 0.0
    %221 = vmatpush1.msra.mxu0 0.0
    %222 = vmatprep.subr.mxu0 0.0
    %223 = vmatpush1.msra.mxu0 0.0
    %224 = vmatprep.subr.mxu0 0.0
    %225 = vmatpush1.msra.mxu0 0.0
    %226 = vmatprep.subr.mxu0 0.0
    %227 = vmatpush1.msra.mxu0 0.0
    %228 = vmatprep.subr.mxu0 0.0
    %229 = vmatpush1.msra.mxu0 0.0
    %230 = vmatprep.subr.mxu0 0.0
    %v231 = vand.u32 %v20, 4294901760
    %v232 = vsub.f32 %v20, %v231
    %233 = vmatpush1.msra.mxu0 %v232
    %234 = vmatprep.subr.mxu0 0.0
    %v235 = vand.u32 %v19, 4294901760
    %v236 = vsub.f32 %v19, %v235
    %237 = vmatpush1.msra.mxu0 %v236
    %238 = vmatprep.subr.mxu0 0.0
    %239 = vmatpush2.msra.mxu0 0.0
    %240 = vmatprep.subr.mxu0 0.0
    %241 = vmatpush2.msra.mxu0 0.0
    %242 = vmatprep.subr.mxu0 0.0
    %243 = vmatpush2.msra.mxu0 0.0
    %244 = vmatprep.subr.mxu0 0.0
    %245 = vmatpush2.msra.mxu0 0.0
    %246 = vmatprep.subr.mxu0 0.0
    %247 = vmatpush2.msra.mxu0 0.0
    %248 = vmatprep.subr.mxu0 0.0
    %249 = vmatpush2.msra.mxu0 0.0
    %250 = vmatprep.subr.mxu0 0.0
    %251 = vmatpush2.msra.mxu0 0.0
    %252 = vmatprep.subr.mxu0 0.0
    %253 = vmatpush2.msra.mxu0 0.0
    %254 = vmatprep.subr.mxu0 0.0
    %255 = vmatpush2.msra.mxu0 0.0
    %256 = vmatprep.subr.mxu0 0.0
    %257 = vmatpush2.msra.mxu0 0.0
    %258 = vmatprep.subr.mxu0 0.0
    %259 = vmatpush2.msra.mxu0 0.0
    %260 = vmatprep.subr.mxu0 0.0
    %261 = vmatpush2.msra.mxu0 0.0
    %262 = vmatprep.subr.mxu0 0.0
    %263 = vmatpush2.msra.mxu0 0.0
    %264 = vmatprep.subr.mxu0 0.0
    %265 = vmatpush2.msra.mxu0 0.0
    %266 = vmatprep.subr.mxu0 0.0
    %267 = vmatpush2.msra.mxu0 0.0
    %268 = vmatprep.subr.mxu0 0.0
    %269 = vmatpush2.msra.mxu0 0.0
    %270 = vmatprep.mubr.f32.mxu0 0.0
    %v271 = vand.u32 %v23, 4294901760
    %v272 = vsub.f32 %v23, %v271
    %273 = vmatmul.mubr.f32.gmra.mxu0 %v272
    %v274 = vpop.f32.mrf.mxu0
    %v275 = vadd.f32 %v193, %v274
    %v276 = vpop.f32.mrf.mxu0
    %277 = vmatprep.mubr.f32.mxu0 0.0
    %v278 = vand.u32 %v26, 4294901760
    %v279 = vsub.f32 %v26, %v278
    %280 = vmatmul.mubr.f32.gmra.mxu0 %v279
    %v281 = vpop.f32.mrf.mxu0
    %v282 = vadd.f32 %v199, %v281
    %v283 = vpop.f32.mrf.mxu0
    %284 = vdwg.mxu0
    %285 = vmatprep.subr.mxu0 0.0
    %286 = vmatpush1.msra.mxu0 0.0
    %287 = vmatprep.subr.mxu0 0.0
    %288 = vmatpush1.msra.mxu0 0.0
    %289 = vmatprep.subr.mxu0 0.0
    %290 = vmatpush1.msra.mxu0 0.0
    %291 = vmatprep.subr.mxu0 0.0
    %292 = vmatpush1.msra.mxu0 0.0
    %293 = vmatprep.subr.mxu0 0.0
    %294 = vmatpush1.msra.mxu0 0.0
    %295 = vmatprep.subr.mxu0 0.0
    %296 = vmatpush1.msra.mxu0 0.0
    %297 = vmatprep.subr.mxu0 0.0
    %298 = vmatpush1.msra.mxu0 0.0
    %299 = vmatprep.subr.mxu0 0.0
    %300 = vmatpush1.msra.mxu0 0.0
    %301 = vmatprep.subr.mxu0 0.0
    %302 = vmatpush1.msra.mxu0 0.0
    %303 = vmatprep.subr.mxu0 0.0
    %304 = vmatpush1.msra.mxu0 0.0
    %305 = vmatprep.subr.mxu0 0.0
    %306 = vmatpush1.msra.mxu0 0.0
    %307 = vmatprep.subr.mxu0 0.0
    %308 = vmatpush1.msra.mxu0 0.0
    %309 = vmatprep.subr.mxu0 0.0
    %310 = vmatpush1.msra.mxu0 0.0
    %311 = vmatprep.subr.mxu0 0.0
    %312 = vmatpush1.msra.mxu0 0.0
    %313 = vmatprep.subr.mxu0 0.0
    %v314 = vand.u32 %v20, 4294901760
    %315 = vmatpush1.msra.mxu0 %v314
    %316 = vmatprep.subr.mxu0 0.0
    %v317 = vand.u32 %v19, 4294901760
    %318 = vmatpush1.msra.mxu0 %v317
    %319 = vmatprep.subr.mxu0 0.0
    %320 = vmatpush2.msra.mxu0 0.0
    %321 = vmatprep.subr.mxu0 0.0
    %322 = vmatpush2.msra.mxu0 0.0
    %323 = vmatprep.subr.mxu0 0.0
    %324 = vmatpush2.msra.mxu0 0.0
    %325 = vmatprep.subr.mxu0 0.0
    %326 = vmatpush2.msra.mxu0 0.0
    %327 = vmatprep.subr.mxu0 0.0
    %328 = vmatpush2.msra.mxu0 0.0
    %329 = vmatprep.subr.mxu0 0.0
    %330 = vmatpush2.msra.mxu0 0.0
    %331 = vmatprep.subr.mxu0 0.0
    %332 = vmatpush2.msra.mxu0 0.0
    %333 = vmatprep.subr.mxu0 0.0
    %334 = vmatpush2.msra.mxu0 0.0
    %335 = vmatprep.subr.mxu0 0.0
    %336 = vmatpush2.msra.mxu0 0.0
    %337 = vmatprep.subr.mxu0 0.0
    %338 = vmatpush2.msra.mxu0 0.0
    %339 = vmatprep.subr.mxu0 0.0
    %340 = vmatpush2.msra.mxu0 0.0
    %341 = vmatprep.subr.mxu0 0.0
    %342 = vmatpush2.msra.mxu0 0.0
    %343 = vmatprep.subr.mxu0 0.0
    %344 = vmatpush2.msra.mxu0 0.0
    %345 = vmatprep.subr.mxu0 0.0
    %346 = vmatpush2.msra.mxu0 0.0
    %347 = vmatprep.subr.mxu0 0.0
    %348 = vmatpush2.msra.mxu0 0.0
    %349 = vmatprep.subr.mxu0 0.0
    %350 = vmatpush2.msra.mxu0 0.0
    %351 = vmatprep.mubr.f32.mxu0 0.0
    %v352 = vand.u32 %v23, 4294901760
    %v353 = vsub.f32 %v23, %v352
    %v354 = vand.u32 %v353, 4294901760
    %355 = vmatmul.mubr.f32.gmra.mxu0 %v354
    %v356 = vpop.f32.mrf.mxu0
    %v357 = vadd.f32 %v275, %v356
    %v358 = vpop.f32.mrf.mxu0
    %359 = vmatprep.mubr.f32.mxu0 0.0
    %v360 = vand.u32 %v26, 4294901760
    %v361 = vsub.f32 %v26, %v360
    %v362 = vand.u32 %v361, 4294901760
    %363 = vmatmul.mubr.f32.gmra.mxu0 %v362
    %v364 = vpop.f32.mrf.mxu0
    %v365 = vadd.f32 %v282, %v364
    %v366 = vpop.f32.mrf.mxu0
    %367 = vdwg.mxu0
    %368 = vmatprep.subr.mxu0 0.0
    %369 = vmatpush1.msra.mxu0 0.0
    %370 = vmatprep.subr.mxu0 0.0
    %371 = vmatpush1.msra.mxu0 0.0
    %372 = vmatprep.subr.mxu0 0.0
    %373 = vmatpush1.msra.mxu0 0.0
    %374 = vmatprep.subr.mxu0 0.0
    %375 = vmatpush1.msra.mxu0 0.0
    %376 = vmatprep.subr.mxu0 0.0
    %377 = vmatpush1.msra.mxu0 0.0
    %378 = vmatprep.subr.mxu0 0.0
    %379 = vmatpush1.msra.mxu0 0.0
    %380 = vmatprep.subr.mxu0 0.0
    %381 = vmatpush1.msra.mxu0 0.0
    %382 = vmatprep.subr.mxu0 0.0
    %383 = vmatpush1.msra.mxu0 0.0
    %384 = vmatprep.subr.mxu0 0.0
    %385 = vmatpush1.msra.mxu0 0.0
    %386 = vmatprep.subr.mxu0 0.0
    %387 = vmatpush1.msra.mxu0 0.0
    %388 = vmatprep.subr.mxu0 0.0
    %389 = vmatpush1.msra.mxu0 0.0
    %390 = vmatprep.subr.mxu0 0.0
    %391 = vmatpush1.msra.mxu0 0.0
    %392 = vmatprep.subr.mxu0 0.0
    %393 = vmatpush1.msra.mxu0 0.0
    %394 = vmatprep.subr.mxu0 0.0
    %395 = vmatpush1.msra.mxu0 0.0
    %396 = vmatprep.subr.mxu0 0.0
    %v397 = vand.u32 %v20, 4294901760
    %v398 = vsub.f32 %v20, %v397
    %v399 = vand.u32 %v398, 4294901760
    %400 = vmatpush1.msra.mxu0 %v399
    %401 = vmatprep.subr.mxu0 0.0
    %v402 = vand.u32 %v19, 4294901760
    %v403 = vsub.f32 %v19, %v402
    %v404 = vand.u32 %v403, 4294901760
    %405 = vmatpush1.msra.mxu0 %v404
    %406 = vmatprep.subr.mxu0 0.0
    %407 = vmatpush2.msra.mxu0 0.0
    %408 = vmatprep.subr.mxu0 0.0
    %409 = vmatpush2.msra.mxu0 0.0
    %410 = vmatprep.subr.mxu0 0.0
    %411 = vmatpush2.msra.mxu0 0.0
    %412 = vmatprep.subr.mxu0 0.0
    %413 = vmatpush2.msra.mxu0 0.0
    %414 = vmatprep.subr.mxu0 0.0
    %415 = vmatpush2.msra.mxu0 0.0
    %416 = vmatprep.subr.mxu0 0.0
    %417 = vmatpush2.msra.mxu0 0.0
    %418 = vmatprep.subr.mxu0 0.0
    %419 = vmatpush2.msra.mxu0 0.0
    %420 = vmatprep.subr.mxu0 0.0
    %421 = vmatpush2.msra.mxu0 0.0
    %422 = vmatprep.subr.mxu0 0.0
    %423 = vmatpush2.msra.mxu0 0.0
    %424 = vmatprep.subr.mxu0 0.0
    %425 = vmatpush2.msra.mxu0 0.0
    %426 = vmatprep.subr.mxu0 0.0
    %427 = vmatpush2.msra.mxu0 0.0
    %428 = vmatprep.subr.mxu0 0.0
    %429 = vmatpush2.msra.mxu0 0.0
    %430 = vmatprep.subr.mxu0 0.0
    %431 = vmatpush2.msra.mxu0 0.0
    %432 = vmatprep.subr.mxu0 0.0
    %433 = vmatpush2.msra.mxu0 0.0
    %434 = vmatprep.subr.mxu0 0.0
    %435 = vmatpush2.msra.mxu0 0.0
    %436 = vmatprep.subr.mxu0 0.0
    %437 = vmatpush2.msra.mxu0 0.0
    %438 = vmatprep.mubr.f32.mxu0 0.0
    %v439 = vand.u32 %v23, 4294901760
    %440 = vmatmul.mubr.f32.gmra.mxu0 %v439
    %v441 = vpop.f32.mrf.mxu0
    %v442 = vadd.f32 %v357, %v441
    %v443 = vpop.f32.mrf.mxu0
    %444 = vmatprep.mubr.f32.mxu0 0.0
    %v445 = vand.u32 %v26, 4294901760
    %446 = vmatmul.mubr.f32.gmra.mxu0 %v445
    %v447 = vpop.f32.mrf.mxu0
    %v448 = vadd.f32 %v365, %v447
    %v449 = vpop.f32.mrf.mxu0
    %450 = vdwg.mxu0
    %451 = vmatprep.subr.mxu0 0.0
    %452 = vmatpush1.msra.mxu0 0.0
    %453 = vmatprep.subr.mxu0 0.0
    %454 = vmatpush1.msra.mxu0 0.0
    %455 = vmatprep.subr.mxu0 0.0
    %456 = vmatpush1.msra.mxu0 0.0
    %457 = vmatprep.subr.mxu0 0.0
    %458 = vmatpush1.msra.mxu0 0.0
    %459 = vmatprep.subr.mxu0 0.0
    %460 = vmatpush1.msra.mxu0 0.0
    %461 = vmatprep.subr.mxu0 0.0
    %462 = vmatpush1.msra.mxu0 0.0
    %463 = vmatprep.subr.mxu0 0.0
    %464 = vmatpush1.msra.mxu0 0.0
    %465 = vmatprep.subr.mxu0 0.0
    %466 = vmatpush1.msra.mxu0 0.0
    %467 = vmatprep.subr.mxu0 0.0
    %468 = vmatpush1.msra.mxu0 0.0
    %469 = vmatprep.subr.mxu0 0.0
    %470 = vmatpush1.msra.mxu0 0.0
    %471 = vmatprep.subr.mxu0 0.0
    %472 = vmatpush1.msra.mxu0 0.0
    %473 = vmatprep.subr.mxu0 0.0
    %474 = vmatpush1.msra.mxu0 0.0
    %475 = vmatprep.subr.mxu0 0.0
    %476 = vmatpush1.msra.mxu0 0.0
    %477 = vmatprep.subr.mxu0 0.0
    %478 = vmatpush1.msra.mxu0 0.0
    %479 = vmatprep.subr.mxu0 0.0
    %v480 = vand.u32 %v20, 4294901760
    %481 = vmatpush1.msra.mxu0 %v480
    %482 = vmatprep.subr.mxu0 0.0
    %v483 = vand.u32 %v19, 4294901760
    %484 = vmatpush1.msra.mxu0 %v483
    %485 = vmatprep.subr.mxu0 0.0
    %486 = vmatpush2.msra.mxu0 0.0
    %487 = vmatprep.subr.mxu0 0.0
    %488 = vmatpush2.msra.mxu0 0.0
    %489 = vmatprep.subr.mxu0 0.0
    %490 = vmatpush2.msra.mxu0 0.0
    %491 = vmatprep.subr.mxu0 0.0
    %492 = vmatpush2.msra.mxu0 0.0
    %493 = vmatprep.subr.mxu0 0.0
    %494 = vmatpush2.msra.mxu0 0.0
    %495 = vmatprep.subr.mxu0 0.0
    %496 = vmatpush2.msra.mxu0 0.0
    %497 = vmatprep.subr.mxu0 0.0
    %498 = vmatpush2.msra.mxu0 0.0
    %499 = vmatprep.subr.mxu0 0.0
    %500 = vmatpush2.msra.mxu0 0.0
    %501 = vmatprep.subr.mxu0 0.0
    %502 = vmatpush2.msra.mxu0 0.0
    %503 = vmatprep.subr.mxu0 0.0
    %504 = vmatpush2.msra.mxu0 0.0
    %505 = vmatprep.subr.mxu0 0.0
    %506 = vmatpush2.msra.mxu0 0.0
    %507 = vmatprep.subr.mxu0 0.0
    %508 = vmatpush2.msra.mxu0 0.0
    %509 = vmatprep.subr.mxu0 0.0
    %510 = vmatpush2.msra.mxu0 0.0
    %511 = vmatprep.subr.mxu0 0.0
    %512 = vmatpush2.msra.mxu0 0.0
    %513 = vmatprep.subr.mxu0 0.0
    %514 = vmatpush2.msra.mxu0 0.0
    %515 = vmatprep.subr.mxu0 0.0
    %516 = vmatpush2.msra.mxu0 0.0
    %517 = vmatprep.mubr.f32.mxu0 0.0
    %v518 = vand.u32 %v23, 4294901760
    %519 = vmatmul.mubr.f32.gmra.mxu0 %v518
    %v520 = vpop.f32.mrf.mxu0
    %v521 = vadd.f32 %v442, %v520
    %v522 = vpop.f32.mrf.mxu0
    %523 = vmatprep.mubr.f32.mxu0 0.0
    %v524 = vand.u32 %v26, 4294901760
    %525 = vmatmul.mubr.f32.gmra.mxu0 %v524
    %v526 = vpop.f32.mrf.mxu0
    %v527 = vadd.f32 %v448, %v526
    %v528 = vpop.f32.mrf.mxu0
    %529 = vdwg.mxu0
    %v530 = vadd.f32 %v15, %v521
    %v531 = vadd.f32 %v16, %v527
    %vm532 = vcmask 261120
    %533 = vst.msk [vmem:[#allocation2] sm:$0xff] %vm532, %v530
    %534 = vst.msk [vmem:[#allocation2 + $0x8] sm:$0xff] %vm532, %v531
    // Predicated region
    $region14: #{mhsa_forward.7} parent=1 // pred_check
      _
    $region15: #{mhsa_forward.7} parent=1 // pred_check_branch
      %536 = sbr.rel (0) target = $region17
    $region16: #{mhsa_forward.7} parent=1 // pred_region
      %s538 = ssub.s32 256, 256
      %539 = vsyncadd [#allocation3], %s538
      %s540 = sshll.u32 [#allocation2], 4
      %s541 = int_to_ptr.vmem [resolvable:$true] %s540
      %546 = dma.vmem_to_hbm [thread:$0]  %s541, 256, %s3, [#allocation3], 128, 128, 8
    $region17: #{mhsa_forward.7} parent=1 // pred_fallthru
      _
    // Predicated region
    $region18: #{mhsa_forward.7} parent=1 // pred_check
      _
    $region19: #{mhsa_forward.7} parent=1 // pred_check_branch
      %548 = sbr.rel (0) target = $region21
    $region20: #{mhsa_forward.7} parent=1 // pred_region
      %549 = dma.done [#allocation3], 256
    $region21: #{mhsa_forward.7} parent=1 // pred_fallthru
      _
    %550 = vsyncpa [#allocation3], 1

// kernel: mhsa_forward.4
$region0: #{mhsa_forward.4}
  #allocation0 [shape = 'u32[]', space=smem, size = 0x4, offset = 0x4, fixed_abs, tag = 'smem constant byte address 0x4 - core index']
  #allocation1 [shape = 'u32[144,128]{1,0:T(1,128)}', space=vmem, size = 0x12000, scoped, tag = 'internal scratch']
  %s0 = inlined_call_operand.vmem [shape: f32[16,32], index: 0, kind: input, shape index: {}]
  %s1 = inlined_call_operand.vmem [shape: f32[1,32], index: 1, kind: input, shape index: {}]
  %s2 = inlined_call_operand.vmem [shape: f32[1,32], index: 2, kind: input, shape index: {}]
  %s3 = inlined_call_operand.vmem [shape: f32[32,48], index: 3, kind: input, shape index: {}]
  %s4 = inlined_call_operand.vmem [shape: f32[16,48], index: 4, kind: output, shape index: {}]
  %s5 = sld [smem:[#allocation0]]
  $region26: #{mhsa_forward.4} parent=0
    _
  %s7 = ssub.s32 1, %s5
  %s8 = scalar_select 0, %s7, %s5
  // Predicated region
  $region2: #{mhsa_forward.4} parent=0 // pred_check
    _
  $region3: #{mhsa_forward.4} parent=0 // pred_check_branch
    %10 = sbr.rel (0) target = $region5
  $region4: #{mhsa_forward.4} parent=0 // pred_region
    _
  $region5: #{mhsa_forward.4} parent=0 // pred_fallthru
    _
  // Predicated region
  $region6: #{mhsa_forward.4} parent=0 // pred_check
    _
  $region7: #{mhsa_forward.4} parent=0 // pred_check_branch
    %12 = sbr.rel (0) target = $region9
  $region8: #{mhsa_forward.4} parent=0 // pred_region
    _
  $region9: #{mhsa_forward.4} parent=0 // pred_fallthru
    _
  // Predicated region
  $region10: #{mhsa_forward.4} parent=0 // pred_check
    _
  $region11: #{mhsa_forward.4} parent=0 // pred_check_branch
    %14 = sbr.rel (0) target = $region13
  $region12: #{mhsa_forward.4} parent=0 // pred_region
    _
  $region13: #{mhsa_forward.4} parent=0 // pred_fallthru
    _
  // Predicated region
  $region14: #{mhsa_forward.4} parent=0 // pred_check
    _
  $region15: #{mhsa_forward.4} parent=0 // pred_check_branch
    %16 = sbr.rel (0) target = $region17
  $region16: #{mhsa_forward.4} parent=0 // pred_region
    _
  $region17: #{mhsa_forward.4} parent=0 // pred_fallthru
    _
  %v17 = vld [vmem:[%s0] sm:$0xff]
  %v18 = vld [vmem:[%s0 + $0x8] sm:$0xff]
  %vm19 = vcmask 261120
  %v20 = vsel %vm19, %v17, 0.0
  %21 = vadd.xlane.f32.xlu0 %v20
  %v22 = vpop.xlane.xlu0 %21
  %v23 = vsel %vm19, %v18, 0.0
  %24 = vadd.xlane.f32.xlu0 %v23
  %v25 = vpop.xlane.xlu0 %24
  %v26 = vrcp.pop 32.0
  %v27 = vmul.f32 %v22, %v26
  %v28 = vmul.f32 %v25, %v26
  %v29 = vsub.f32 %v17, %v27
  %v30 = vsub.f32 %v18, %v28
  %v31 = vmul.f32 %v29, %v29
  %v32 = vmul.f32 %v30, %v30
  %v33 = vsel %vm19, %v31, 0.0
  %34 = vadd.xlane.f32.xlu0 %v33
  %v35 = vpop.xlane.xlu0 %34
  %v36 = vsel %vm19, %v32, 0.0
  %37 = vadd.xlane.f32.xlu0 %v36
  %v38 = vpop.xlane.xlu0 %37
  %v39 = vmul.f32 %v35, %v26
  %v40 = vmul.f32 %v38, %v26
  %v41 = vadd.f32 %v39, 1e-05
  %v42 = vadd.f32 %v40, 1e-05
  %v43 = vrsqrt.pop %v41
  %v44 = vrsqrt.pop %v42
  %v45 = vmul.f32 %v29, %v43
  %v46 = vmul.f32 %v30, %v44
  %v47 = vld [vmem:[%s1] sm:$0x1]
  %v49 = vlaneseq
  %v50 = vshrl.u32 %v49, 7
  %v51 = vsub.s32 0, %v50
  %v52 = vrot.slane %v47, %v51
  %v54 = vmul.f32 %v45, %v52
  %v55 = vmul.f32 %v46, %v52
  %v56 = vld [vmem:[%s2] sm:$0x1]
  %v58 = vlaneseq
  %v59 = vshrl.u32 %v58, 7
  %v60 = vsub.s32 0, %v59
  %v61 = vrot.slane %v56, %v60
  %v63 = vadd.f32 %v54, %v61
  %v64 = vadd.f32 %v55, %v61
  %v65 = vld [vmem:[%s3] sm:$0xff]
  %v66 = vld [vmem:[%s3 + $0x8] sm:$0xff]
  %v67 = vld [vmem:[%s3 + $0x10] sm:$0xff]
  %v68 = vld [vmem:[%s3 + $0x18] sm:$0xff]
  %v70 = vsel %vm19, %v63, 0
  %v73 = vsel %vm19, %v64, 0
  %75 = vmatprep.subr.mxu0 0.0
  %76 = vmatpush1.msra.mxu0 0.0
  %77 = vmatprep.subr.mxu0 0.0
  %78 = vmatpush1.msra.mxu0 0.0
  %79 = vmatprep.subr.mxu0 0.0
  %80 = vmatpush1.msra.mxu0 0.0
  %81 = vmatprep.subr.mxu0 0.0
  %82 = vmatpush1.msra.mxu0 0.0
  %83 = vmatprep.subr.mxu0 0.0
  %84 = vmatpush1.msra.mxu0 0.0
  %85 = vmatprep.subr.mxu0 0.0
  %86 = vmatpush1.msra.mxu0 0.0
  %87 = vmatprep.subr.mxu0 0.0
  %88 = vmatpush1.msra.mxu0 0.0
  %89 = vmatprep.subr.mxu0 0.0
  %90 = vmatpush1.msra.mxu0 0.0
  %91 = vmatprep.subr.mxu0 0.0
  %92 = vmatpush1.msra.mxu0 0.0
  %93 = vmatprep.subr.mxu0 0.0
  %94 = vmatpush1.msra.mxu0 0.0
  %95 = vmatprep.subr.mxu0 0.0
  %96 = vmatpush1.msra.mxu0 0.0
  %97 = vmatprep.subr.mxu0 0.0
  %98 = vmatpush1.msra.mxu0 0.0
  %99 = vmatprep.subr.mxu0 0.0
  %v100 = vand.u32 %v68, 4294901760
  %101 = vmatpush1.msra.mxu0 %v100
  %102 = vmatprep.subr.mxu0 0.0
  %v103 = vand.u32 %v67, 4294901760
  %104 = vmatpush1.msra.mxu0 %v103
  %105 = vmatprep.subr.mxu0 0.0
  %v106 = vand.u32 %v66, 4294901760
  %107 = vmatpush1.msra.mxu0 %v106
  %108 = vmatprep.subr.mxu0 0.0
  %v109 = vand.u32 %v65, 4294901760
  %110 = vmatpush1.msra.mxu0 %v109
  %111 = vmatprep.subr.mxu0 0.0
  %112 = vmatpush2.msra.mxu0 0.0
  %113 = vmatprep.subr.mxu0 0.0
  %114 = vmatpush2.msra.mxu0 0.0
  %115 = vmatprep.subr.mxu0 0.0
  %116 = vmatpush2.msra.mxu0 0.0
  %117 = vmatprep.subr.mxu0 0.0
  %118 = vmatpush2.msra.mxu0 0.0
  %119 = vmatprep.subr.mxu0 0.0
  %120 = vmatpush2.msra.mxu0 0.0
  %121 = vmatprep.subr.mxu0 0.0
  %122 = vmatpush2.msra.mxu0 0.0
  %123 = vmatprep.subr.mxu0 0.0
  %124 = vmatpush2.msra.mxu0 0.0
  %125 = vmatprep.subr.mxu0 0.0
  %126 = vmatpush2.msra.mxu0 0.0
  %127 = vmatprep.subr.mxu0 0.0
  %128 = vmatpush2.msra.mxu0 0.0
  %129 = vmatprep.subr.mxu0 0.0
  %130 = vmatpush2.msra.mxu0 0.0
  %131 = vmatprep.subr.mxu0 0.0
  %132 = vmatpush2.msra.mxu0 0.0
  %133 = vmatprep.subr.mxu0 0.0
  %134 = vmatpush2.msra.mxu0 0.0
  %135 = vmatprep.subr.mxu0 0.0
  %136 = vmatpush2.msra.mxu0 0.0
  %137 = vmatprep.subr.mxu0 0.0
  %138 = vmatpush2.msra.mxu0 0.0
  %139 = vmatprep.subr.mxu0 0.0
  %140 = vmatpush2.msra.mxu0 0.0
  %141 = vmatprep.subr.mxu0 0.0
  %142 = vmatpush2.msra.mxu0 0.0
  %143 = vmatprep.mubr.f32.mxu0 0.0
  %v144 = vand.u32 %v70, 4294901760
  %v145 = vsub.f32 %v70, %v144
  %v146 = vand.u32 %v145, 4294901760
  %v147 = vsub.f32 %v145, %v146
  %v148 = vand.u32 %v147, 4294901760
  %149 = vmatmul.mubr.f32.gmra.mxu0 %v148
  %v150 = vpop.f32.mrf.mxu0
  %v151 = vadd.f32 0.0, %v150
  %v152 = vpop.f32.mrf.mxu0
  %153 = vmatprep.mubr.f32.mxu0 0.0
  %v154 = vand.u32 %v73, 4294901760
  %v155 = vsub.f32 %v73, %v154
  %v156 = vand.u32 %v155, 4294901760
  %v157 = vsub.f32 %v155, %v156
  %v158 = vand.u32 %v157, 4294901760
  %159 = vmatmul.mubr.f32.gmra.mxu0 %v158
  %v160 = vpop.f32.mrf.mxu0
  %v161 = vadd.f32 0.0, %v160
  %v162 = vpop.f32.mrf.mxu0
  %163 = vdwg.mxu0
  %164 = vmatprep.subr.mxu0 0.0
  %165 = vmatpush1.msra.mxu0 0.0
  %166 = vmatprep.subr.mxu0 0.0
  %167 = vmatpush1.msra.mxu0 0.0
  %168 = vmatprep.subr.mxu0 0.0
  %169 = vmatpush1.msra.mxu0 0.0
  %170 = vmatprep.subr.mxu0 0.0
  %171 = vmatpush1.msra.mxu0 0.0
  %172 = vmatprep.subr.mxu0 0.0
  %173 = vmatpush1.msra.mxu0 0.0
  %174 = vmatprep.subr.mxu0 0.0
  %175 = vmatpush1.msra.mxu0 0.0
  %176 = vmatprep.subr.mxu0 0.0
  %177 = vmatpush1.msra.mxu0 0.0
  %178 = vmatprep.subr.mxu0 0.0
  %179 = vmatpush1.msra.mxu0 0.0
  %180 = vmatprep.subr.mxu0 0.0
  %181 = vmatpush1.msra.mxu0 0.0
  %182 = vmatprep.subr.mxu0 0.0
  %183 = vmatpush1.msra.mxu0 0.0
  %184 = vmatprep.subr.mxu0 0.0
  %185 = vmatpush1.msra.mxu0 0.0
  %186 = vmatprep.subr.mxu0 0.0
  %187 = vmatpush1.msra.mxu0 0.0
  %188 = vmatprep.subr.mxu0 0.0
  %v189 = vand.u32 %v68, 4294901760
  %v190 = vsub.f32 %v68, %v189
  %v191 = vand.u32 %v190, 4294901760
  %v192 = vsub.f32 %v190, %v191
  %v193 = vand.u32 %v192, 4294901760
  %194 = vmatpush1.msra.mxu0 %v193
  %195 = vmatprep.subr.mxu0 0.0
  %v196 = vand.u32 %v67, 4294901760
  %v197 = vsub.f32 %v67, %v196
  %v198 = vand.u32 %v197, 4294901760
  %v199 = vsub.f32 %v197, %v198
  %v200 = vand.u32 %v199, 4294901760
  %201 = vmatpush1.msra.mxu0 %v200
  %202 = vmatprep.subr.mxu0 0.0
  %v203 = vand.u32 %v66, 4294901760
  %v204 = vsub.f32 %v66, %v203
  %v205 = vand.u32 %v204, 4294901760
  %v206 = vsub.f32 %v204, %v205
  %v207 = vand.u32 %v206, 4294901760
  %208 = vmatpush1.msra.mxu0 %v207
  %209 = vmatprep.subr.mxu0 0.0
  %v210 = vand.u32 %v65, 4294901760
  %v211 = vsub.f32 %v65, %v210
  %v212 = vand.u32 %v211, 4294901760
  %v213 = vsub.f32 %v211, %v212
  %v214 = vand.u32 %v213, 4294901760
  %215 = vmatpush1.msra.mxu0 %v214
  %216 = vmatprep.subr.mxu0 0.0
  %217 = vmatpush2.msra.mxu0 0.0
  %218 = vmatprep.subr.mxu0 0.0
  %219 = vmatpush2.msra.mxu0 0.0
  %220 = vmatprep.subr.mxu0 0.0
  %221 = vmatpush2.msra.mxu0 0.0
  %222 = vmatprep.subr.mxu0 0.0
  %223 = vmatpush2.msra.mxu0 0.0
  %224 = vmatprep.subr.mxu0 0.0
  %225 = vmatpush2.msra.mxu0 0.0
  %226 = vmatprep.subr.mxu0 0.0
  %227 = vmatpush2.msra.mxu0 0.0
  %228 = vmatprep.subr.mxu0 0.0
  %229 = vmatpush2.msra.mxu0 0.0
  %230 = vmatprep.subr.mxu0 0.0
  %231 = vmatpush2.msra.mxu0 0.0
  %232 = vmatprep.subr.mxu0 0.0
  %233 = vmatpush2.msra.mxu0 0.0
  %234 = vmatprep.subr.mxu0 0.0
  %235 = vmatpush2.msra.mxu0 0.0
  %236 = vmatprep.subr.mxu0 0.0
  %237 = vmatpush2.msra.mxu0 0.0
  %238 = vmatprep.subr.mxu0 0.0
  %239 = vmatpush2.msra.mxu0 0.0
  %240 = vmatprep.subr.mxu0 0.0
  %241 = vmatpush2.msra.mxu0 0.0
  %242 = vmatprep.subr.mxu0 0.0
  %243 = vmatpush2.msra.mxu0 0.0
  %244 = vmatprep.subr.mxu0 0.0
  %245 = vmatpush2.msra.mxu0 0.0
  %246 = vmatprep.subr.mxu0 0.0
  %247 = vmatpush2.msra.mxu0 0.0
  %248 = vmatprep.mubr.f32.mxu0 0.0
  %v249 = vand.u32 %v70, 4294901760
  %250 = vmatmul.mubr.f32.gmra.mxu0 %v249
  %v251 = vpop.f32.mrf.mxu0
  %v252 = vadd.f32 %v151, %v251
  %v253 = vpop.f32.mrf.mxu0
  %254 = vmatprep.mubr.f32.mxu0 0.0
  %v255 = vand.u32 %v73, 4294901760
  %256 = vmatmul.mubr.f32.gmra.mxu0 %v255
  %v257 = vpop.f32.mrf.mxu0
  %v258 = vadd.f32 %v161, %v257
  %v259 = vpop.f32.mrf.mxu0
  %260 = vdwg.mxu0
  %261 = vmatprep.subr.mxu0 0.0
  %262 = vmatpush1.msra.mxu0 0.0
  %263 = vmatprep.subr.mxu0 0.0
  %264 = vmatpush1.msra.mxu0 0.0
  %265 = vmatprep.subr.mxu0 0.0
  %266 = vmatpush1.msra.mxu0 0.0
  %267 = vmatprep.subr.mxu0 0.0
  %268 = vmatpush1.msra.mxu0 0.0
  %269 = vmatprep.subr.mxu0 0.0
  %270 = vmatpush1.msra.mxu0 0.0
  %271 = vmatprep.subr.mxu0 0.0
  %272 = vmatpush1.msra.mxu0 0.0
  %273 = vmatprep.subr.mxu0 0.0
  %274 = vmatpush1.msra.mxu0 0.0
  %275 = vmatprep.subr.mxu0 0.0
  %276 = vmatpush1.msra.mxu0 0.0
  %277 = vmatprep.subr.mxu0 0.0
  %278 = vmatpush1.msra.mxu0 0.0
  %279 = vmatprep.subr.mxu0 0.0
  %280 = vmatpush1.msra.mxu0 0.0
  %281 = vmatprep.subr.mxu0 0.0
  %282 = vmatpush1.msra.mxu0 0.0
  %283 = vmatprep.subr.mxu0 0.0
  %284 = vmatpush1.msra.mxu0 0.0
  %285 = vmatprep.subr.mxu0 0.0
  %v286 = vand.u32 %v68, 4294901760
  %v287 = vsub.f32 %v68, %v286
  %288 = vmatpush1.msra.mxu0 %v287
  %289 = vmatprep.subr.mxu0 0.0
  %v290 = vand.u32 %v67, 4294901760
  %v291 = vsub.f32 %v67, %v290
  %292 = vmatpush1.msra.mxu0 %v291
  %293 = vmatprep.subr.mxu0 0.0
  %v294 = vand.u32 %v66, 4294901760
  %v295 = vsub.f32 %v66, %v294
  %296 = vmatpush1.msra.mxu0 %v295
  %297 = vmatprep.subr.mxu0 0.0
  %v298 = vand.u32 %v65, 4294901760
  %v299 = vsub.f32 %v65, %v298
  %300 = vmatpush1.msra.mxu0 %v299
  %301 = vmatprep.subr.mxu0 0.0
  %302 = vmatpush2.msra.mxu0 0.0
  %303 = vmatprep.subr.mxu0 0.0
  %304 = vmatpush2.msra.mxu0 0.0
  %305 = vmatprep.subr.mxu0 0.0
  %306 = vmatpush2.msra.mxu0 0.0
  %307 = vmatprep.subr.mxu0 0.0
  %308 = vmatpush2.msra.mxu0 0.0
  %309 = vmatprep.subr.mxu0 0.0
  %310 = vmatpush2.msra.mxu0 0.0
  %311 = vmatprep.subr.mxu0 0.0
  %312 = vmatpush2.msra.mxu0 0.0
  %313 = vmatprep.subr.mxu0 0.0
  %314 = vmatpush2.msra.mxu0 0.0
  %315 = vmatprep.subr.mxu0 0.0
  %316 = vmatpush2.msra.mxu0 0.0
  %317 = vmatprep.subr.mxu0 0.0
  %318 = vmatpush2.msra.mxu0 0.0
  %319 = vmatprep.subr.mxu0 0.0
  %320 = vmatpush2.msra.mxu0 0.0
  %321 = vmatprep.subr.mxu0 0.0
  %322 = vmatpush2.msra.mxu0 0.0
  %323 = vmatprep.subr.mxu0 0.0
  %324 = vmatpush2.msra.mxu0 0.0
  %325 = vmatprep.subr.mxu0 0.0
  %326 = vmatpush2.msra.mxu0 0.0
  %327 = vmatprep.subr.mxu0 0.0
  %328 = vmatpush2.msra.mxu0 0.0
  %329 = vmatprep.subr.mxu0 0.0
  %330 = vmatpush2.msra.mxu0 0.0
  %331 = vmatprep.subr.mxu0 0.0
  %332 = vmatpush2.msra.mxu0 0.0
  %333 = vmatprep.mubr.f32.mxu0 0.0
  %v334 = vand.u32 %v70, 4294901760
  %v335 = vsub.f32 %v70, %v334
  %336 = vmatmul.mubr.f32.gmra.mxu0 %v335
  %v337 = vpop.f32.mrf.mxu0
  %v338 = vadd.f32 %v252, %v337
  %v339 = vpop.f32.mrf.mxu0
  %340 = vmatprep.mubr.f32.mxu0 0.0
  %v341 = vand.u32 %v73, 4294901760
  %v342 = vsub.f32 %v73, %v341
  %343 = vmatmul.mubr.f32.gmra.mxu0 %v342
  %v344 = vpop.f32.mrf.mxu0
  %v345 = vadd.f32 %v258, %v344
  %v346 = vpop.f32.mrf.mxu0
  %347 = vdwg.mxu0
  %348 = vmatprep.subr.mxu0 0.0
  %349 = vmatpush1.msra.mxu0 0.0
  %350 = vmatprep.subr.mxu0 0.0
  %351 = vmatpush1.msra.mxu0 0.0
  %352 = vmatprep.subr.mxu0 0.0
  %353 = vmatpush1.msra.mxu0 0.0
  %354 = vmatprep.subr.mxu0 0.0
  %355 = vmatpush1.msra.mxu0 0.0
  %356 = vmatprep.subr.mxu0 0.0
  %357 = vmatpush1.msra.mxu0 0.0
  %358 = vmatprep.subr.mxu0 0.0
  %359 = vmatpush1.msra.mxu0 0.0
  %360 = vmatprep.subr.mxu0 0.0
  %361 = vmatpush1.msra.mxu0 0.0
  %362 = vmatprep.subr.mxu0 0.0
  %363 = vmatpush1.msra.mxu0 0.0
  %364 = vmatprep.subr.mxu0 0.0
  %365 = vmatpush1.msra.mxu0 0.0
  %366 = vmatprep.subr.mxu0 0.0
  %367 = vmatpush1.msra.mxu0 0.0
  %368 = vmatprep.subr.mxu0 0.0
  %369 = vmatpush1.msra.mxu0 0.0
  %370 = vmatprep.subr.mxu0 0.0
  %371 = vmatpush1.msra.mxu0 0.0
  %372 = vmatprep.subr.mxu0 0.0
  %v373 = vand.u32 %v68, 4294901760
  %374 = vmatpush1.msra.mxu0 %v373
  %375 = vmatprep.subr.mxu0 0.0
  %v376 = vand.u32 %v67, 4294901760
  %377 = vmatpush1.msra.mxu0 %v376
  %378 = vmatprep.subr.mxu0 0.0
  %v379 = vand.u32 %v66, 4294901760
  %380 = vmatpush1.msra.mxu0 %v379
  %381 = vmatprep.subr.mxu0 0.0
  %v382 = vand.u32 %v65, 4294901760
  %383 = vmatpush1.msra.mxu0 %v382
  %384 = vmatprep.subr.mxu0 0.0
  %385 = vmatpush2.msra.mxu0 0.0
  %386 = vmatprep.subr.mxu0 0.0
  %387 = vmatpush2.msra.mxu0 0.0
  %388 = vmatprep.subr.mxu0 0.0
  %389 = vmatpush2.msra.mxu0 0.0
  %390 = vmatprep.subr.mxu0 0.0
  %391 = vmatpush2.msra.mxu0 0.0
  %392 = vmatprep.subr.mxu0 0.0
  %393 = vmatpush2.msra.mxu0 0.0
  %394 = vmatprep.subr.mxu0 0.0
  %395 = vmatpush2.msra.mxu0 0.0
  %396 = vmatprep.subr.mxu0 0.0
  %397 = vmatpush2.msra.mxu0 0.0
  %398 = vmatprep.subr.mxu0 0.0
  %399 = vmatpush2.msra.mxu0 0.0
  %400 = vmatprep.subr.mxu0 0.0
  %401 = vmatpush2.msra.mxu0 0.0
  %402 = vmatprep.subr.mxu0 0.0
  %403 = vmatpush2.msra.mxu0 0.0
  %404 = vmatprep.subr.mxu0 0.0
  %405 = vmatpush2.msra.mxu0 0.0
  %406 = vmatprep.subr.mxu0 0.0
  %407 = vmatpush2.msra.mxu0 0.0
  %408 = vmatprep.subr.mxu0 0.0
  %409 = vmatpush2.msra.mxu0 0.0
  %410 = vmatprep.subr.mxu0 0.0
  %411 = vmatpush2.msra.mxu0 0.0
  %412 = vmatprep.subr.mxu0 0.0
  %413 = vmatpush2.msra.mxu0 0.0
  %414 = vmatprep.subr.mxu0 0.0
  %415 = vmatpush2.msra.mxu0 0.0
  %416 = vmatprep.mubr.f32.mxu0 0.0
  %v417 = vand.u32 %v70, 4294901760
  %v418 = vsub.f32 %v70, %v417
  %v419 = vand.u32 %v418, 4294901760
  %420 = vmatmul.mubr.f32.gmra.mxu0 %v419
  %v421 = vpop.f32.mrf.mxu0
  %v422 = vadd.f32 %v338, %v421
  %v423 = vpop.f32.mrf.mxu0
  %424 = vmatprep.mubr.f32.mxu0 0.0
  %v425 = vand.u32 %v73, 4294901760
  %v426 = vsub.f32 %v73, %v425
  %v427 = vand.u32 %v426, 4294901760
  %428 = vmatmul.mubr.f32.gmra.mxu0 %v427
  %v429 = vpop.f32.mrf.mxu0
  %v430 = vadd.f32 %v345, %v429
  %v431 = vpop.f32.mrf.mxu0
  %432 = vdwg.mxu0
  %433 = vmatprep.subr.mxu0 0.0
  %434 = vmatpush1.msra.mxu0 0.0
  %435 = vmatprep.subr.mxu0 0.0
  %436 = vmatpush1.msra.mxu0 0.0
  %437 = vmatprep.subr.mxu0 0.0
  %438 = vmatpush1.msra.mxu0 0.0
  %439 = vmatprep.subr.mxu0 0.0
  %440 = vmatpush1.msra.mxu0 0.0
  %441 = vmatprep.subr.mxu0 0.0
  %442 = vmatpush1.msra.mxu0 0.0
  %443 = vmatprep.subr.mxu0 0.0
  %444 = vmatpush1.msra.mxu0 0.0
  %445 = vmatprep.subr.mxu0 0.0
  %446 = vmatpush1.msra.mxu0 0.0
  %447 = vmatprep.subr.mxu0 0.0
  %448 = vmatpush1.msra.mxu0 0.0
  %449 = vmatprep.subr.mxu0 0.0
  %450 = vmatpush1.msra.mxu0 0.0
  %451 = vmatprep.subr.mxu0 0.0
  %452 = vmatpush1.msra.mxu0 0.0
  %453 = vmatprep.subr.mxu0 0.0
  %454 = vmatpush1.msra.mxu0 0.0
  %455 = vmatprep.subr.mxu0 0.0
  %456 = vmatpush1.msra.mxu0 0.0
  %457 = vmatprep.subr.mxu0 0.0
  %v458 = vand.u32 %v68, 4294901760
  %v459 = vsub.f32 %v68, %v458
  %v460 = vand.u32 %v459, 4294901760
  %461 = vmatpush1.msra.mxu0 %v460
  %462 = vmatprep.subr.mxu0 0.0
  %v463 = vand.u32 %v67, 4294901760
  %v464 = vsub.f32 %v67, %v463
  %v465 = vand.u32 %v464, 4294901760
  %466 = vmatpush1.msra.mxu0 %v465
  %467 = vmatprep.subr.mxu0 0.0
  %v468 = vand.u32 %v66, 4294901760
  %v469 = vsub.f32 %v66, %v468
  %v470 = vand.u32 %v469, 4294901760
  %471 = vmatpush1.msra.mxu0 %v470
  %472 = vmatprep.subr.mxu0 0.0
  %v473 = vand.u32 %v65, 4294901760
  %v474 = vsub.f32 %v65, %v473
  %v475 = vand.u32 %v474, 4294901760
  %476 = vmatpush1.msra.mxu0 %v475
  %477 = vmatprep.subr.mxu0 0.0
  %478 = vmatpush2.msra.mxu0 0.0
  %479 = vmatprep.subr.mxu0 0.0
  %480 = vmatpush2.msra.mxu0 0.0
  %481 = vmatprep.subr.mxu0 0.0
  %482 = vmatpush2.msra.mxu0 0.0
  %483 = vmatprep.subr.mxu0 0.0
  %484 = vmatpush2.msra.mxu0 0.0
  %485 = vmatprep.subr.mxu0 0.0
  %486 = vmatpush2.msra.mxu0 0.0
  %487 = vmatprep.subr.mxu0 0.0
  %488 = vmatpush2.msra.mxu0 0.0
  %489 = vmatprep.subr.mxu0 0.0
  %490 = vmatpush2.msra.mxu0 0.0
  %491 = vmatprep.subr.mxu0 0.0
  %492 = vmatpush2.msra.mxu0 0.0
  %493 = vmatprep.subr.mxu0 0.0
  %494 = vmatpush2.msra.mxu0 0.0
  %495 = vmatprep.subr.mxu0 0.0
  %496 = vmatpush2.msra.mxu0 0.0
  %497 = vmatprep.subr.mxu0 0.0
  %498 = vmatpush2.msra.mxu0 0.0
  %499 = vmatprep.subr.mxu0 0.0
  %500 = vmatpush2.msra.mxu0 0.0
  %501 = vmatprep.subr.mxu0 0.0
  %502 = vmatpush2.msra.mxu0 0.0
  %503 = vmatprep.subr.mxu0 0.0
  %504 = vmatpush2.msra.mxu0 0.0
  %505 = vmatprep.subr.mxu0 0.0
  %506 = vmatpush2.msra.mxu0 0.0
  %507 = vmatprep.subr.mxu0 0.0
  %508 = vmatpush2.msra.mxu0 0.0
  %509 = vmatprep.mubr.f32.mxu0 0.0
  %v510 = vand.u32 %v70, 4294901760
  %511 = vmatmul.mubr.f32.gmra.mxu0 %v510
  %v512 = vpop.f32.mrf.mxu0
  %v513 = vadd.f32 %v422, %v512
  %v514 = vpop.f32.mrf.mxu0
  %515 = vmatprep.mubr.f32.mxu0 0.0
  %v516 = vand.u32 %v73, 4294901760
  %517 = vmatmul.mubr.f32.gmra.mxu0 %v516
  %v518 = vpop.f32.mrf.mxu0
  %v519 = vadd.f32 %v430, %v518
  %v520 = vpop.f32.mrf.mxu0
  %521 = vdwg.mxu0
  %522 = vmatprep.subr.mxu0 0.0
  %523 = vmatpush1.msra.mxu0 0.0
  %524 = vmatprep.subr.mxu0 0.0
  %525 = vmatpush1.msra.mxu0 0.0
  %526 = vmatprep.subr.mxu0 0.0
  %527 = vmatpush1.msra.mxu0 0.0
  %528 = vmatprep.subr.mxu0 0.0
  %529 = vmatpush1.msra.mxu0 0.0
  %530 = vmatprep.subr.mxu0 0.0
  %531 = vmatpush1.msra.mxu0 0.0
  %532 = vmatprep.subr.mxu0 0.0
  %533 = vmatpush1.msra.mxu0 0.0
  %534 = vmatprep.subr.mxu0 0.0
  %535 = vmatpush1.msra.mxu0 0.0
  %536 = vmatprep.subr.mxu0 0.0
  %537 = vmatpush1.msra.mxu0 0.0
  %538 = vmatprep.subr.mxu0 0.0
  %539 = vmatpush1.msra.mxu0 0.0
  %540 = vmatprep.subr.mxu0 0.0
  %541 = vmatpush1.msra.mxu0 0.0
  %542 = vmatprep.subr.mxu0 0.0
  %543 = vmatpush1.msra.mxu0 0.0
  %544 = vmatprep.subr.mxu0 0.0
  %545 = vmatpush1.msra.mxu0 0.0
  %546 = vmatprep.subr.mxu0 0.0
  %v547 = vand.u32 %v68, 4294901760
  %548 = vmatpush1.msra.mxu0 %v547
  %549 = vmatprep.subr.mxu0 0.0
  %v550 = vand.u32 %v67, 4294901760
  %551 = vmatpush1.msra.mxu0 %v550
  %552 = vmatprep.subr.mxu0 0.0
  %v553 = vand.u32 %v66, 4294901760
  %554 = vmatpush1.msra.mxu0 %v553
  %555 = vmatprep.subr.mxu0 0.0
  %v556 = vand.u32 %v65, 4294901760
  %557 = vmatpush1.msra.mxu0 %v556
  %558 = vmatprep.subr.mxu0 0.0
  %559 = vmatpush2.msra.mxu0 0.0
  %560 = vmatprep.subr.mxu0 0.0
  %561 = vmatpush2.msra.mxu0 0.0
  %562 = vmatprep.subr.mxu0 0.0
  %563 = vmatpush2.msra.mxu0 0.0
  %564 = vmatprep.subr.mxu0 0.0
  %565 = vmatpush2.msra.mxu0 0.0
  %566 = vmatprep.subr.mxu0 0.0
  %567 = vmatpush2.msra.mxu0 0.0
  %568 = vmatprep.subr.mxu0 0.0
  %569 = vmatpush2.msra.mxu0 0.0
  %570 = vmatprep.subr.mxu0 0.0
  %571 = vmatpush2.msra.mxu0 0.0
  %572 = vmatprep.subr.mxu0 0.0
  %573 = vmatpush2.msra.mxu0 0.0
  %574 = vmatprep.subr.mxu0 0.0
  %575 = vmatpush2.msra.mxu0 0.0
  %576 = vmatprep.subr.mxu0 0.0
  %577 = vmatpush2.msra.mxu0 0.0
  %578 = vmatprep.subr.mxu0 0.0
  %579 = vmatpush2.msra.mxu0 0.0
  %580 = vmatprep.subr.mxu0 0.0
  %581 = vmatpush2.msra.mxu0 0.0
  %582 = vmatprep.subr.mxu0 0.0
  %583 = vmatpush2.msra.mxu0 0.0
  %584 = vmatprep.subr.mxu0 0.0
  %585 = vmatpush2.msra.mxu0 0.0
  %586 = vmatprep.subr.mxu0 0.0
  %587 = vmatpush2.msra.mxu0 0.0
  %588 = vmatprep.subr.mxu0 0.0
  %589 = vmatpush2.msra.mxu0 0.0
  %590 = vmatprep.mubr.f32.mxu0 0.0
  %v591 = vand.u32 %v70, 4294901760
  %592 = vmatmul.mubr.f32.gmra.mxu0 %v591
  %v593 = vpop.f32.mrf.mxu0
  %v594 = vadd.f32 %v513, %v593
  %v595 = vpop.f32.mrf.mxu0
  %596 = vmatprep.mubr.f32.mxu0 0.0
  %v597 = vand.u32 %v73, 4294901760
  %598 = vmatmul.mubr.f32.gmra.mxu0 %v597
  %v599 = vpop.f32.mrf.mxu0
  %v600 = vadd.f32 %v519, %v599
  %v601 = vpop.f32.mrf.mxu0
  %602 = vdwg.mxu0
  %vm603 = vcmask 392192
  %604 = vst.msk [vmem:[%s4] sm:$0xff] %vm603, %v594
  %605 = vst.msk [vmem:[%s4 + $0x8] sm:$0xff] %vm603, %v600
  // Predicated region
  $region18: #{mhsa_forward.4} parent=0 // pred_check
    _
  $region19: #{mhsa_forward.4} parent=0 // pred_check_branch
    %607 = sbr.rel (0) target = $region21
  $region20: #{mhsa_forward.4} parent=0 // pred_region
    _
  $region21: #{mhsa_forward.4} parent=0 // pred_fallthru
    _
  // Predicated region
  $region22: #{mhsa_forward.4} parent=0 // pred_check
    _
  $region23: #{mhsa_forward.4} parent=0 // pred_check_branch
    %609 = sbr.rel (0) target = $region25
  $region24: #{mhsa_forward.4} parent=0 // pred_region
    _
  $region25: #{mhsa_forward.4} parent=0 // pred_fallthru
    _

// kernel: mhsa_forward.6
$region0: #{mhsa_forward.6}
  #allocation0 [shape = 'u32[]', space=smem, size = 0x4, offset = 0x4, fixed_abs, tag = 'smem constant byte address 0x4 - core index']
  #allocation1 [shape = 'u32[144,128]{1,0:T(1,128)}', space=vmem, size = 0x12000, scoped, tag = 'internal scratch']
  #allocation2 [shape = 's32[1]{0}', space=sflag, size = 0x4, scoped, tag = 'scoped memory for mhsa_forward.6']
  #allocation3 [shape = 'u8[512]{0}', space=smem, size = 0x200, scoped, tag = 'prefetched SMEM operand 0']
  %s0 = inlined_call_operand.vmem [shape: s32[2], index: 0, kind: input, shape index: {}]
  %s1 = inlined_call_operand.vmem [shape: f32[2,8,48], index: 1, kind: input, shape index: {}]
  %s2 = inlined_call_operand.vmem [shape: f32[8,16], index: 2, kind: input, shape index: {}]
  %s3 = inlined_call_operand.vmem [shape: f32[2,1,8], index: 3, kind: input, shape index: {}]
  %s4 = inlined_call_operand.vmem [shape: f32[2,1,8], index: 4, kind: input, shape index: {}]
  %s5 = inlined_call_operand.vmem [shape: f32[2,8,16], index: 5, kind: output, shape index: {}]
  %s6 = sld [smem:[#allocation0]]
  $region49: #{mhsa_forward.6} parent=0
    _
  %s8 = ssub.s32 1, %s6
  %s9 = scalar_select 0, %s8, %s6
  %s10 = sshll.u32 %s0, 4
  %s11 = int_to_ptr.vmem [resolvable:$true] %s10
  %13 = dma.vmem_to_smem %s11, 16, [#allocation3], [#allocation2]
  %14 = dma.done [#allocation2], 16
  %15 = sfence
  loop: start=0, step=1, limit=4
  $region2: #{mhsa_forward.6} parent=0 // loop_pre_header
    _
  $region3: #{mhsa_forward.6} parent=0 // loop_header
    %s17 = sphi 0, %s21
    %p18 = scmp.ge.s32.totalorder %s17, 4
    %s27 = sphi 0, %s29
    %s30 = sphi 0, %s27
    %s31 = sphi 0, %s30
    %s47 = sphi 0, %s31
    %s51 = sphi 0, %s51
    %s53 = sphi 0, %s51
    %s54 = sphi 0, %s53
    %s68 = sphi 0, %s54
    %s72 = sphi 0, %s72
    %s74 = sphi 0, %s72
    %s75 = sphi 0, %s74
    %s89 = sphi 0, %s75
    %s93 = sphi 0, %s93
    %s95 = sphi 0, %s93
    %s96 = sphi 0, %s95
    %s110 = sphi 0, %s96
    %s116 = sphi 0, %s118
    %s119 = sphi 0, %s116
    %s120 = sphi 0, %s119
    %s136 = sphi 0, %s120
  $region4: #{mhsa_forward.6} parent=0 // loop_header_branch
    %20 = sbr.rel (%p18) target = $region8
  $region5: #{mhsa_forward.6} parent=0 // loop_body
    %s22 = ssub.s32 %s17, 1
    %s23 = ssub.s32 %s17, 2
    %s24 = sadd.s32 %s17, 1
    %s25 = ssub.s32 %s17, %s24
    %p26 = scmp.eq.s32.totalorder %s25, 0
    %s28 = sadd.s32 %s27, 1
    %s29 = scalar_select %p26, %s27, %s28
    %p32 = pneg %p26
    %p33 = scmp.eq.s32.totalorder %s17, 1
    %p34 = por %p32, %p33
    %p35 = scmp.ne.s32.totalorder %s27, %s30
    %p36 = scmp.eq.s32.totalorder %s17, 0
    %p37 = por %p35, %p36
    %p38 = scmp.ne.s32.totalorder %s27, %s30
    %p39 = scmp.eq.s32.totalorder %s22, 1
    %p40 = por %p38, %p39
    %p41 = scmp.ne.s32.totalorder %s30, %s31
    %p42 = scmp.eq.s32.totalorder %s22, 0
    %p43 = por %p41, %p42
    %p44 = scmp.ne.s32.totalorder %s30, %s31
    %p45 = scmp.eq.s32.totalorder %s23, 1
    %p46 = por %p44, %p45
    %p48 = scmp.ne.s32.totalorder %s31, %s47
    %p49 = scmp.eq.s32.totalorder %s23, 0
    %p50 = por %p48, %p49
    %s52 = sadd.s32 %s51, 1
    %p55 = scmp.eq.s32.totalorder %s17, 1
    %p56 = scmp.ne.s32.totalorder %s51, %s53
    %p57 = scmp.eq.s32.totalorder %s17, 0
    %p58 = por %p56, %p57
    %p59 = scmp.ne.s32.totalorder %s51, %s53
    %p60 = scmp.eq.s32.totalorder %s22, 1
    %p61 = por %p59, %p60
    %p62 = scmp.ne.s32.totalorder %s53, %s54
    %p63 = scmp.eq.s32.totalorder %s22, 0
    %p64 = por %p62, %p63
    %p65 = scmp.ne.s32.totalorder %s53, %s54
    %p66 = scmp.eq.s32.totalorder %s23, 1
    %p67 = por %p65, %p66
    %p69 = scmp.ne.s32.totalorder %s54, %s68
    %p70 = scmp.eq.s32.totalorder %s23, 0
    %p71 = por %p69, %p70
    %s73 = sadd.s32 %s72, 1
    %p76 = scmp.eq.s32.totalorder %s17, 1
    %p77 = scmp.ne.s32.totalorder %s72, %s74
    %p78 = scmp.eq.s32.totalorder %s17, 0
    %p79 = por %p77, %p78
    %p80 = scmp.ne.s32.totalorder %s72, %s74
    %p81 = scmp.eq.s32.totalorder %s22, 1
    %p82 = por %p80, %p81
    %p83 = scmp.ne.s32.totalorder %s74, %s75
    %p84 = scmp.eq.s32.totalorder %s22, 0
    %p85 = por %p83, %p84
    %p86 = scmp.ne.s32.totalorder %s74, %s75
    %p87 = scmp.eq.s32.totalorder %s23, 1
    %p88 = por %p86, %p87
    %p90 = scmp.ne.s32.totalorder %s75, %s89
    %p91 = scmp.eq.s32.totalorder %s23, 0
    %p92 = por %p90, %p91
    %s94 = sadd.s32 %s93, 1
    %p97 = scmp.eq.s32.totalorder %s17, 1
    %p98 = scmp.ne.s32.totalorder %s93, %s95
    %p99 = scmp.eq.s32.totalorder %s17, 0
    %p100 = por %p98, %p99
    %p101 = scmp.ne.s32.totalorder %s93, %s95
    %p102 = scmp.eq.s32.totalorder %s22, 1
    %p103 = por %p101, %p102
    %p104 = scmp.ne.s32.totalorder %s95, %s96
    %p105 = scmp.eq.s32.totalorder %s22, 0
    %p106 = por %p104, %p105
    %p107 = scmp.ne.s32.totalorder %s95, %s96
    %p108 = scmp.eq.s32.totalorder %s23, 1
    %p109 = por %p107, %p108
    %p111 = scmp.ne.s32.totalorder %s96, %s110
    %p112 = scmp.eq.s32.totalorder %s23, 0
    %p113 = por %p111, %p112
    %s114 = ssub.s32 %s17, %s24
    %p115 = scmp.eq.s32.totalorder %s114, 0
    %s117 = sadd.s32 %s116, 1
    %s118 = scalar_select %p115, %s116, %s117
    %p121 = pneg %p115
    %p122 = scmp.eq.s32.totalorder %s17, 1
    %p123 = por %p121, %p122
    %p124 = scmp.ne.s32.totalorder %s116, %s119
    %p125 = scmp.eq.s32.totalorder %s17, 0
    %p126 = por %p124, %p125
    %p127 = scmp.ne.s32.totalorder %s116, %s119
    %p128 = scmp.eq.s32.totalorder %s22, 1
    %p129 = por %p127, %p128
    %p130 = scmp.ne.s32.totalorder %s119, %s120
    %p131 = scmp.eq.s32.totalorder %s22, 0
    %p132 = por %p130, %p131
    %p133 = scmp.ne.s32.totalorder %s119, %s120
    %p134 = scmp.eq.s32.totalorder %s23, 1
    %p135 = por %p133, %p134
    %p137 = scmp.ne.s32.totalorder %s120, %s136
    %p138 = scmp.eq.s32.totalorder %s23, 0
    %p139 = por %p137, %p138
    %p140 = scmp.le.s32.totalorder 1, %s17
    %p141 = scmp.lt.s32.totalorder %s17, 3
    %p142 = pnand %p140, %p141
    %p143 = pneg %p142
    // Predicated region
    $region9: #{mhsa_forward.6} parent=5 // pred_check
      _
    $region10: #{mhsa_forward.6} parent=5 // pred_check_branch
      %145 = sbr.rel (%p142) target = $region12
    $region11: #{mhsa_forward.6} parent=5 // pred_region
      %s146 = ssub.s32 %s17, 1
      // Predicated region
      $region13: #{mhsa_forward.6} parent=11 // pred_check
        %p147 = pneg %p64
      $region14: #{mhsa_forward.6} parent=11 // pred_check_branch
        %149 = sbr.rel (%p147) target = $region16
      $region15: #{mhsa_forward.6} parent=11 // pred_region
        _
      $region16: #{mhsa_forward.6} parent=11 // pred_fallthru
        _
      // Predicated region
      $region17: #{mhsa_forward.6} parent=11 // pred_check
        %p150 = pneg %p85
      $region18: #{mhsa_forward.6} parent=11 // pred_check_branch
        %152 = sbr.rel (%p150) target = $region20
      $region19: #{mhsa_forward.6} parent=11 // pred_region
        _
      $region20: #{mhsa_forward.6} parent=11 // pred_fallthru
        _
      // Predicated region
      $region21: #{mhsa_forward.6} parent=11 // pred_check
        %p153 = pneg %p106
      $region22: #{mhsa_forward.6} parent=11 // pred_check_branch
        %155 = sbr.rel (%p153) target = $region24
      $region23: #{mhsa_forward.6} parent=11 // pred_region
        _
      $region24: #{mhsa_forward.6} parent=11 // pred_fallthru
        _
    $region12: #{mhsa_forward.6} parent=5 // pred_fallthru
      _
    %p156 = scmp.lt.s32.totalorder %s17, 2
    // Predicated region
    $region25: #{mhsa_forward.6} parent=5 // pred_check
      %p157 = pneg %p156
    $region26: #{mhsa_forward.6} parent=5 // pred_check_branch
      %159 = sbr.rel (%p157) target = $region28
    $region27: #{mhsa_forward.6} parent=5 // pred_region
      // Predicated region
      $region29: #{mhsa_forward.6} parent=27 // pred_check
        %p160 = pneg %p37
      $region30: #{mhsa_forward.6} parent=27 // pred_check_branch
        %162 = sbr.rel (%p160) target = $region32
      $region31: #{mhsa_forward.6} parent=27 // pred_region
        %p163 = scmp.lt.s32.totalorder %s17, 1
        %s164 = scalar_select %p163, %s17, 1
        %s165 = smul.addr %s164, 8
        %s166 = scalar_lea.vmem %s1, %s165
      $region32: #{mhsa_forward.6} parent=27 // pred_fallthru
        _
    $region28: #{mhsa_forward.6} parent=5 // pred_fallthru
      _
    %p167 = scmp.le.s32.totalorder 1, %s17
    %p168 = scmp.lt.s32.totalorder %s17, 3
    %p169 = pnand %p167, %p168
    %p170 = pneg %p169
    // Predicated region
    $region33: #{mhsa_forward.6} parent=5 // pred_check
      _
    $region34: #{mhsa_forward.6} parent=5 // pred_check_branch
      %172 = sbr.rel (%p169) target = $region36
    $region35: #{mhsa_forward.6} parent=5 // pred_region
      %s173 = ssub.s32 %s17, 1
      %p174 = scmp.lt.s32.totalorder %s22, 1
      %s175 = scalar_select %p174, %s22, 1
      %s176 = smul.addr %s175, 8
      %s177 = scalar_lea.vmem %s1, %s176
      %p178 = pneg %p43
      %p179 = pneg %p40
      %p180 = pneg %p64
      %p181 = pneg %p61
      %p182 = pneg %p85
      %p183 = pneg %p82
      %p184 = pneg %p106
      %p185 = pneg %p103
      %p186 = pneg %p132
      %p187 = pneg %p129
      %p188 = scmp.lt.s32.totalorder %s22, 1
      %s189 = scalar_select %p188, %s22, 1
      %s190 = smul.addr %s189, 8
      %s191 = scalar_lea.vmem %s5, %s190
      %p192 = scmp.lt.s32.totalorder %s22, 1
      %s193 = scalar_select %p192, %s22, 1
      %s194 = smul.addr %s193, 8
      %s195 = scalar_lea.vmem %s1, %s194
      %p196 = scmp.lt.s32.totalorder %s22, 1
      %s197 = scalar_select %p196, %s22, 1
      %s198 = smul.addr %s197, 8
      %s199 = scalar_lea.vmem %s5, %s198
      %s200 = sld [smem:[#allocation3 + %s22]]
      %v201 = vlaneseq
      %v202 = vshrl.u32 %v201, 7
      %v203 = vlaneseq
      %v204 = vand.u32 %v203, 127
      %v205 = vstv %s200
      %vm206 = vcmp.lt.s32.totalorder %v204, %v205
      %vm207 = vcmp.le.s32.totalorder %v204, %v202
      %v208 = vadd.s32 %v202, 1
      %vm209 = vcmp.eq.s32.totalorder %v204, %v208
      %v210 = vand.u32 %v202, 1
      %vm211 = vcmp.eq.s32.totalorder %v210, 1
      %v212 = vshra.s32 %v202, 1
      %v213 = vand.u32 %v212, 1
      %vm214 = vcmp.eq.s32.totalorder %v213, 1
      %v215 = vshra.s32 %v202, 2
      %v216 = vand.u32 %v215, 1
      %vm217 = vcmp.eq.s32.totalorder %v216, 1
      %v218 = vld [vmem:[%s195] sm:$0xff]
      %v219 = vld [vmem:[%s2] sm:$0xff]
      %v220 = vld [vmem:[%s3] sm:$0x1]
      %v222 = vlaneseq
      %v223 = vshrl.u32 %v222, 7
      %v224 = vsub.s32 0, %v223
      %v225 = vrot.slane %v220, %v224
      %v227 = vadd.f32 %v218, %v225
      %v228 = vld [vmem:[%s4] sm:$0x1]
      %v230 = vlaneseq
      %v231 = vshrl.u32 %v230, 7
      %v232 = vsub.s32 0, %v231
      %v233 = vrot.slane %v228, %v232
      %v235 = vadd.f32 %v218, %v233
      %vm236 = vcmask 64512
      %v238 = vsel %vm236, %v235, 0
      %v241 = vsel %vm236, %v219, 0
      %243 = vmatprep.subr.mxu0 0.0
      %244 = vmatpush1.xpose.msra.mxu0 0.0
      %245 = vmatprep.subr.mxu0 0.0
      %246 = vmatpush1.xpose.msra.mxu0 0.0
      %247 = vmatprep.subr.mxu0 0.0
      %248 = vmatpush1.xpose.msra.mxu0 0.0
      %249 = vmatprep.subr.mxu0 0.0
      %250 = vmatpush1.xpose.msra.mxu0 0.0
      %251 = vmatprep.subr.mxu0 0.0
      %252 = vmatpush1.xpose.msra.mxu0 0.0
      %253 = vmatprep.subr.mxu0 0.0
      %254 = vmatpush1.xpose.msra.mxu0 0.0
      %255 = vmatprep.subr.mxu0 0.0
      %256 = vmatpush1.xpose.msra.mxu0 0.0
      %257 = vmatprep.subr.mxu0 0.0
      %258 = vmatpush1.xpose.msra.mxu0 0.0
      %259 = vmatprep.subr.mxu0 0.0
      %260 = vmatpush1.xpose.msra.mxu0 0.0
      %261 = vmatprep.subr.mxu0 0.0
      %262 = vmatpush1.xpose.msra.mxu0 0.0
      %263 = vmatprep.subr.mxu0 0.0
      %264 = vmatpush1.xpose.msra.mxu0 0.0
      %265 = vmatprep.subr.mxu0 0.0
      %266 = vmatpush1.xpose.msra.mxu0 0.0
      %267 = vmatprep.subr.mxu0 0.0
      %268 = vmatpush1.xpose.msra.mxu0 0.0
      %269 = vmatprep.subr.mxu0 0.0
      %270 = vmatpush1.xpose.msra.mxu0 0.0
      %271 = vmatprep.subr.mxu0 0.0
      %272 = vmatpush1.xpose.msra.mxu0 0.0
      %273 = vmatprep.subr.mxu0 0.0
      %v274 = vand.u32 %v241, 4294901760
      %275 = vmatpush1.xpose.msra.mxu0 %v274
      %276 = vmatprep.subr.mxu0 0.0
      %277 = vmatpush2.xpose.msra.mxu0 0.0
      %278 = vmatprep.subr.mxu0 0.0
      %279 = vmatpush2.xpose.msra.mxu0 0.0
      %280 = vmatprep.subr.mxu0 0.0
      %281 = vmatpush2.xpose.msra.mxu0 0.0
      %282 = vmatprep.subr.mxu0 0.0
      %283 = vmatpush2.xpose.msra.mxu0 0.0
      %284 = vmatprep.subr.mxu0 0.0
      %285 = vmatpush2.xpose.msra.mxu0 0.0
      %286 = vmatprep.subr.mxu0 0.0
      %287 = vmatpush2.xpose.msra.mxu0 0.0
      %288 = vmatprep.subr.mxu0 0.0
      %289 = vmatpush2.xpose.msra.mxu0 0.0
      %290 = vmatprep.subr.mxu0 0.0
      %291 = vmatpush2.xpose.msra.mxu0 0.0
      %292 = vmatprep.subr.mxu0 0.0
      %293 = vmatpush2.xpose.msra.mxu0 0.0
      %294 = vmatprep.subr.mxu0 0.0
      %295 = vmatpush2.xpose.msra.mxu0 0.0
      %296 = vmatprep.subr.mxu0 0.0
      %297 = vmatpush2.xpose.msra.mxu0 0.0
      %298 = vmatprep.subr.mxu0 0.0
      %299 = vmatpush2.xpose.msra.mxu0 0.0
      %300 = vmatprep.subr.mxu0 0.0
      %301 = vmatpush2.xpose.msra.mxu0 0.0
      %302 = vmatprep.subr.mxu0 0.0
      %303 = vmatpush2.xpose.msra.mxu0 0.0
      %304 = vmatprep.subr.mxu0 0.0
      %305 = vmatpush2.xpose.msra.mxu0 0.0
      %306 = vmatprep.subr.mxu0 0.0
      %307 = vmatpush2.xpose.msra.mxu0 0.0
      %308 = vmatprep.mubr.f32.mxu0 0.0
      %v309 = vand.u32 %v238, 4294901760
      %v310 = vsub.f32 %v238, %v309
      %v311 = vand.u32 %v310, 4294901760
      %v312 = vsub.f32 %v310, %v311
      %v313 = vand.u32 %v312, 4294901760
      %314 = vmatmul.mubr.f32.gmra.mxu0 %v313
      %v315 = vpop.f32.mrf.mxu0
      %v316 = vadd.f32 0.0, %v315
      %v317 = vpop.f32.mrf.mxu0
      %318 = vdwg.mxu0
      %319 = vmatprep.subr.mxu0 0.0
      %320 = vmatpush1.xpose.msra.mxu0 0.0
      %321 = vmatprep.subr.mxu0 0.0
      %322 = vmatpush1.xpose.msra.mxu0 0.0
      %323 = vmatprep.subr.mxu0 0.0
      %324 = vmatpush1.xpose.msra.mxu0 0.0
      %325 = vmatprep.subr.mxu0 0.0
      %326 = vmatpush1.xpose.msra.mxu0 0.0
      %327 = vmatprep.subr.mxu0 0.0
      %328 = vmatpush1.xpose.msra.mxu0 0.0
      %329 = vmatprep.subr.mxu0 0.0
      %330 = vmatpush1.xpose.msra.mxu0 0.0
      %331 = vmatprep.subr.mxu0 0.0
      %332 = vmatpush1.xpose.msra.mxu0 0.0
      %333 = vmatprep.subr.mxu0 0.0
      %334 = vmatpush1.xpose.msra.mxu0 0.0
      %335 = vmatprep.subr.mxu0 0.0
      %336 = vmatpush1.xpose.msra.mxu0 0.0
      %337 = vmatprep.subr.mxu0 0.0
      %338 = vmatpush1.xpose.msra.mxu0 0.0
      %339 = vmatprep.subr.mxu0 0.0
      %340 = vmatpush1.xpose.msra.mxu0 0.0
      %341 = vmatprep.subr.mxu0 0.0
      %342 = vmatpush1.xpose.msra.mxu0 0.0
      %343 = vmatprep.subr.mxu0 0.0
      %344 = vmatpush1.xpose.msra.mxu0 0.0
      %345 = vmatprep.subr.mxu0 0.0
      %346 = vmatpush1.xpose.msra.mxu0 0.0
      %347 = vmatprep.subr.mxu0 0.0
      %348 = vmatpush1.xpose.msra.mxu0 0.0
      %349 = vmatprep.subr.mxu0 0.0
      %v350 = vand.u32 %v241, 4294901760
      %v351 = vsub.f32 %v241, %v350
      %v352 = vand.u32 %v351, 4294901760
      %v353 = vsub.f32 %v351, %v352
      %v354 = vand.u32 %v353, 4294901760
      %355 = vmatpush1.xpose.msra.mxu0 %v354
      %356 = vmatprep.subr.mxu0 0.0
      %357 = vmatpush2.xpose.msra.mxu0 0.0
      %358 = vmatprep.subr.mxu0 0.0
      %359 = vmatpush2.xpose.msra.mxu0 0.0
      %360 = vmatprep.subr.mxu0 0.0
      %361 = vmatpush2.xpose.msra.mxu0 0.0
      %362 = vmatprep.subr.mxu0 0.0
      %363 = vmatpush2.xpose.msra.mxu0 0.0
      %364 = vmatprep.subr.mxu0 0.0
      %365 = vmatpush2.xpose.msra.mxu0 0.0
      %366 = vmatprep.subr.mxu0 0.0
      %367 = vmatpush2.xpose.msra.mxu0 0.0
      %368 = vmatprep.subr.mxu0 0.0
      %369 = vmatpush2.xpose.msra.mxu0 0.0
      %370 = vmatprep.subr.mxu0 0.0
      %371 = vmatpush2.xpose.msra.mxu0 0.0
      %372 = vmatprep.subr.mxu0 0.0
      %373 = vmatpush2.xpose.msra.mxu0 0.0
      %374 = vmatprep.subr.mxu0 0.0
      %375 = vmatpush2.xpose.msra.mxu0 0.0
      %376 = vmatprep.subr.mxu0 0.0
      %377 = vmatpush2.xpose.msra.mxu0 0.0
      %378 = vmatprep.subr.mxu0 0.0
      %379 = vmatpush2.xpose.msra.mxu0 0.0
      %380 = vmatprep.subr.mxu0 0.0
      %381 = vmatpush2.xpose.msra.mxu0 0.0
      %382 = vmatprep.subr.mxu0 0.0
      %383 = vmatpush2.xpose.msra.mxu0 0.0
      %384 = vmatprep.subr.mxu0 0.0
      %385 = vmatpush2.xpose.msra.mxu0 0.0
      %386 = vmatprep.subr.mxu0 0.0
      %387 = vmatpush2.xpose.msra.mxu0 0.0
      %388 = vmatprep.mubr.f32.mxu0 0.0
      %v389 = vand.u32 %v238, 4294901760
      %390 = vmatmul.mubr.f32.gmra.mxu0 %v389
      %v391 = vpop.f32.mrf.mxu0
      %v392 = vadd.f32 %v316, %v391
      %v393 = vpop.f32.mrf.mxu0
      %394 = vdwg.mxu0
      %395 = vmatprep.subr.mxu0 0.0
      %396 = vmatpush1.xpose.msra.mxu0 0.0
      %397 = vmatprep.subr.mxu0 0.0
      %398 = vmatpush1.xpose.msra.mxu0 0.0
      %399 = vmatprep.subr.mxu0 0.0
      %400 = vmatpush1.xpose.msra.mxu0 0.0
      %401 = vmatprep.subr.mxu0 0.0
      %402 = vmatpush1.xpose.msra.mxu0 0.0
      %403 = vmatprep.subr.mxu0 0.0
      %404 = vmatpush1.xpose.msra.mxu0 0.0
      %405 = vmatprep.subr.mxu0 0.0
      %406 = vmatpush1.xpose.msra.mxu0 0.0
      %407 = vmatprep.subr.mxu0 0.0
      %408 = vmatpush1.xpose.msra.mxu0 0.0
      %409 = vmatprep.subr.mxu0 0.0
      %410 = vmatpush1.xpose.msra.mxu0 0.0
      %411 = vmatprep.subr.mxu0 0.0
      %412 = vmatpush1.xpose.msra.mxu0 0.0
      %413 = vmatprep.subr.mxu0 0.0
      %414 = vmatpush1.xpose.msra.mxu0 0.0
      %415 = vmatprep.subr.mxu0 0.0
      %416 = vmatpush1.xpose.msra.mxu0 0.0
      %417 = vmatprep.subr.mxu0 0.0
      %418 = vmatpush1.xpose.msra.mxu0 0.0
      %419 = vmatprep.subr.mxu0 0.0
      %420 = vmatpush1.xpose.msra.mxu0 0.0
      %421 = vmatprep.subr.mxu0 0.0
      %422 = vmatpush1.xpose.msra.mxu0 0.0
      %423 = vmatprep.subr.mxu0 0.0
      %424 = vmatpush1.xpose.msra.mxu0 0.0
      %425 = vmatprep.subr.mxu0 0.0
      %v426 = vand.u32 %v241, 4294901760
      %v427 = vsub.f32 %v241, %v426
      %428 = vmatpush1.xpose.msra.mxu0 %v427
      %429 = vmatprep.subr.mxu0 0.0
      %430 = vmatpush2.xpose.msra.mxu0 0.0
      %431 = vmatprep.subr.mxu0 0.0
      %432 = vmatpush2.xpose.msra.mxu0 0.0
      %433 = vmatprep.subr.mxu0 0.0
      %434 = vmatpush2.xpose.msra.mxu0 0.0
      %435 = vmatprep.subr.mxu0 0.0
      %436 = vmatpush2.xpose.msra.mxu0 0.0
      %437 = vmatprep.subr.mxu0 0.0
      %438 = vmatpush2.xpose.msra.mxu0 0.0
      %439 = vmatprep.subr.mxu0 0.0
      %440 = vmatpush2.xpose.msra.mxu0 0.0
      %441 = vmatprep.subr.mxu0 0.0
      %442 = vmatpush2.xpose.msra.mxu0 0.0
      %443 = vmatprep.subr.mxu0 0.0
      %444 = vmatpush2.xpose.msra.mxu0 0.0
      %445 = vmatprep.subr.mxu0 0.0
      %446 = vmatpush2.xpose.msra.mxu0 0.0
      %447 = vmatprep.subr.mxu0 0.0
      %448 = vmatpush2.xpose.msra.mxu0 0.0
      %449 = vmatprep.subr.mxu0 0.0
      %450 = vmatpush2.xpose.msra.mxu0 0.0
      %451 = vmatprep.subr.mxu0 0.0
      %452 = vmatpush2.xpose.msra.mxu0 0.0
      %453 = vmatprep.subr.mxu0 0.0
      %454 = vmatpush2.xpose.msra.mxu0 0.0
      %455 = vmatprep.subr.mxu0 0.0
      %456 = vmatpush2.xpose.msra.mxu0 0.0
      %457 = vmatprep.subr.mxu0 0.0
      %458 = vmatpush2.xpose.msra.mxu0 0.0
      %459 = vmatprep.subr.mxu0 0.0
      %460 = vmatpush2.xpose.msra.mxu0 0.0
      %461 = vmatprep.mubr.f32.mxu0 0.0
      %v462 = vand.u32 %v238, 4294901760
      %v463 = vsub.f32 %v238, %v462
      %464 = vmatmul.mubr.f32.gmra.mxu0 %v463
      %v465 = vpop.f32.mrf.mxu0
      %v466 = vadd.f32 %v392, %v465
      %v467 = vpop.f32.mrf.mxu0
      %468 = vdwg.mxu0
      %469 = vmatprep.subr.mxu0 0.0
      %470 = vmatpush1.xpose.msra.mxu0 0.0
      %471 = vmatprep.subr.mxu0 0.0
      %472 = vmatpush1.xpose.msra.mxu0 0.0
      %473 = vmatprep.subr.mxu0 0.0
      %474 = vmatpush1.xpose.msra.mxu0 0.0
      %475 = vmatprep.subr.mxu0 0.0
      %476 = vmatpush1.xpose.msra.mxu0 0.0
      %477 = vmatprep.subr.mxu0 0.0
      %478 = vmatpush1.xpose.msra.mxu0 0.0
      %479 = vmatprep.subr.mxu0 0.0
      %480 = vmatpush1.xpose.msra.mxu0 0.0
      %481 = vmatprep.subr.mxu0 0.0
      %482 = vmatpush1.xpose.msra.mxu0 0.0
      %483 = vmatprep.subr.mxu0 0.0
      %484 = vmatpush1.xpose.msra.mxu0 0.0
      %485 = vmatprep.subr.mxu0 0.0
      %486 = vmatpush1.xpose.msra.mxu0 0.0
      %487 = vmatprep.subr.mxu0 0.0
      %488 = vmatpush1.xpose.msra.mxu0 0.0
      %489 = vmatprep.subr.mxu0 0.0
      %490 = vmatpush1.xpose.msra.mxu0 0.0
      %491 = vmatprep.subr.mxu0 0.0
      %492 = vmatpush1.xpose.msra.mxu0 0.0
      %493 = vmatprep.subr.mxu0 0.0
      %494 = vmatpush1.xpose.msra.mxu0 0.0
      %495 = vmatprep.subr.mxu0 0.0
      %496 = vmatpush1.xpose.msra.mxu0 0.0
      %497 = vmatprep.subr.mxu0 0.0
      %498 = vmatpush1.xpose.msra.mxu0 0.0
      %499 = vmatprep.subr.mxu0 0.0
      %v500 = vand.u32 %v241, 4294901760
      %501 = vmatpush1.xpose.msra.mxu0 %v500
      %502 = vmatprep.subr.mxu0 0.0
      %503 = vmatpush2.xpose.msra.mxu0 0.0
      %504 = vmatprep.subr.mxu0 0.0
      %505 = vmatpush2.xpose.msra.mxu0 0.0
      %506 = vmatprep.subr.mxu0 0.0
      %507 = vmatpush2.xpose.msra.mxu0 0.0
      %508 = vmatprep.subr.mxu0 0.0
      %509 = vmatpush2.xpose.msra.mxu0 0.0
      %510 = vmatprep.subr.mxu0 0.0
      %511 = vmatpush2.xpose.msra.mxu0 0.0
      %512 = vmatprep.subr.mxu0 0.0
      %513 = vmatpush2.xpose.msra.mxu0 0.0
      %514 = vmatprep.subr.mxu0 0.0
      %515 = vmatpush2.xpose.msra.mxu0 0.0
      %516 = vmatprep.subr.mxu0 0.0
      %517 = vmatpush2.xpose.msra.mxu0 0.0
      %518 = vmatprep.subr.mxu0 0.0
      %519 = vmatpush2.xpose.msra.mxu0 0.0
      %520 = vmatprep.subr.mxu0 0.0
      %521 = vmatpush2.xpose.msra.mxu0 0.0
      %522 = vmatprep.subr.mxu0 0.0
      %523 = vmatpush2.xpose.msra.mxu0 0.0
      %524 = vmatprep.subr.mxu0 0.0
      %525 = vmatpush2.xpose.msra.mxu0 0.0
      %526 = vmatprep.subr.mxu0 0.0
      %527 = vmatpush2.xpose.msra.mxu0 0.0
      %528 = vmatprep.subr.mxu0 0.0
      %529 = vmatpush2.xpose.msra.mxu0 0.0
      %530 = vmatprep.subr.mxu0 0.0
      %531 = vmatpush2.xpose.msra.mxu0 0.0
      %532 = vmatprep.subr.mxu0 0.0
      %533 = vmatpush2.xpose.msra.mxu0 0.0
      %534 = vmatprep.mubr.f32.mxu0 0.0
      %v535 = vand.u32 %v238, 4294901760
      %v536 = vsub.f32 %v238, %v535
      %v537 = vand.u32 %v536, 4294901760
      %538 = vmatmul.mubr.f32.gmra.mxu0 %v537
      %v539 = vpop.f32.mrf.mxu0
      %v540 = vadd.f32 %v466, %v539
      %v541 = vpop.f32.mrf.mxu0
      %542 = vdwg.mxu0
      %543 = vmatprep.subr.mxu0 0.0
      %544 = vmatpush1.xpose.msra.mxu0 0.0
      %545 = vmatprep.subr.mxu0 0.0
      %546 = vmatpush1.xpose.msra.mxu0 0.0
      %547 = vmatprep.subr.mxu0 0.0
      %548 = vmatpush1.xpose.msra.mxu0 0.0
      %549 = vmatprep.subr.mxu0 0.0
      %550 = vmatpush1.xpose.msra.mxu0 0.0
      %551 = vmatprep.subr.mxu0 0.0
      %552 = vmatpush1.xpose.msra.mxu0 0.0
      %553 = vmatprep.subr.mxu0 0.0
      %554 = vmatpush1.xpose.msra.mxu0 0.0
      %555 = vmatprep.subr.mxu0 0.0
      %556 = vmatpush1.xpose.msra.mxu0 0.0
      %557 = vmatprep.subr.mxu0 0.0
      %558 = vmatpush1.xpose.msra.mxu0 0.0
      %559 = vmatprep.subr.mxu0 0.0
      %560 = vmatpush1.xpose.msra.mxu0 0.0
      %561 = vmatprep.subr.mxu0 0.0
      %562 = vmatpush1.xpose.msra.mxu0 0.0
      %563 = vmatprep.subr.mxu0 0.0
      %564 = vmatpush1.xpose.msra.mxu0 0.0
      %565 = vmatprep.subr.mxu0 0.0
      %566 = vmatpush1.xpose.msra.mxu0 0.0
      %567 = vmatprep.subr.mxu0 0.0
      %568 = vmatpush1.xpose.msra.mxu0 0.0
      %569 = vmatprep.subr.mxu0 0.0
      %570 = vmatpush1.xpose.msra.mxu0 0.0
      %571 = vmatprep.subr.mxu0 0.0
      %572 = vmatpush1.xpose.msra.mxu0 0.0
      %573 = vmatprep.subr.mxu0 0.0
      %v574 = vand.u32 %v241, 4294901760
      %v575 = vsub.f32 %v241, %v574
      %v576 = vand.u32 %v575, 4294901760
      %577 = vmatpush1.xpose.msra.mxu0 %v576
      %578 = vmatprep.subr.mxu0 0.0
      %579 = vmatpush2.xpose.msra.mxu0 0.0
      %580 = vmatprep.subr.mxu0 0.0
      %581 = vmatpush2.xpose.msra.mxu0 0.0
      %582 = vmatprep.subr.mxu0 0.0
      %583 = vmatpush2.xpose.msra.mxu0 0.0
      %584 = vmatprep.subr.mxu0 0.0
      %585 = vmatpush2.xpose.msra.mxu0 0.0
      %586 = vmatprep.subr.mxu0 0.0
      %587 = vmatpush2.xpose.msra.mxu0 0.0
      %588 = vmatprep.subr.mxu0 0.0
      %589 = vmatpush2.xpose.msra.mxu0 0.0
      %590 = vmatprep.subr.mxu0 0.0
      %591 = vmatpush2.xpose.msra.mxu0 0.0
      %592 = vmatprep.subr.mxu0 0.0
      %593 = vmatpush2.xpose.msra.mxu0 0.0
      %594 = vmatprep.subr.mxu0 0.0
      %595 = vmatpush2.xpose.msra.mxu0 0.0
      %596 = vmatprep.subr.mxu0 0.0
      %597 = vmatpush2.xpose.msra.mxu0 0.0
      %598 = vmatprep.subr.mxu0 0.0
      %599 = vmatpush2.xpose.msra.mxu0 0.0
      %600 = vmatprep.subr.mxu0 0.0
      %601 = vmatpush2.xpose.msra.mxu0 0.0
      %602 = vmatprep.subr.mxu0 0.0
      %603 = vmatpush2.xpose.msra.mxu0 0.0
      %604 = vmatprep.subr.mxu0 0.0
      %605 = vmatpush2.xpose.msra.mxu0 0.0
      %606 = vmatprep.subr.mxu0 0.0
      %607 = vmatpush2.xpose.msra.mxu0 0.0
      %608 = vmatprep.subr.mxu0 0.0
      %609 = vmatpush2.xpose.msra.mxu0 0.0
      %610 = vmatprep.mubr.f32.mxu0 0.0
      %v611 = vand.u32 %v238, 4294901760
      %612 = vmatmul.mubr.f32.gmra.mxu0 %v611
      %v613 = vpop.f32.mrf.mxu0
      %v614 = vadd.f32 %v540, %v613
      %v615 = vpop.f32.mrf.mxu0
      %616 = vdwg.mxu0
      %617 = vmatprep.subr.mxu0 0.0
      %618 = vmatpush1.xpose.msra.mxu0 0.0
      %619 = vmatprep.subr.mxu0 0.0
      %620 = vmatpush1.xpose.msra.mxu0 0.0
      %621 = vmatprep.subr.mxu0 0.0
      %622 = vmatpush1.xpose.msra.mxu0 0.0
      %623 = vmatprep.subr.mxu0 0.0
      %624 = vmatpush1.xpose.msra.mxu0 0.0
      %625 = vmatprep.subr.mxu0 0.0
      %626 = vmatpush1.xpose.msra.mxu0 0.0
      %627 = vmatprep.subr.mxu0 0.0
      %628 = vmatpush1.xpose.msra.mxu0 0.0
      %629 = vmatprep.subr.mxu0 0.0
      %630 = vmatpush1.xpose.msra.mxu0 0.0
      %631 = vmatprep.subr.mxu0 0.0
      %632 = vmatpush1.xpose.msra.mxu0 0.0
      %633 = vmatprep.subr.mxu0 0.0
      %634 = vmatpush1.xpose.msra.mxu0 0.0
      %635 = vmatprep.subr.mxu0 0.0
      %636 = vmatpush1.xpose.msra.mxu0 0.0
      %637 = vmatprep.subr.mxu0 0.0
      %638 = vmatpush1.xpose.msra.mxu0 0.0
      %639 = vmatprep.subr.mxu0 0.0
      %640 = vmatpush1.xpose.msra.mxu0 0.0
      %641 = vmatprep.subr.mxu0 0.0
      %642 = vmatpush1.xpose.msra.mxu0 0.0
      %643 = vmatprep.subr.mxu0 0.0
      %644 = vmatpush1.xpose.msra.mxu0 0.0
      %645 = vmatprep.subr.mxu0 0.0
      %646 = vmatpush1.xpose.msra.mxu0 0.0
      %647 = vmatprep.subr.mxu0 0.0
      %v648 = vand.u32 %v241, 4294901760
      %649 = vmatpush1.xpose.msra.mxu0 %v648
      %650 = vmatprep.subr.mxu0 0.0
      %651 = vmatpush2.xpose.msra.mxu0 0.0
      %652 = vmatprep.subr.mxu0 0.0
      %653 = vmatpush2.xpose.msra.mxu0 0.0
      %654 = vmatprep.subr.mxu0 0.0
      %655 = vmatpush2.xpose.msra.mxu0 0.0
      %656 = vmatprep.subr.mxu0 0.0
      %657 = vmatpush2.xpose.msra.mxu0 0.0
      %658 = vmatprep.subr.mxu0 0.0
      %659 = vmatpush2.xpose.msra.mxu0 0.0
      %660 = vmatprep.subr.mxu0 0.0
      %661 = vmatpush2.xpose.msra.mxu0 0.0
      %662 = vmatprep.subr.mxu0 0.0
      %663 = vmatpush2.xpose.msra.mxu0 0.0
      %664 = vmatprep.subr.mxu0 0.0
      %665 = vmatpush2.xpose.msra.mxu0 0.0
      %666 = vmatprep.subr.mxu0 0.0
      %667 = vmatpush2.xpose.msra.mxu0 0.0
      %668 = vmatprep.subr.mxu0 0.0
      %669 = vmatpush2.xpose.msra.mxu0 0.0
      %670 = vmatprep.subr.mxu0 0.0
      %671 = vmatpush2.xpose.msra.mxu0 0.0
      %672 = vmatprep.subr.mxu0 0.0
      %673 = vmatpush2.xpose.msra.mxu0 0.0
      %674 = vmatprep.subr.mxu0 0.0
      %675 = vmatpush2.xpose.msra.mxu0 0.0
      %676 = vmatprep.subr.mxu0 0.0
      %677 = vmatpush2.xpose.msra.mxu0 0.0
      %678 = vmatprep.subr.mxu0 0.0
      %679 = vmatpush2.xpose.msra.mxu0 0.0
      %680 = vmatprep.subr.mxu0 0.0
      %681 = vmatpush2.xpose.msra.mxu0 0.0
      %682 = vmatprep.mubr.f32.mxu0 0.0
      %v683 = vand.u32 %v238, 4294901760
      %684 = vmatmul.mubr.f32.gmra.mxu0 %v683
      %v685 = vpop.f32.mrf.mxu0
      %v686 = vadd.f32 %v614, %v685
      %v687 = vpop.f32.mrf.mxu0
      %688 = vdwg.mxu0
      %690 = vrot.lane.b32.xlu0 %v686, 121
      %v691 = vpop.permute.xlu0 %690
      %693 = vrot.lane.b32.xlu0 %v686, 1
      %v694 = vpop.permute.xlu0 %693
      %vm696 = vcmask 7168
      %v697 = vsel %vm696, %v691, %v694
      %699 = vrot.lane.b32.xlu0 %v697, 121
      %v700 = vpop.permute.xlu0 %699
      %702 = vrot.lane.b32.xlu0 %v697, 1
      %v703 = vpop.permute.xlu0 %702
      %v705 = vsel %vm696, %v700, %v703
      %v706 = vsel %vm211, %v705, %v697
      %708 = vrot.lane.b32.xlu0 %v706, 122
      %v709 = vpop.permute.xlu0 %708
      %711 = vrot.lane.b32.xlu0 %v706, 2
      %v712 = vpop.permute.xlu0 %711
      %vm714 = vcmask 15360
      %v715 = vsel %vm714, %v709, %v712
      %v716 = vsel %vm214, %v715, %v706
      %718 = vrot.lane.b32.xlu0 %v716, 124
      %v719 = vpop.permute.xlu0 %718
      %721 = vrot.lane.b32.xlu0 %v716, 4
      %v722 = vpop.permute.xlu0 %721
      %vm724 = vcmask 31744
      %v725 = vsel %vm724, %v719, %v722
      %v726 = vsel %vm217, %v725, %v716
      %v728 = vrot.slane %v726, 1
      %vm730 = vcmask 1046528
      %v731 = vsel %vm730, %v728, %v728
      %v732 = vsel %vm209, 0.0, %v731
      %v733 = vsel %vm207, %v726, %v732
      %735 = vrot.lane.b32.xlu0 %v218, 112
      %v736 = vpop.permute.xlu0 %735
      %v738 = vsel %vm236, %v227, 0
      %v740 = vsel %vm236, %v736, 0
      %742 = vmatprep.subr.mxu0 0.0
      %743 = vmatpush1.xpose.msra.mxu0 0.0
      %744 = vmatprep.subr.mxu0 0.0
      %745 = vmatpush1.xpose.msra.mxu0 0.0
      %746 = vmatprep.subr.mxu0 0.0
      %747 = vmatpush1.xpose.msra.mxu0 0.0
      %748 = vmatprep.subr.mxu0 0.0
      %749 = vmatpush1.xpose.msra.mxu0 0.0
      %750 = vmatprep.subr.mxu0 0.0
      %751 = vmatpush1.xpose.msra.mxu0 0.0
      %752 = vmatprep.subr.mxu0 0.0
      %753 = vmatpush1.xpose.msra.mxu0 0.0
      %754 = vmatprep.subr.mxu0 0.0
      %755 = vmatpush1.xpose.msra.mxu0 0.0
      %756 = vmatprep.subr.mxu0 0.0
      %757 = vmatpush1.xpose.msra.mxu0 0.0
      %758 = vmatprep.subr.mxu0 0.0
      %759 = vmatpush1.xpose.msra.mxu0 0.0
      %760 = vmatprep.subr.mxu0 0.0
      %761 = vmatpush1.xpose.msra.mxu0 0.0
      %762 = vmatprep.subr.mxu0 0.0
      %763 = vmatpush1.xpose.msra.mxu0 0.0
      %764 = vmatprep.subr.mxu0 0.0
      %765 = vmatpush1.xpose.msra.mxu0 0.0
      %766 = vmatprep.subr.mxu0 0.0
      %767 = vmatpush1.xpose.msra.mxu0 0.0
      %768 = vmatprep.subr.mxu0 0.0
      %769 = vmatpush1.xpose.msra.mxu0 0.0
      %770 = vmatprep.subr.mxu0 0.0
      %771 = vmatpush1.xpose.msra.mxu0 0.0
      %772 = vmatprep.subr.mxu0 0.0
      %v773 = vand.u32 %v740, 4294901760
      %774 = vmatpush1.xpose.msra.mxu0 %v773
      %775 = vmatprep.subr.mxu0 0.0
      %776 = vmatpush2.xpose.msra.mxu0 0.0
      %777 = vmatprep.subr.mxu0 0.0
      %778 = vmatpush2.xpose.msra.mxu0 0.0
      %779 = vmatprep.subr.mxu0 0.0
      %780 = vmatpush2.xpose.msra.mxu0 0.0
      %781 = vmatprep.subr.mxu0 0.0
      %782 = vmatpush2.xpose.msra.mxu0 0.0
      %783 = vmatprep.subr.mxu0 0.0
      %784 = vmatpush2.xpose.msra.mxu0 0.0
      %785 = vmatprep.subr.mxu0 0.0
      %786 = vmatpush2.xpose.msra.mxu0 0.0
      %787 = vmatprep.subr.mxu0 0.0
      %788 = vmatpush2.xpose.msra.mxu0 0.0
      %789 = vmatprep.subr.mxu0 0.0
      %790 = vmatpush2.xpose.msra.mxu0 0.0
      %791 = vmatprep.subr.mxu0 0.0
      %792 = vmatpush2.xpose.msra.mxu0 0.0
      %793 = vmatprep.subr.mxu0 0.0
      %794 = vmatpush2.xpose.msra.mxu0 0.0
      %795 = vmatprep.subr.mxu0 0.0
      %796 = vmatpush2.xpose.msra.mxu0 0.0
      %797 = vmatprep.subr.mxu0 0.0
      %798 = vmatpush2.xpose.msra.mxu0 0.0
      %799 = vmatprep.subr.mxu0 0.0
      %800 = vmatpush2.xpose.msra.mxu0 0.0
      %801 = vmatprep.subr.mxu0 0.0
      %802 = vmatpush2.xpose.msra.mxu0 0.0
      %803 = vmatprep.subr.mxu0 0.0
      %804 = vmatpush2.xpose.msra.mxu0 0.0
      %805 = vmatprep.subr.mxu0 0.0
      %806 = vmatpush2.xpose.msra.mxu0 0.0
      %807 = vmatprep.mubr.f32.mxu0 0.0
      %v808 = vand.u32 %v738, 4294901760
      %v809 = vsub.f32 %v738, %v808
      %v810 = vand.u32 %v809, 4294901760
      %v811 = vsub.f32 %v809, %v810
      %v812 = vand.u32 %v811, 4294901760
      %813 = vmatmul.mubr.f32.gmra.mxu0 %v812
      %v814 = vpop.f32.mrf.mxu0
      %v815 = vadd.f32 %v733, %v814
      %v816 = vpop.f32.mrf.mxu0
      %817 = vdwg.mxu0
      %818 = vmatprep.subr.mxu0 0.0
      %819 = vmatpush1.xpose.msra.mxu0 0.0
      %820 = vmatprep.subr.mxu0 0.0
      %821 = vmatpush1.xpose.msra.mxu0 0.0
      %822 = vmatprep.subr.mxu0 0.0
      %823 = vmatpush1.xpose.msra.mxu0 0.0
      %824 = vmatprep.subr.mxu0 0.0
      %825 = vmatpush1.xpose.msra.mxu0 0.0
      %826 = vmatprep.subr.mxu0 0.0
      %827 = vmatpush1.xpose.msra.mxu0 0.0
      %828 = vmatprep.subr.mxu0 0.0
      %829 = vmatpush1.xpose.msra.mxu0 0.0
      %830 = vmatprep.subr.mxu0 0.0
      %831 = vmatpush1.xpose.msra.mxu0 0.0
      %832 = vmatprep.subr.mxu0 0.0
      %833 = vmatpush1.xpose.msra.mxu0 0.0
      %834 = vmatprep.subr.mxu0 0.0
      %835 = vmatpush1.xpose.msra.mxu0 0.0
      %836 = vmatprep.subr.mxu0 0.0
      %837 = vmatpush1.xpose.msra.mxu0 0.0
      %838 = vmatprep.subr.mxu0 0.0
      %839 = vmatpush1.xpose.msra.mxu0 0.0
      %840 = vmatprep.subr.mxu0 0.0
      %841 = vmatpush1.xpose.msra.mxu0 0.0
      %842 = vmatprep.subr.mxu0 0.0
      %843 = vmatpush1.xpose.msra.mxu0 0.0
      %844 = vmatprep.subr.mxu0 0.0
      %845 = vmatpush1.xpose.msra.mxu0 0.0
      %846 = vmatprep.subr.mxu0 0.0
      %847 = vmatpush1.xpose.msra.mxu0 0.0
      %848 = vmatprep.subr.mxu0 0.0
      %v849 = vand.u32 %v740, 4294901760
      %v850 = vsub.f32 %v740, %v849
      %v851 = vand.u32 %v850, 4294901760
      %v852 = vsub.f32 %v850, %v851
      %v853 = vand.u32 %v852, 4294901760
      %854 = vmatpush1.xpose.msra.mxu0 %v853
      %855 = vmatprep.subr.mxu0 0.0
      %856 = vmatpush2.xpose.msra.mxu0 0.0
      %857 = vmatprep.subr.mxu0 0.0
      %858 = vmatpush2.xpose.msra.mxu0 0.0
      %859 = vmatprep.subr.mxu0 0.0
      %860 = vmatpush2.xpose.msra.mxu0 0.0
      %861 = vmatprep.subr.mxu0 0.0
      %862 = vmatpush2.xpose.msra.mxu0 0.0
      %863 = vmatprep.subr.mxu0 0.0
      %864 = vmatpush2.xpose.msra.mxu0 0.0
      %865 = vmatprep.subr.mxu0 0.0
      %866 = vmatpush2.xpose.msra.mxu0 0.0
      %867 = vmatprep.subr.mxu0 0.0
      %868 = vmatpush2.xpose.msra.mxu0 0.0
      %869 = vmatprep.subr.mxu0 0.0
      %870 = vmatpush2.xpose.msra.mxu0 0.0
      %871 = vmatprep.subr.mxu0 0.0
      %872 = vmatpush2.xpose.msra.mxu0 0.0
      %873 = vmatprep.subr.mxu0 0.0
      %874 = vmatpush2.xpose.msra.mxu0 0.0
      %875 = vmatprep.subr.mxu0 0.0
      %876 = vmatpush2.xpose.msra.mxu0 0.0
      %877 = vmatprep.subr.mxu0 0.0
      %878 = vmatpush2.xpose.msra.mxu0 0.0
      %879 = vmatprep.subr.mxu0 0.0
      %880 = vmatpush2.xpose.msra.mxu0 0.0
      %881 = vmatprep.subr.mxu0 0.0
      %882 = vmatpush2.xpose.msra.mxu0 0.0
      %883 = vmatprep.subr.mxu0 0.0
      %884 = vmatpush2.xpose.msra.mxu0 0.0
      %885 = vmatprep.subr.mxu0 0.0
      %886 = vmatpush2.xpose.msra.mxu0 0.0
      %887 = vmatprep.mubr.f32.mxu0 0.0
      %v888 = vand.u32 %v738, 4294901760
      %889 = vmatmul.mubr.f32.gmra.mxu0 %v888
      %v890 = vpop.f32.mrf.mxu0
      %v891 = vadd.f32 %v815, %v890
      %v892 = vpop.f32.mrf.mxu0
      %893 = vdwg.mxu0
      %894 = vmatprep.subr.mxu0 0.0
      %895 = vmatpush1.xpose.msra.mxu0 0.0
      %896 = vmatprep.subr.mxu0 0.0
      %897 = vmatpush1.xpose.msra.mxu0 0.0
      %898 = vmatprep.subr.mxu0 0.0
      %899 = vmatpush1.xpose.msra.mxu0 0.0
      %900 = vmatprep.subr.mxu0 0.0
      %901 = vmatpush1.xpose.msra.mxu0 0.0
      %902 = vmatprep.subr.mxu0 0.0
      %903 = vmatpush1.xpose.msra.mxu0 0.0
      %904 = vmatprep.subr.mxu0 0.0
      %905 = vmatpush1.xpose.msra.mxu0 0.0
      %906 = vmatprep.subr.mxu0 0.0
      %907 = vmatpush1.xpose.msra.mxu0 0.0
      %908 = vmatprep.subr.mxu0 0.0
      %909 = vmatpush1.xpose.msra.mxu0 0.0
      %910 = vmatprep.subr.mxu0 0.0
      %911 = vmatpush1.xpose.msra.mxu0 0.0
      %912 = vmatprep.subr.mxu0 0.0
      %913 = vmatpush1.xpose.msra.mxu0 0.0
      %914 = vmatprep.subr.mxu0 0.0
      %915 = vmatpush1.xpose.msra.mxu0 0.0
      %916 = vmatprep.subr.mxu0 0.0
      %917 = vmatpush1.xpose.msra.mxu0 0.0
      %918 = vmatprep.subr.mxu0 0.0
      %919 = vmatpush1.xpose.msra.mxu0 0.0
      %920 = vmatprep.subr.mxu0 0.0
      %921 = vmatpush1.xpose.msra.mxu0 0.0
      %922 = vmatprep.subr.mxu0 0.0
      %923 = vmatpush1.xpose.msra.mxu0 0.0
      %924 = vmatprep.subr.mxu0 0.0
      %v925 = vand.u32 %v740, 4294901760
      %v926 = vsub.f32 %v740, %v925
      %927 = vmatpush1.xpose.msra.mxu0 %v926
      %928 = vmatprep.subr.mxu0 0.0
      %929 = vmatpush2.xpose.msra.mxu0 0.0
      %930 = vmatprep.subr.mxu0 0.0
      %931 = vmatpush2.xpose.msra.mxu0 0.0
      %932 = vmatprep.subr.mxu0 0.0
      %933 = vmatpush2.xpose.msra.mxu0 0.0
      %934 = vmatprep.subr.mxu0 0.0
      %935 = vmatpush2.xpose.msra.mxu0 0.0
      %936 = vmatprep.subr.mxu0 0.0
      %937 = vmatpush2.xpose.msra.mxu0 0.0
      %938 = vmatprep.subr.mxu0 0.0
      %939 = vmatpush2.xpose.msra.mxu0 0.0
      %940 = vmatprep.subr.mxu0 0.0
      %941 = vmatpush2.xpose.msra.mxu0 0.0
      %942 = vmatprep.subr.mxu0 0.0
      %943 = vmatpush2.xpose.msra.mxu0 0.0
      %944 = vmatprep.subr.mxu0 0.0
      %945 = vmatpush2.xpose.msra.mxu0 0.0
      %946 = vmatprep.subr.mxu0 0.0
      %947 = vmatpush2.xpose.msra.mxu0 0.0
      %948 = vmatprep.subr.mxu0 0.0
      %949 = vmatpush2.xpose.msra.mxu0 0.0
      %950 = vmatprep.subr.mxu0 0.0
      %951 = vmatpush2.xpose.msra.mxu0 0.0
      %952 = vmatprep.subr.mxu0 0.0
      %953 = vmatpush2.xpose.msra.mxu0 0.0
      %954 = vmatprep.subr.mxu0 0.0
      %955 = vmatpush2.xpose.msra.mxu0 0.0
      %956 = vmatprep.subr.mxu0 0.0
      %957 = vmatpush2.xpose.msra.mxu0 0.0
      %958 = vmatprep.subr.mxu0 0.0
      %959 = vmatpush2.xpose.msra.mxu0 0.0
      %960 = vmatprep.mubr.f32.mxu0 0.0
      %v961 = vand.u32 %v738, 4294901760
      %v962 = vsub.f32 %v738, %v961
      %963 = vmatmul.mubr.f32.gmra.mxu0 %v962
      %v964 = vpop.f32.mrf.mxu0
      %v965 = vadd.f32 %v891, %v964
      %v966 = vpop.f32.mrf.mxu0
      %967 = vdwg.mxu0
      %968 = vmatprep.subr.mxu0 0.0
      %969 = vmatpush1.xpose.msra.mxu0 0.0
      %970 = vmatprep.subr.mxu0 0.0
      %971 = vmatpush1.xpose.msra.mxu0 0.0
      %972 = vmatprep.subr.mxu0 0.0
      %973 = vmatpush1.xpose.msra.mxu0 0.0
      %974 = vmatprep.subr.mxu0 0.0
      %975 = vmatpush1.xpose.msra.mxu0 0.0
      %976 = vmatprep.subr.mxu0 0.0
      %977 = vmatpush1.xpose.msra.mxu0 0.0
      %978 = vmatprep.subr.mxu0 0.0
      %979 = vmatpush1.xpose.msra.mxu0 0.0
      %980 = vmatprep.subr.mxu0 0.0
      %981 = vmatpush1.xpose.msra.mxu0 0.0
      %982 = vmatprep.subr.mxu0 0.0
      %983 = vmatpush1.xpose.msra.mxu0 0.0
      %984 = vmatprep.subr.mxu0 0.0
      %985 = vmatpush1.xpose.msra.mxu0 0.0
      %986 = vmatprep.subr.mxu0 0.0
      %987 = vmatpush1.xpose.msra.mxu0 0.0
      %988 = vmatprep.subr.mxu0 0.0
      %989 = vmatpush1.xpose.msra.mxu0 0.0
      %990 = vmatprep.subr.mxu0 0.0
      %991 = vmatpush1.xpose.msra.mxu0 0.0
      %992 = vmatprep.subr.mxu0 0.0
      %993 = vmatpush1.xpose.msra.mxu0 0.0
      %994 = vmatprep.subr.mxu0 0.0
      %995 = vmatpush1.xpose.msra.mxu0 0.0
      %996 = vmatprep.subr.mxu0 0.0
      %997 = vmatpush1.xpose.msra.mxu0 0.0
      %998 = vmatprep.subr.mxu0 0.0
      %v999 = vand.u32 %v740, 4294901760
      %1000 = vmatpush1.xpose.msra.mxu0 %v999
      %1001 = vmatprep.subr.mxu0 0.0
      %1002 = vmatpush2.xpose.msra.mxu0 0.0
      %1003 = vmatprep.subr.mxu0 0.0
      %1004 = vmatpush2.xpose.msra.mxu0 0.0
      %1005 = vmatprep.subr.mxu0 0.0
      %1006 = vmatpush2.xpose.msra.mxu0 0.0
      %1007 = vmatprep.subr.mxu0 0.0
      %1008 = vmatpush2.xpose.msra.mxu0 0.0
      %1009 = vmatprep.subr.mxu0 0.0
      %1010 = vmatpush2.xpose.msra.mxu0 0.0
      %1011 = vmatprep.subr.mxu0 0.0
      %1012 = vmatpush2.xpose.msra.mxu0 0.0
      %1013 = vmatprep.subr.mxu0 0.0
      %1014 = vmatpush2.xpose.msra.mxu0 0.0
      %1015 = vmatprep.subr.mxu0 0.0
      %1016 = vmatpush2.xpose.msra.mxu0 0.0
      %1017 = vmatprep.subr.mxu0 0.0
      %1018 = vmatpush2.xpose.msra.mxu0 0.0
      %1019 = vmatprep.subr.mxu0 0.0
      %1020 = vmatpush2.xpose.msra.mxu0 0.0
      %1021 = vmatprep.subr.mxu0 0.0
      %1022 = vmatpush2.xpose.msra.mxu0 0.0
      %1023 = vmatprep.subr.mxu0 0.0
      %1024 = vmatpush2.xpose.msra.mxu0 0.0
      %1025 = vmatprep.subr.mxu0 0.0
      %1026 = vmatpush2.xpose.msra.mxu0 0.0
      %1027 = vmatprep.subr.mxu0 0.0
      %1028 = vmatpush2.xpose.msra.mxu0 0.0
      %1029 = vmatprep.subr.mxu0 0.0
      %1030 = vmatpush2.xpose.msra.mxu0 0.0
      %1031 = vmatprep.subr.mxu0 0.0
      %1032 = vmatpush2.xpose.msra.mxu0 0.0
      %1033 = vmatprep.mubr.f32.mxu0 0.0
      %v1034 = vand.u32 %v738, 4294901760
      %v1035 = vsub.f32 %v738, %v1034
      %v1036 = vand.u32 %v1035, 4294901760
      %1037 = vmatmul.mubr.f32.gmra.mxu0 %v1036
      %v1038 = vpop.f32.mrf.mxu0
      %v1039 = vadd.f32 %v965, %v1038
      %v1040 = vpop.f32.mrf.mxu0
      %1041 = vdwg.mxu0
      %1042 = vmatprep.subr.mxu0 0.0
      %1043 = vmatpush1.xpose.msra.mxu0 0.0
      %1044 = vmatprep.subr.mxu0 0.0
      %1045 = vmatpush1.xpose.msra.mxu0 0.0
      %1046 = vmatprep.subr.mxu0 0.0
      %1047 = vmatpush1.xpose.msra.mxu0 0.0
      %1048 = vmatprep.subr.mxu0 0.0
      %1049 = vmatpush1.xpose.msra.mxu0 0.0
      %1050 = vmatprep.subr.mxu0 0.0
      %1051 = vmatpush1.xpose.msra.mxu0 0.0
      %1052 = vmatprep.subr.mxu0 0.0
      %1053 = vmatpush1.xpose.msra.mxu0 0.0
      %1054 = vmatprep.subr.mxu0 0.0
      %1055 = vmatpush1.xpose.msra.mxu0 0.0
      %1056 = vmatprep.subr.mxu0 0.0
      %1057 = vmatpush1.xpose.msra.mxu0 0.0
      %1058 = vmatprep.subr.mxu0 0.0
      %1059 = vmatpush1.xpose.msra.mxu0 0.0
      %1060 = vmatprep.subr.mxu0 0.0
      %1061 = vmatpush1.xpose.msra.mxu0 0.0
      %1062 = vmatprep.subr.mxu0 0.0
      %1063 = vmatpush1.xpose.msra.mxu0 0.0
      %1064 = vmatprep.subr.mxu0 0.0
      %1065 = vmatpush1.xpose.msra.mxu0 0.0
      %1066 = vmatprep.subr.mxu0 0.0
      %1067 = vmatpush1.xpose.msra.mxu0 0.0
      %1068 = vmatprep.subr.mxu0 0.0
      %1069 = vmatpush1.xpose.msra.mxu0 0.0
      %1070 = vmatprep.subr.mxu0 0.0
      %1071 = vmatpush1.xpose.msra.mxu0 0.0
      %1072 = vmatprep.subr.mxu0 0.0
      %v1073 = vand.u32 %v740, 4294901760
      %v1074 = vsub.f32 %v740, %v1073
      %v1075 = vand.u32 %v1074, 4294901760
      %1076 = vmatpush1.xpose.msra.mxu0 %v1075
      %1077 = vmatprep.subr.mxu0 0.0
      %1078 = vmatpush2.xpose.msra.mxu0 0.0
      %1079 = vmatprep.subr.mxu0 0.0
      %1080 = vmatpush2.xpose.msra.mxu0 0.0
      %1081 = vmatprep.subr.mxu0 0.0
      %1082 = vmatpush2.xpose.msra.mxu0 0.0
      %1083 = vmatprep.subr.mxu0 0.0
      %1084 = vmatpush2.xpose.msra.mxu0 0.0
      %1085 = vmatprep.subr.mxu0 0.0
      %1086 = vmatpush2.xpose.msra.mxu0 0.0
      %1087 = vmatprep.subr.mxu0 0.0
      %1088 = vmatpush2.xpose.msra.mxu0 0.0
      %1089 = vmatprep.subr.mxu0 0.0
      %1090 = vmatpush2.xpose.msra.mxu0 0.0
      %1091 = vmatprep.subr.mxu0 0.0
      %1092 = vmatpush2.xpose.msra.mxu0 0.0
      %1093 = vmatprep.subr.mxu0 0.0
      %1094 = vmatpush2.xpose.msra.mxu0 0.0
      %1095 = vmatprep.subr.mxu0 0.0
      %1096 = vmatpush2.xpose.msra.mxu0 0.0
      %1097 = vmatprep.subr.mxu0 0.0
      %1098 = vmatpush2.xpose.msra.mxu0 0.0
      %1099 = vmatprep.subr.mxu0 0.0
      %1100 = vmatpush2.xpose.msra.mxu0 0.0
      %1101 = vmatprep.subr.mxu0 0.0
      %1102 = vmatpush2.xpose.msra.mxu0 0.0
      %1103 = vmatprep.subr.mxu0 0.0
      %1104 = vmatpush2.xpose.msra.mxu0 0.0
      %1105 = vmatprep.subr.mxu0 0.0
      %1106 = vmatpush2.xpose.msra.mxu0 0.0
      %1107 = vmatprep.subr.mxu0 0.0
      %1108 = vmatpush2.xpose.msra.mxu0 0.0
      %1109 = vmatprep.mubr.f32.mxu0 0.0
      %v1110 = vand.u32 %v738, 4294901760
      %1111 = vmatmul.mubr.f32.gmra.mxu0 %v1110
      %v1112 = vpop.f32.mrf.mxu0
      %v1113 = vadd.f32 %v1039, %v1112
      %v1114 = vpop.f32.mrf.mxu0
      %1115 = vdwg.mxu0
      %1116 = vmatprep.subr.mxu0 0.0
      %1117 = vmatpush1.xpose.msra.mxu0 0.0
      %1118 = vmatprep.subr.mxu0 0.0
      %1119 = vmatpush1.xpose.msra.mxu0 0.0
      %1120 = vmatprep.subr.mxu0 0.0
      %1121 = vmatpush1.xpose.msra.mxu0 0.0
      %1122 = vmatprep.subr.mxu0 0.0
      %1123 = vmatpush1.xpose.msra.mxu0 0.0
      %1124 = vmatprep.subr.mxu0 0.0
      %1125 = vmatpush1.xpose.msra.mxu0 0.0
      %1126 = vmatprep.subr.mxu0 0.0
      %1127 = vmatpush1.xpose.msra.mxu0 0.0
      %1128 = vmatprep.subr.mxu0 0.0
      %1129 = vmatpush1.xpose.msra.mxu0 0.0
      %1130 = vmatprep.subr.mxu0 0.0
      %1131 = vmatpush1.xpose.msra.mxu0 0.0
      %1132 = vmatprep.subr.mxu0 0.0
      %1133 = vmatpush1.xpose.msra.mxu0 0.0
      %1134 = vmatprep.subr.mxu0 0.0
      %1135 = vmatpush1.xpose.msra.mxu0 0.0
      %1136 = vmatprep.subr.mxu0 0.0
      %1137 = vmatpush1.xpose.msra.mxu0 0.0
      %1138 = vmatprep.subr.mxu0 0.0
      %1139 = vmatpush1.xpose.msra.mxu0 0.0
      %1140 = vmatprep.subr.mxu0 0.0
      %1141 = vmatpush1.xpose.msra.mxu0 0.0
      %1142 = vmatprep.subr.mxu0 0.0
      %1143 = vmatpush1.xpose.msra.mxu0 0.0
      %1144 = vmatprep.subr.mxu0 0.0
      %1145 = vmatpush1.xpose.msra.mxu0 0.0
      %1146 = vmatprep.subr.mxu0 0.0
      %v1147 = vand.u32 %v740, 4294901760
      %1148 = vmatpush1.xpose.msra.mxu0 %v1147
      %1149 = vmatprep.subr.mxu0 0.0
      %1150 = vmatpush2.xpose.msra.mxu0 0.0
      %1151 = vmatprep.subr.mxu0 0.0
      %1152 = vmatpush2.xpose.msra.mxu0 0.0
      %1153 = vmatprep.subr.mxu0 0.0
      %1154 = vmatpush2.xpose.msra.mxu0 0.0
      %1155 = vmatprep.subr.mxu0 0.0
      %1156 = vmatpush2.xpose.msra.mxu0 0.0
      %1157 = vmatprep.subr.mxu0 0.0
      %1158 = vmatpush2.xpose.msra.mxu0 0.0
      %1159 = vmatprep.subr.mxu0 0.0
      %1160 = vmatpush2.xpose.msra.mxu0 0.0
      %1161 = vmatprep.subr.mxu0 0.0
      %1162 = vmatpush2.xpose.msra.mxu0 0.0
      %1163 = vmatprep.subr.mxu0 0.0
      %1164 = vmatpush2.xpose.msra.mxu0 0.0
      %1165 = vmatprep.subr.mxu0 0.0
      %1166 = vmatpush2.xpose.msra.mxu0 0.0
      %1167 = vmatprep.subr.mxu0 0.0
      %1168 = vmatpush2.xpose.msra.mxu0 0.0
      %1169 = vmatprep.subr.mxu0 0.0
      %1170 = vmatpush2.xpose.msra.mxu0 0.0
      %1171 = vmatprep.subr.mxu0 0.0
      %1172 = vmatpush2.xpose.msra.mxu0 0.0
      %1173 = vmatprep.subr.mxu0 0.0
      %1174 = vmatpush2.xpose.msra.mxu0 0.0
      %1175 = vmatprep.subr.mxu0 0.0
      %1176 = vmatpush2.xpose.msra.mxu0 0.0
      %1177 = vmatprep.subr.mxu0 0.0
      %1178 = vmatpush2.xpose.msra.mxu0 0.0
      %1179 = vmatprep.subr.mxu0 0.0
      %1180 = vmatpush2.xpose.msra.mxu0 0.0
      %1181 = vmatprep.mubr.f32.mxu0 0.0
      %v1182 = vand.u32 %v738, 4294901760
      %1183 = vmatmul.mubr.f32.gmra.mxu0 %v1182
      %v1184 = vpop.f32.mrf.mxu0
      %v1185 = vadd.f32 %v1113, %v1184
      %v1186 = vpop.f32.mrf.mxu0
      %1187 = vdwg.mxu0
      %v1188 = vmul.f32 %v1185, 0.35355338
      %v1189 = vsel %vm206, %v1188, -10000.0
      %v1190 = vsel %vm236, %v1189, -inf
      %1191 = vmax.xlane.f32.xlu0 %v1190
      %v1192 = vpop.xlane.xlu0 %1191
      %v1193 = vsub.f32 %v1189, %v1192
      %v1194 = vmul.f32 %v1193, 1.442695
      %v1195 = vpow.pop %v1194
      %v1196 = vsel %vm236, %v1195, 0.0
      %1197 = vadd.xlane.f32.xlu0 %v1196
      %v1198 = vpop.xlane.xlu0 %1197
      %1199 = vrot.lane.b32.xlu0 %v218, 96
      %v1200 = vpop.permute.xlu0 %1199
      %v1203 = vsel %vm236, %v1195, 0
      %1205 = vmatprep.subr.mxu0 0.0
      %1206 = vmatpush1.msra.mxu0 0.0
      %1207 = vmatprep.subr.mxu0 0.0
      %1208 = vmatpush1.msra.mxu0 0.0
      %1209 = vmatprep.subr.mxu0 0.0
      %1210 = vmatpush1.msra.mxu0 0.0
      %1211 = vmatprep.subr.mxu0 0.0
      %1212 = vmatpush1.msra.mxu0 0.0
      %1213 = vmatprep.subr.mxu0 0.0
      %1214 = vmatpush1.msra.mxu0 0.0
      %1215 = vmatprep.subr.mxu0 0.0
      %1216 = vmatpush1.msra.mxu0 0.0
      %1217 = vmatprep.subr.mxu0 0.0
      %1218 = vmatpush1.msra.mxu0 0.0
      %1219 = vmatprep.subr.mxu0 0.0
      %1220 = vmatpush1.msra.mxu0 0.0
      %1221 = vmatprep.subr.mxu0 0.0
      %1222 = vmatpush1.msra.mxu0 0.0
      %1223 = vmatprep.subr.mxu0 0.0
      %1224 = vmatpush1.msra.mxu0 0.0
      %1225 = vmatprep.subr.mxu0 0.0
      %1226 = vmatpush1.msra.mxu0 0.0
      %1227 = vmatprep.subr.mxu0 0.0
      %1228 = vmatpush1.msra.mxu0 0.0
      %1229 = vmatprep.subr.mxu0 0.0
      %1230 = vmatpush1.msra.mxu0 0.0
      %1231 = vmatprep.subr.mxu0 0.0
      %1232 = vmatpush1.msra.mxu0 0.0
      %1233 = vmatprep.subr.mxu0 0.0
      %1234 = vmatpush1.msra.mxu0 0.0
      %1235 = vmatprep.subr.mxu0 0.0
      %v1236 = vand.u32 %v1200, 4294901760
      %1237 = vmatpush1.msra.mxu0 %v1236
      %1238 = vmatprep.subr.mxu0 0.0
      %1239 = vmatpush2.msra.mxu0 0.0
      %1240 = vmatprep.subr.mxu0 0.0
      %1241 = vmatpush2.msra.mxu0 0.0
      %1242 = vmatprep.subr.mxu0 0.0
      %1243 = vmatpush2.msra.mxu0 0.0
      %1244 = vmatprep.subr.mxu0 0.0
      %1245 = vmatpush2.msra.mxu0 0.0
      %1246 = vmatprep.subr.mxu0 0.0
      %1247 = vmatpush2.msra.mxu0 0.0
      %1248 = vmatprep.subr.mxu0 0.0
      %1249 = vmatpush2.msra.mxu0 0.0
      %1250 = vmatprep.subr.mxu0 0.0
      %1251 = vmatpush2.msra.mxu0 0.0
      %1252 = vmatprep.subr.mxu0 0.0
      %1253 = vmatpush2.msra.mxu0 0.0
      %1254 = vmatprep.subr.mxu0 0.0
      %1255 = vmatpush2.msra.mxu0 0.0
      %1256 = vmatprep.subr.mxu0 0.0
      %1257 = vmatpush2.msra.mxu0 0.0
      %1258 = vmatprep.subr.mxu0 0.0
      %1259 = vmatpush2.msra.mxu0 0.0
      %1260 = vmatprep.subr.mxu0 0.0
      %1261 = vmatpush2.msra.mxu0 0.0
      %1262 = vmatprep.subr.mxu0 0.0
      %1263 = vmatpush2.msra.mxu0 0.0
      %1264 = vmatprep.subr.mxu0 0.0
      %1265 = vmatpush2.msra.mxu0 0.0
      %1266 = vmatprep.subr.mxu0 0.0
      %1267 = vmatpush2.msra.mxu0 0.0
      %1268 = vmatprep.subr.mxu0 0.0
      %1269 = vmatpush2.msra.mxu0 0.0
      %1270 = vmatprep.mubr.f32.mxu0 0.0
      %v1271 = vand.u32 %v1203, 4294901760
      %v1272 = vsub.f32 %v1203, %v1271
      %v1273 = vand.u32 %v1272, 4294901760
      %v1274 = vsub.f32 %v1272, %v1273
      %v1275 = vand.u32 %v1274, 4294901760
      %1276 = vmatmul.mubr.f32.gmra.mxu0 %v1275
      %v1277 = vpop.f32.mrf.mxu0
      %v1278 = vadd.f32 0.0, %v1277
      %v1279 = vpop.f32.mrf.mxu0
      %1280 = vdwg.mxu0
      %1281 = vmatprep.subr.mxu0 0.0
      %1282 = vmatpush1.msra.mxu0 0.0
      %1283 = vmatprep.subr.mxu0 0.0
      %1284 = vmatpush1.msra.mxu0 0.0
      %1285 = vmatprep.subr.mxu0 0.0
      %1286 = vmatpush1.msra.mxu0 0.0
      %1287 = vmatprep.subr.mxu0 0.0
      %1288 = vmatpush1.msra.mxu0 0.0
      %1289 = vmatprep.subr.mxu0 0.0
      %1290 = vmatpush1.msra.mxu0 0.0
      %1291 = vmatprep.subr.mxu0 0.0
      %1292 = vmatpush1.msra.mxu0 0.0
      %1293 = vmatprep.subr.mxu0 0.0
      %1294 = vmatpush1.msra.mxu0 0.0
      %1295 = vmatprep.subr.mxu0 0.0
      %1296 = vmatpush1.msra.mxu0 0.0
      %1297 = vmatprep.subr.mxu0 0.0
      %1298 = vmatpush1.msra.mxu0 0.0
      %1299 = vmatprep.subr.mxu0 0.0
      %1300 = vmatpush1.msra.mxu0 0.0
      %1301 = vmatprep.subr.mxu0 0.0
      %1302 = vmatpush1.msra.mxu0 0.0
      %1303 = vmatprep.subr.mxu0 0.0
      %1304 = vmatpush1.msra.mxu0 0.0
      %1305 = vmatprep.subr.mxu0 0.0
      %1306 = vmatpush1.msra.mxu0 0.0
      %1307 = vmatprep.subr.mxu0 0.0
      %1308 = vmatpush1.msra.mxu0 0.0
      %1309 = vmatprep.subr.mxu0 0.0
      %1310 = vmatpush1.msra.mxu0 0.0
      %1311 = vmatprep.subr.mxu0 0.0
      %v1312 = vand.u32 %v1200, 4294901760
      %v1313 = vsub.f32 %v1200, %v1312
      %v1314 = vand.u32 %v1313, 4294901760
      %v1315 = vsub.f32 %v1313, %v1314
      %v1316 = vand.u32 %v1315, 4294901760
      %1317 = vmatpush1.msra.mxu0 %v1316
      %1318 = vmatprep.subr.mxu0 0.0
      %1319 = vmatpush2.msra.mxu0 0.0
      %1320 = vmatprep.subr.mxu0 0.0
      %1321 = vmatpush2.msra.mxu0 0.0
      %1322 = vmatprep.subr.mxu0 0.0
      %1323 = vmatpush2.msra.mxu0 0.0
      %1324 = vmatprep.subr.mxu0 0.0
      %1325 = vmatpush2.msra.mxu0 0.0
      %1326 = vmatprep.subr.mxu0 0.0
      %1327 = vmatpush2.msra.mxu0 0.0
      %1328 = vmatprep.subr.mxu0 0.0
      %1329 = vmatpush2.msra.mxu0 0.0
      %1330 = vmatprep.subr.mxu0 0.0
      %1331 = vmatpush2.msra.mxu0 0.0
      %1332 = vmatprep.subr.mxu0 0.0
      %1333 = vmatpush2.msra.mxu0 0.0
      %1334 = vmatprep.subr.mxu0 0.0
      %1335 = vmatpush2.msra.mxu0 0.0
      %1336 = vmatprep.subr.mxu0 0.0
      %1337 = vmatpush2.msra.mxu0 0.0
      %1338 = vmatprep.subr.mxu0 0.0
      %1339 = vmatpush2.msra.mxu0 0.0
      %1340 = vmatprep.subr.mxu0 0.0
      %1341 = vmatpush2.msra.mxu0 0.0
      %1342 = vmatprep.subr.mxu0 0.0
      %1343 = vmatpush2.msra.mxu0 0.0
      %1344 = vmatprep.subr.mxu0 0.0
      %1345 = vmatpush2.msra.mxu0 0.0
      %1346 = vmatprep.subr.mxu0 0.0
      %1347 = vmatpush2.msra.mxu0 0.0
      %1348 = vmatprep.subr.mxu0 0.0
      %1349 = vmatpush2.msra.mxu0 0.0
      %1350 = vmatprep.mubr.f32.mxu0 0.0
      %v1351 = vand.u32 %v1203, 4294901760
      %1352 = vmatmul.mubr.f32.gmra.mxu0 %v1351
      %v1353 = vpop.f32.mrf.mxu0
      %v1354 = vadd.f32 %v1278, %v1353
      %v1355 = vpop.f32.mrf.mxu0
      %1356 = vdwg.mxu0
      %1357 = vmatprep.subr.mxu0 0.0
      %1358 = vmatpush1.msra.mxu0 0.0
      %1359 = vmatprep.subr.mxu0 0.0
      %1360 = vmatpush1.msra.mxu0 0.0
      %1361 = vmatprep.subr.mxu0 0.0
      %1362 = vmatpush1.msra.mxu0 0.0
      %1363 = vmatprep.subr.mxu0 0.0
      %1364 = vmatpush1.msra.mxu0 0.0
      %1365 = vmatprep.subr.mxu0 0.0
      %1366 = vmatpush1.msra.mxu0 0.0
      %1367 = vmatprep.subr.mxu0 0.0
      %1368 = vmatpush1.msra.mxu0 0.0
      %1369 = vmatprep.subr.mxu0 0.0
      %1370 = vmatpush1.msra.mxu0 0.0
      %1371 = vmatprep.subr.mxu0 0.0
      %1372 = vmatpush1.msra.mxu0 0.0
      %1373 = vmatprep.subr.mxu0 0.0
      %1374 = vmatpush1.msra.mxu0 0.0
      %1375 = vmatprep.subr.mxu0 0.0
      %1376 = vmatpush1.msra.mxu0 0.0
      %1377 = vmatprep.subr.mxu0 0.0
      %1378 = vmatpush1.msra.mxu0 0.0
      %1379 = vmatprep.subr.mxu0 0.0
      %1380 = vmatpush1.msra.mxu0 0.0
      %1381 = vmatprep.subr.mxu0 0.0
      %1382 = vmatpush1.msra.mxu0 0.0
      %1383 = vmatprep.subr.mxu0 0.0
      %1384 = vmatpush1.msra.mxu0 0.0
      %1385 = vmatprep.subr.mxu0 0.0
      %1386 = vmatpush1.msra.mxu0 0.0
      %1387 = vmatprep.subr.mxu0 0.0
      %v1388 = vand.u32 %v1200, 4294901760
      %v1389 = vsub.f32 %v1200, %v1388
      %1390 = vmatpush1.msra.mxu0 %v1389
      %1391 = vmatprep.subr.mxu0 0.0
      %1392 = vmatpush2.msra.mxu0 0.0
      %1393 = vmatprep.subr.mxu0 0.0
      %1394 = vmatpush2.msra.mxu0 0.0
      %1395 = vmatprep.subr.mxu0 0.0
      %1396 = vmatpush2.msra.mxu0 0.0
      %1397 = vmatprep.subr.mxu0 0.0
      %1398 = vmatpush2.msra.mxu0 0.0
      %1399 = vmatprep.subr.mxu0 0.0
      %1400 = vmatpush2.msra.mxu0 0.0
      %1401 = vmatprep.subr.mxu0 0.0
      %1402 = vmatpush2.msra.mxu0 0.0
      %1403 = vmatprep.subr.mxu0 0.0
      %1404 = vmatpush2.msra.mxu0 0.0
      %1405 = vmatprep.subr.mxu0 0.0
      %1406 = vmatpush2.msra.mxu0 0.0
      %1407 = vmatprep.subr.mxu0 0.0
      %1408 = vmatpush2.msra.mxu0 0.0
      %1409 = vmatprep.subr.mxu0 0.0
      %1410 = vmatpush2.msra.mxu0 0.0
      %1411 = vmatprep.subr.mxu0 0.0
      %1412 = vmatpush2.msra.mxu0 0.0
      %1413 = vmatprep.subr.mxu0 0.0
      %1414 = vmatpush2.msra.mxu0 0.0
      %1415 = vmatprep.subr.mxu0 0.0
      %1416 = vmatpush2.msra.mxu0 0.0
      %1417 = vmatprep.subr.mxu0 0.0
      %1418 = vmatpush2.msra.mxu0 0.0
      %1419 = vmatprep.subr.mxu0 0.0
      %1420 = vmatpush2.msra.mxu0 0.0
      %1421 = vmatprep.subr.mxu0 0.0
      %1422 = vmatpush2.msra.mxu0 0.0
      %1423 = vmatprep.mubr.f32.mxu0 0.0
      %v1424 = vand.u32 %v1203, 4294901760
      %v1425 = vsub.f32 %v1203, %v1424
      %1426 = vmatmul.mubr.f32.gmra.mxu0 %v1425
      %v1427 = vpop.f32.mrf.mxu0
      %v1428 = vadd.f32 %v1354, %v1427
      %v1429 = vpop.f32.mrf.mxu0
      %1430 = vdwg.mxu0
      %1431 = vmatprep.subr.mxu0 0.0
      %1432 = vmatpush1.msra.mxu0 0.0
      %1433 = vmatprep.subr.mxu0 0.0
      %1434 = vmatpush1.msra.mxu0 0.0
      %1435 = vmatprep.subr.mxu0 0.0
      %1436 = vmatpush1.msra.mxu0 0.0
      %1437 = vmatprep.subr.mxu0 0.0
      %1438 = vmatpush1.msra.mxu0 0.0
      %1439 = vmatprep.subr.mxu0 0.0
      %1440 = vmatpush1.msra.mxu0 0.0
      %1441 = vmatprep.subr.mxu0 0.0
      %1442 = vmatpush1.msra.mxu0 0.0
      %1443 = vmatprep.subr.mxu0 0.0
      %1444 = vmatpush1.msra.mxu0 0.0
      %1445 = vmatprep.subr.mxu0 0.0
      %1446 = vmatpush1.msra.mxu0 0.0
      %1447 = vmatprep.subr.mxu0 0.0
      %1448 = vmatpush1.msra.mxu0 0.0
      %1449 = vmatprep.subr.mxu0 0.0
      %1450 = vmatpush1.msra.mxu0 0.0
      %1451 = vmatprep.subr.mxu0 0.0
      %1452 = vmatpush1.msra.mxu0 0.0
      %1453 = vmatprep.subr.mxu0 0.0
      %1454 = vmatpush1.msra.mxu0 0.0
      %1455 = vmatprep.subr.mxu0 0.0
      %1456 = vmatpush1.msra.mxu0 0.0
      %1457 = vmatprep.subr.mxu0 0.0
      %1458 = vmatpush1.msra.mxu0 0.0
      %1459 = vmatprep.subr.mxu0 0.0
      %1460 = vmatpush1.msra.mxu0 0.0
      %1461 = vmatprep.subr.mxu0 0.0
      %v1462 = vand.u32 %v1200, 4294901760
      %1463 = vmatpush1.msra.mxu0 %v1462
      %1464 = vmatprep.subr.mxu0 0.0
      %1465 = vmatpush2.msra.mxu0 0.0
      %1466 = vmatprep.subr.mxu0 0.0
      %1467 = vmatpush2.msra.mxu0 0.0
      %1468 = vmatprep.subr.mxu0 0.0
      %1469 = vmatpush2.msra.mxu0 0.0
      %1470 = vmatprep.subr.mxu0 0.0
      %1471 = vmatpush2.msra.mxu0 0.0
      %1472 = vmatprep.subr.mxu0 0.0
      %1473 = vmatpush2.msra.mxu0 0.0
      %1474 = vmatprep.subr.mxu0 0.0
      %1475 = vmatpush2.msra.mxu0 0.0
      %1476 = vmatprep.subr.mxu0 0.0
      %1477 = vmatpush2.msra.mxu0 0.0
      %1478 = vmatprep.subr.mxu0 0.0
      %1479 = vmatpush2.msra.mxu0 0.0
      %1480 = vmatprep.subr.mxu0 0.0
      %1481 = vmatpush2.msra.mxu0 0.0
      %1482 = vmatprep.subr.mxu0 0.0
      %1483 = vmatpush2.msra.mxu0 0.0
      %1484 = vmatprep.subr.mxu0 0.0
      %1485 = vmatpush2.msra.mxu0 0.0
      %1486 = vmatprep.subr.mxu0 0.0
      %1487 = vmatpush2.msra.mxu0 0.0
      %1488 = vmatprep.subr.mxu0 0.0
      %1489 = vmatpush2.msra.mxu0 0.0
      %1490 = vmatprep.subr.mxu0 0.0
      %1491 = vmatpush2.msra.mxu0 0.0
      %1492 = vmatprep.subr.mxu0 0.0
      %1493 = vmatpush2.msra.mxu0 0.0
      %1494 = vmatprep.subr.mxu0 0.0
      %1495 = vmatpush2.msra.mxu0 0.0
      %1496 = vmatprep.mubr.f32.mxu0 0.0
      %v1497 = vand.u32 %v1203, 4294901760
      %v1498 = vsub.f32 %v1203, %v1497
      %v1499 = vand.u32 %v1498, 4294901760
      %1500 = vmatmul.mubr.f32.gmra.mxu0 %v1499
      %v1501 = vpop.f32.mrf.mxu0
      %v1502 = vadd.f32 %v1428, %v1501
      %v1503 = vpop.f32.mrf.mxu0
      %1504 = vdwg.mxu0
      %1505 = vmatprep.subr.mxu0 0.0
      %1506 = vmatpush1.msra.mxu0 0.0
      %1507 = vmatprep.subr.mxu0 0.0
      %1508 = vmatpush1.msra.mxu0 0.0
      %1509 = vmatprep.subr.mxu0 0.0
      %1510 = vmatpush1.msra.mxu0 0.0
      %1511 = vmatprep.subr.mxu0 0.0
      %1512 = vmatpush1.msra.mxu0 0.0
      %1513 = vmatprep.subr.mxu0 0.0
      %1514 = vmatpush1.msra.mxu0 0.0
      %1515 = vmatprep.subr.mxu0 0.0
      %1516 = vmatpush1.msra.mxu0 0.0
      %1517 = vmatprep.subr.mxu0 0.0
      %1518 = vmatpush1.msra.mxu0 0.0
      %1519 = vmatprep.subr.mxu0 0.0
      %1520 = vmatpush1.msra.mxu0 0.0
      %1521 = vmatprep.subr.mxu0 0.0
      %1522 = vmatpush1.msra.mxu0 0.0
      %1523 = vmatprep.subr.mxu0 0.0
      %1524 = vmatpush1.msra.mxu0 0.0
      %1525 = vmatprep.subr.mxu0 0.0
      %1526 = vmatpush1.msra.mxu0 0.0
      %1527 = vmatprep.subr.mxu0 0.0
      %1528 = vmatpush1.msra.mxu0 0.0
      %1529 = vmatprep.subr.mxu0 0.0
      %1530 = vmatpush1.msra.mxu0 0.0
      %1531 = vmatprep.subr.mxu0 0.0
      %1532 = vmatpush1.msra.mxu0 0.0
      %1533 = vmatprep.subr.mxu0 0.0
      %1534 = vmatpush1.msra.mxu0 0.0
      %1535 = vmatprep.subr.mxu0 0.0
      %v1536 = vand.u32 %v1200, 4294901760
      %v1537 = vsub.f32 %v1200, %v1536
      %v1538 = vand.u32 %v1537, 4294901760
      %1539 = vmatpush1.msra.mxu0 %v1538
      %1540 = vmatprep.subr.mxu0 0.0
      %1541 = vmatpush2.msra.mxu0 0.0
      %1542 = vmatprep.subr.mxu0 0.0
      %1543 = vmatpush2.msra.mxu0 0.0
      %1544 = vmatprep.subr.mxu0 0.0
      %1545 = vmatpush2.msra.mxu0 0.0
      %1546 = vmatprep.subr.mxu0 0.0
      %1547 = vmatpush2.msra.mxu0 0.0
      %1548 = vmatprep.subr.mxu0 0.0
      %1549 = vmatpush2.msra.mxu0 0.0
      %1550 = vmatprep.subr.mxu0 0.0
      %1551 = vmatpush2.msra.mxu0 0.0
      %1552 = vmatprep.subr.mxu0 0.0
      %1553 = vmatpush2.msra.mxu0 0.0
      %1554 = vmatprep.subr.mxu0 0.0
      %1555 = vmatpush2.msra.mxu0 0.0
      %1556 = vmatprep.subr.mxu0 0.0
      %1557 = vmatpush2.msra.mxu0 0.0
      %1558 = vmatprep.subr.mxu0 0.0
      %1559 = vmatpush2.msra.mxu0 0.0
      %1560 = vmatprep.subr.mxu0 0.0
      %1561 = vmatpush2.msra.mxu0 0.0
      %1562 = vmatprep.subr.mxu0 0.0
      %1563 = vmatpush2.msra.mxu0 0.0
      %1564 = vmatprep.subr.mxu0 0.0
      %1565 = vmatpush2.msra.mxu0 0.0
      %1566 = vmatprep.subr.mxu0 0.0
      %1567 = vmatpush2.msra.mxu0 0.0
      %1568 = vmatprep.subr.mxu0 0.0
      %1569 = vmatpush2.msra.mxu0 0.0
      %1570 = vmatprep.subr.mxu0 0.0
      %1571 = vmatpush2.msra.mxu0 0.0
      %1572 = vmatprep.mubr.f32.mxu0 0.0
      %v1573 = vand.u32 %v1203, 4294901760
      %1574 = vmatmul.mubr.f32.gmra.mxu0 %v1573
      %v1575 = vpop.f32.mrf.mxu0
      %v1576 = vadd.f32 %v1502, %v1575
      %v1577 = vpop.f32.mrf.mxu0
      %1578 = vdwg.mxu0
      %1579 = vmatprep.subr.mxu0 0.0
      %1580 = vmatpush1.msra.mxu0 0.0
      %1581 = vmatprep.subr.mxu0 0.0
      %1582 = vmatpush1.msra.mxu0 0.0
      %1583 = vmatprep.subr.mxu0 0.0
      %1584 = vmatpush1.msra.mxu0 0.0
      %1585 = vmatprep.subr.mxu0 0.0
      %1586 = vmatpush1.msra.mxu0 0.0
      %1587 = vmatprep.subr.mxu0 0.0
      %1588 = vmatpush1.msra.mxu0 0.0
      %1589 = vmatprep.subr.mxu0 0.0
      %1590 = vmatpush1.msra.mxu0 0.0
      %1591 = vmatprep.subr.mxu0 0.0
      %1592 = vmatpush1.msra.mxu0 0.0
      %1593 = vmatprep.subr.mxu0 0.0
      %1594 = vmatpush1.msra.mxu0 0.0
      %1595 = vmatprep.subr.mxu0 0.0
      %1596 = vmatpush1.msra.mxu0 0.0
      %1597 = vmatprep.subr.mxu0 0.0
      %1598 = vmatpush1.msra.mxu0 0.0
      %1599 = vmatprep.subr.mxu0 0.0
      %1600 = vmatpush1.msra.mxu0 0.0
      %1601 = vmatprep.subr.mxu0 0.0
      %1602 = vmatpush1.msra.mxu0 0.0
      %1603 = vmatprep.subr.mxu0 0.0
      %1604 = vmatpush1.msra.mxu0 0.0
      %1605 = vmatprep.subr.mxu0 0.0
      %1606 = vmatpush1.msra.mxu0 0.0
      %1607 = vmatprep.subr.mxu0 0.0
      %1608 = vmatpush1.msra.mxu0 0.0
      %1609 = vmatprep.subr.mxu0 0.0
      %v1610 = vand.u32 %v1200, 4294901760
      %1611 = vmatpush1.msra.mxu0 %v1610
      %1612 = vmatprep.subr.mxu0 0.0
      %1613 = vmatpush2.msra.mxu0 0.0
      %1614 = vmatprep.subr.mxu0 0.0
      %1615 = vmatpush2.msra.mxu0 0.0
      %1616 = vmatprep.subr.mxu0 0.0
      %1617 = vmatpush2.msra.mxu0 0.0
      %1618 = vmatprep.subr.mxu0 0.0
      %1619 = vmatpush2.msra.mxu0 0.0
      %1620 = vmatprep.subr.mxu0 0.0
      %1621 = vmatpush2.msra.mxu0 0.0
      %1622 = vmatprep.subr.mxu0 0.0
      %1623 = vmatpush2.msra.mxu0 0.0
      %1624 = vmatprep.subr.mxu0 0.0
      %1625 = vmatpush2.msra.mxu0 0.0
      %1626 = vmatprep.subr.mxu0 0.0
      %1627 = vmatpush2.msra.mxu0 0.0
      %1628 = vmatprep.subr.mxu0 0.0
      %1629 = vmatpush2.msra.mxu0 0.0
      %1630 = vmatprep.subr.mxu0 0.0
      %1631 = vmatpush2.msra.mxu0 0.0
      %1632 = vmatprep.subr.mxu0 0.0
      %1633 = vmatpush2.msra.mxu0 0.0
      %1634 = vmatprep.subr.mxu0 0.0
      %1635 = vmatpush2.msra.mxu0 0.0
      %1636 = vmatprep.subr.mxu0 0.0
      %1637 = vmatpush2.msra.mxu0 0.0
      %1638 = vmatprep.subr.mxu0 0.0
      %1639 = vmatpush2.msra.mxu0 0.0
      %1640 = vmatprep.subr.mxu0 0.0
      %1641 = vmatpush2.msra.mxu0 0.0
      %1642 = vmatprep.subr.mxu0 0.0
      %1643 = vmatpush2.msra.mxu0 0.0
      %1644 = vmatprep.mubr.f32.mxu0 0.0
      %v1645 = vand.u32 %v1203, 4294901760
      %1646 = vmatmul.mubr.f32.gmra.mxu0 %v1645
      %v1647 = vpop.f32.mrf.mxu0
      %v1648 = vadd.f32 %v1576, %v1647
      %v1649 = vpop.f32.mrf.mxu0
      %1650 = vdwg.mxu0
      %v1651 = vrcp.pop %v1198
      %v1652 = vmul.f32 1.0, %v1651
      %v1653 = vmul.f32 %v1648, %v1652
      %1654 = vst.msk [vmem:[%s199] sm:$0xff] %vm236, %v1653
      %s1655 = scalar_lea.vmem %s3, 1
      %v1656 = vld [vmem:[%s1655] sm:$0x1]
      %v1658 = vlaneseq
      %v1659 = vshrl.u32 %v1658, 7
      %v1660 = vsub.s32 0, %v1659
      %v1661 = vrot.slane %v1656, %v1660
      %1662 = vrot.lane.b32.xlu0 %v1661, 8
      %v1663 = vpop.permute.xlu0 %1662
      %v1665 = vadd.f32 %v218, %v1663
      %s1666 = scalar_lea.vmem %s4, 1
      %v1667 = vld [vmem:[%s1666] sm:$0x1]
      %v1669 = vlaneseq
      %v1670 = vshrl.u32 %v1669, 7
      %v1671 = vsub.s32 0, %v1670
      %v1672 = vrot.slane %v1667, %v1671
      %1673 = vrot.lane.b32.xlu0 %v1672, 8
      %v1674 = vpop.permute.xlu0 %1673
      %v1676 = vadd.f32 %v218, %v1674
      %1678 = vrot.lane.b32.xlu0 %v1676, 120
      %v1679 = vpop.permute.xlu0 %1678
      %1680 = vrot.lane.b32.xlu0 %v219, 120
      %v1681 = vpop.permute.xlu0 %1680
      %v1682 = vsel %vm236, %v1679, 0
      %v1684 = vsel %vm236, %v1681, 0
      %1686 = vmatprep.subr.mxu0 0.0
      %1687 = vmatpush1.xpose.msra.mxu0 0.0
      %1688 = vmatprep.subr.mxu0 0.0
      %1689 = vmatpush1.xpose.msra.mxu0 0.0
      %1690 = vmatprep.subr.mxu0 0.0
      %1691 = vmatpush1.xpose.msra.mxu0 0.0
      %1692 = vmatprep.subr.mxu0 0.0
      %1693 = vmatpush1.xpose.msra.mxu0 0.0
      %1694 = vmatprep.subr.mxu0 0.0
      %1695 = vmatpush1.xpose.msra.mxu0 0.0
      %1696 = vmatprep.subr.mxu0 0.0
      %1697 = vmatpush1.xpose.msra.mxu0 0.0
      %1698 = vmatprep.subr.mxu0 0.0
      %1699 = vmatpush1.xpose.msra.mxu0 0.0
      %1700 = vmatprep.subr.mxu0 0.0
      %1701 = vmatpush1.xpose.msra.mxu0 0.0
      %1702 = vmatprep.subr.mxu0 0.0
      %1703 = vmatpush1.xpose.msra.mxu0 0.0
      %1704 = vmatprep.subr.mxu0 0.0
      %1705 = vmatpush1.xpose.msra.mxu0 0.0
      %1706 = vmatprep.subr.mxu0 0.0
      %1707 = vmatpush1.xpose.msra.mxu0 0.0
      %1708 = vmatprep.subr.mxu0 0.0
      %1709 = vmatpush1.xpose.msra.mxu0 0.0
      %1710 = vmatprep.subr.mxu0 0.0
      %1711 = vmatpush1.xpose.msra.mxu0 0.0
      %1712 = vmatprep.subr.mxu0 0.0
      %1713 = vmatpush1.xpose.msra.mxu0 0.0
      %1714 = vmatprep.subr.mxu0 0.0
      %1715 = vmatpush1.xpose.msra.mxu0 0.0
      %1716 = vmatprep.subr.mxu0 0.0
      %v1717 = vand.u32 %v1684, 4294901760
      %1718 = vmatpush1.xpose.msra.mxu0 %v1717
      %1719 = vmatprep.subr.mxu0 0.0
      %1720 = vmatpush2.xpose.msra.mxu0 0.0
      %1721 = vmatprep.subr.mxu0 0.0
      %1722 = vmatpush2.xpose.msra.mxu0 0.0
      %1723 = vmatprep.subr.mxu0 0.0
      %1724 = vmatpush2.xpose.msra.mxu0 0.0
      %1725 = vmatprep.subr.mxu0 0.0
      %1726 = vmatpush2.xpose.msra.mxu0 0.0
      %1727 = vmatprep.subr.mxu0 0.0
      %1728 = vmatpush2.xpose.msra.mxu0 0.0
      %1729 = vmatprep.subr.mxu0 0.0
      %1730 = vmatpush2.xpose.msra.mxu0 0.0
      %1731 = vmatprep.subr.mxu0 0.0
      %1732 = vmatpush2.xpose.msra.mxu0 0.0
      %1733 = vmatprep.subr.mxu0 0.0
      %1734 = vmatpush2.xpose.msra.mxu0 0.0
      %1735 = vmatprep.subr.mxu0 0.0
      %1736 = vmatpush2.xpose.msra.mxu0 0.0
      %1737 = vmatprep.subr.mxu0 0.0
      %1738 = vmatpush2.xpose.msra.mxu0 0.0
      %1739 = vmatprep.subr.mxu0 0.0
      %1740 = vmatpush2.xpose.msra.mxu0 0.0
      %1741 = vmatprep.subr.mxu0 0.0
      %1742 = vmatpush2.xpose.msra.mxu0 0.0
      %1743 = vmatprep.subr.mxu0 0.0
      %1744 = vmatpush2.xpose.msra.mxu0 0.0
      %1745 = vmatprep.subr.mxu0 0.0
      %1746 = vmatpush2.xpose.msra.mxu0 0.0
      %1747 = vmatprep.subr.mxu0 0.0
      %1748 = vmatpush2.xpose.msra.mxu0 0.0
      %1749 = vmatprep.subr.mxu0 0.0
      %1750 = vmatpush2.xpose.msra.mxu0 0.0
      %1751 = vmatprep.mubr.f32.mxu0 0.0
      %v1752 = vand.u32 %v1682, 4294901760
      %v1753 = vsub.f32 %v1682, %v1752
      %v1754 = vand.u32 %v1753, 4294901760
      %v1755 = vsub.f32 %v1753, %v1754
      %v1756 = vand.u32 %v1755, 4294901760
      %1757 = vmatmul.mubr.f32.gmra.mxu0 %v1756
      %v1758 = vpop.f32.mrf.mxu0
      %v1759 = vadd.f32 0.0, %v1758
      %v1760 = vpop.f32.mrf.mxu0
      %1761 = vdwg.mxu0
      %1762 = vmatprep.subr.mxu0 0.0
      %1763 = vmatpush1.xpose.msra.mxu0 0.0
      %1764 = vmatprep.subr.mxu0 0.0
      %1765 = vmatpush1.xpose.msra.mxu0 0.0
      %1766 = vmatprep.subr.mxu0 0.0
      %1767 = vmatpush1.xpose.msra.mxu0 0.0
      %1768 = vmatprep.subr.mxu0 0.0
      %1769 = vmatpush1.xpose.msra.mxu0 0.0
      %1770 = vmatprep.subr.mxu0 0.0
      %1771 = vmatpush1.xpose.msra.mxu0 0.0
      %1772 = vmatprep.subr.mxu0 0.0
      %1773 = vmatpush1.xpose.msra.mxu0 0.0
      %1774 = vmatprep.subr.mxu0 0.0
      %1775 = vmatpush1.xpose.msra.mxu0 0.0
      %1776 = vmatprep.subr.mxu0 0.0
      %1777 = vmatpush1.xpose.msra.mxu0 0.0
      %1778 = vmatprep.subr.mxu0 0.0
      %1779 = vmatpush1.xpose.msra.mxu0 0.0
      %1780 = vmatprep.subr.mxu0 0.0
      %1781 = vmatpush1.xpose.msra.mxu0 0.0
      %1782 = vmatprep.subr.mxu0 0.0
      %1783 = vmatpush1.xpose.msra.mxu0 0.0
      %1784 = vmatprep.subr.mxu0 0.0
      %1785 = vmatpush1.xpose.msra.mxu0 0.0
      %1786 = vmatprep.subr.mxu0 0.0
      %1787 = vmatpush1.xpose.msra.mxu0 0.0
      %1788 = vmatprep.subr.mxu0 0.0
      %1789 = vmatpush1.xpose.msra.mxu0 0.0
      %1790 = vmatprep.subr.mxu0 0.0
      %1791 = vmatpush1.xpose.msra.mxu0 0.0
      %1792 = vmatprep.subr.mxu0 0.0
      %v1793 = vand.u32 %v1684, 4294901760
      %v1794 = vsub.f32 %v1684, %v1793
      %v1795 = vand.u32 %v1794, 4294901760
      %v1796 = vsub.f32 %v1794, %v1795
      %v1797 = vand.u32 %v1796, 4294901760
      %1798 = vmatpush1.xpose.msra.mxu0 %v1797
      %1799 = vmatprep.subr.mxu0 0.0
      %1800 = vmatpush2.xpose.msra.mxu0 0.0
      %1801 = vmatprep.subr.mxu0 0.0
      %1802 = vmatpush2.xpose.msra.mxu0 0.0
      %1803 = vmatprep.subr.mxu0 0.0
      %1804 = vmatpush2.xpose.msra.mxu0 0.0
      %1805 = vmatprep.subr.mxu0 0.0
      %1806 = vmatpush2.xpose.msra.mxu0 0.0
      %1807 = vmatprep.subr.mxu0 0.0
      %1808 = vmatpush2.xpose.msra.mxu0 0.0
      %1809 = vmatprep.subr.mxu0 0.0
      %1810 = vmatpush2.xpose.msra.mxu0 0.0
      %1811 = vmatprep.subr.mxu0 0.0
      %1812 = vmatpush2.xpose.msra.mxu0 0.0
      %1813 = vmatprep.subr.mxu0 0.0
      %1814 = vmatpush2.xpose.msra.mxu0 0.0
      %1815 = vmatprep.subr.mxu0 0.0
      %1816 = vmatpush2.xpose.msra.mxu0 0.0
      %1817 = vmatprep.subr.mxu0 0.0
      %1818 = vmatpush2.xpose.msra.mxu0 0.0
      %1819 = vmatprep.subr.mxu0 0.0
      %1820 = vmatpush2.xpose.msra.mxu0 0.0
      %1821 = vmatprep.subr.mxu0 0.0
      %1822 = vmatpush2.xpose.msra.mxu0 0.0
      %1823 = vmatprep.subr.mxu0 0.0
      %1824 = vmatpush2.xpose.msra.mxu0 0.0
      %1825 = vmatprep.subr.mxu0 0.0
      %1826 = vmatpush2.xpose.msra.mxu0 0.0
      %1827 = vmatprep.subr.mxu0 0.0
      %1828 = vmatpush2.xpose.msra.mxu0 0.0
      %1829 = vmatprep.subr.mxu0 0.0
      %1830 = vmatpush2.xpose.msra.mxu0 0.0
      %1831 = vmatprep.mubr.f32.mxu0 0.0
      %v1832 = vand.u32 %v1682, 4294901760
      %1833 = vmatmul.mubr.f32.gmra.mxu0 %v1832
      %v1834 = vpop.f32.mrf.mxu0
      %v1835 = vadd.f32 %v1759, %v1834
      %v1836 = vpop.f32.mrf.mxu0
      %1837 = vdwg.mxu0
      %1838 = vmatprep.subr.mxu0 0.0
      %1839 = vmatpush1.xpose.msra.mxu0 0.0
      %1840 = vmatprep.subr.mxu0 0.0
      %1841 = vmatpush1.xpose.msra.mxu0 0.0
      %1842 = vmatprep.subr.mxu0 0.0
      %1843 = vmatpush1.xpose.msra.mxu0 0.0
      %1844 = vmatprep.subr.mxu0 0.0
      %1845 = vmatpush1.xpose.msra.mxu0 0.0
      %1846 = vmatprep.subr.mxu0 0.0
      %1847 = vmatpush1.xpose.msra.mxu0 0.0
      %1848 = vmatprep.subr.mxu0 0.0
      %1849 = vmatpush1.xpose.msra.mxu0 0.0
      %1850 = vmatprep.subr.mxu0 0.0
      %1851 = vmatpush1.xpose.msra.mxu0 0.0
      %1852 = vmatprep.subr.mxu0 0.0
      %1853 = vmatpush1.xpose.msra.mxu0 0.0
      %1854 = vmatprep.subr.mxu0 0.0
      %1855 = vmatpush1.xpose.msra.mxu0 0.0
      %1856 = vmatprep.subr.mxu0 0.0
      %1857 = vmatpush1.xpose.msra.mxu0 0.0
      %1858 = vmatprep.subr.mxu0 0.0
      %1859 = vmatpush1.xpose.msra.mxu0 0.0
      %1860 = vmatprep.subr.mxu0 0.0
      %1861 = vmatpush1.xpose.msra.mxu0 0.0
      %1862 = vmatprep.subr.mxu0 0.0
      %1863 = vmatpush1.xpose.msra.mxu0 0.0
      %1864 = vmatprep.subr.mxu0 0.0
      %1865 = vmatpush1.xpose.msra.mxu0 0.0
      %1866 = vmatprep.subr.mxu0 0.0
      %1867 = vmatpush1.xpose.msra.mxu0 0.0
      %1868 = vmatprep.subr.mxu0 0.0
      %v1869 = vand.u32 %v1684, 4294901760
      %v1870 = vsub.f32 %v1684, %v1869
      %1871 = vmatpush1.xpose.msra.mxu0 %v1870
      %1872 = vmatprep.subr.mxu0 0.0
      %1873 = vmatpush2.xpose.msra.mxu0 0.0
      %1874 = vmatprep.subr.mxu0 0.0
      %1875 = vmatpush2.xpose.msra.mxu0 0.0
      %1876 = vmatprep.subr.mxu0 0.0
      %1877 = vmatpush2.xpose.msra.mxu0 0.0
      %1878 = vmatprep.subr.mxu0 0.0
      %1879 = vmatpush2.xpose.msra.mxu0 0.0
      %1880 = vmatprep.subr.mxu0 0.0
      %1881 = vmatpush2.xpose.msra.mxu0 0.0
      %1882 = vmatprep.subr.mxu0 0.0
      %1883 = vmatpush2.xpose.msra.mxu0 0.0
      %1884 = vmatprep.subr.mxu0 0.0
      %1885 = vmatpush2.xpose.msra.mxu0 0.0
      %1886 = vmatprep.subr.mxu0 0.0
      %1887 = vmatpush2.xpose.msra.mxu0 0.0
      %1888 = vmatprep.subr.mxu0 0.0
      %1889 = vmatpush2.xpose.msra.mxu0 0.0
      %1890 = vmatprep.subr.mxu0 0.0
      %1891 = vmatpush2.xpose.msra.mxu0 0.0
      %1892 = vmatprep.subr.mxu0 0.0
      %1893 = vmatpush2.xpose.msra.mxu0 0.0
      %1894 = vmatprep.subr.mxu0 0.0
      %1895 = vmatpush2.xpose.msra.mxu0 0.0
      %1896 = vmatprep.subr.mxu0 0.0
      %1897 = vmatpush2.xpose.msra.mxu0 0.0
      %1898 = vmatprep.subr.mxu0 0.0
      %1899 = vmatpush2.xpose.msra.mxu0 0.0
      %1900 = vmatprep.subr.mxu0 0.0
      %1901 = vmatpush2.xpose.msra.mxu0 0.0
      %1902 = vmatprep.subr.mxu0 0.0
      %1903 = vmatpush2.xpose.msra.mxu0 0.0
      %1904 = vmatprep.mubr.f32.mxu0 0.0
      %v1905 = vand.u32 %v1682, 4294901760
      %v1906 = vsub.f32 %v1682, %v1905
      %1907 = vmatmul.mubr.f32.gmra.mxu0 %v1906
      %v1908 = vpop.f32.mrf.mxu0
      %v1909 = vadd.f32 %v1835, %v1908
      %v1910 = vpop.f32.mrf.mxu0
      %1911 = vdwg.mxu0
      %1912 = vmatprep.subr.mxu0 0.0
      %1913 = vmatpush1.xpose.msra.mxu0 0.0
      %1914 = vmatprep.subr.mxu0 0.0
      %1915 = vmatpush1.xpose.msra.mxu0 0.0
      %1916 = vmatprep.subr.mxu0 0.0
      %1917 = vmatpush1.xpose.msra.mxu0 0.0
      %1918 = vmatprep.subr.mxu0 0.0
      %1919 = vmatpush1.xpose.msra.mxu0 0.0
      %1920 = vmatprep.subr.mxu0 0.0
      %1921 = vmatpush1.xpose.msra.mxu0 0.0
      %1922 = vmatprep.subr.mxu0 0.0
      %1923 = vmatpush1.xpose.msra.mxu0 0.0
      %1924 = vmatprep.subr.mxu0 0.0
      %1925 = vmatpush1.xpose.msra.mxu0 0.0
      %1926 = vmatprep.subr.mxu0 0.0
      %1927 = vmatpush1.xpose.msra.mxu0 0.0
      %1928 = vmatprep.subr.mxu0 0.0
      %1929 = vmatpush1.xpose.msra.mxu0 0.0
      %1930 = vmatprep.subr.mxu0 0.0
      %1931 = vmatpush1.xpose.msra.mxu0 0.0
      %1932 = vmatprep.subr.mxu0 0.0
      %1933 = vmatpush1.xpose.msra.mxu0 0.0
      %1934 = vmatprep.subr.mxu0 0.0
      %1935 = vmatpush1.xpose.msra.mxu0 0.0
      %1936 = vmatprep.subr.mxu0 0.0
      %1937 = vmatpush1.xpose.msra.mxu0 0.0
      %1938 = vmatprep.subr.mxu0 0.0
      %1939 = vmatpush1.xpose.msra.mxu0 0.0
      %1940 = vmatprep.subr.mxu0 0.0
      %1941 = vmatpush1.xpose.msra.mxu0 0.0
      %1942 = vmatprep.subr.mxu0 0.0
      %v1943 = vand.u32 %v1684, 4294901760
      %1944 = vmatpush1.xpose.msra.mxu0 %v1943
      %1945 = vmatprep.subr.mxu0 0.0
      %1946 = vmatpush2.xpose.msra.mxu0 0.0
      %1947 = vmatprep.subr.mxu0 0.0
      %1948 = vmatpush2.xpose.msra.mxu0 0.0
      %1949 = vmatprep.subr.mxu0 0.0
      %1950 = vmatpush2.xpose.msra.mxu0 0.0
      %1951 = vmatprep.subr.mxu0 0.0
      %1952 = vmatpush2.xpose.msra.mxu0 0.0
      %1953 = vmatprep.subr.mxu0 0.0
      %1954 = vmatpush2.xpose.msra.mxu0 0.0
      %1955 = vmatprep.subr.mxu0 0.0
      %1956 = vmatpush2.xpose.msra.mxu0 0.0
      %1957 = vmatprep.subr.mxu0 0.0
      %1958 = vmatpush2.xpose.msra.mxu0 0.0
      %1959 = vmatprep.subr.mxu0 0.0
      %1960 = vmatpush2.xpose.msra.mxu0 0.0
      %1961 = vmatprep.subr.mxu0 0.0
      %1962 = vmatpush2.xpose.msra.mxu0 0.0
      %1963 = vmatprep.subr.mxu0 0.0
      %1964 = vmatpush2.xpose.msra.mxu0 0.0
      %1965 = vmatprep.subr.mxu0 0.0
      %1966 = vmatpush2.xpose.msra.mxu0 0.0
      %1967 = vmatprep.subr.mxu0 0.0
      %1968 = vmatpush2.xpose.msra.mxu0 0.0
      %1969 = vmatprep.subr.mxu0 0.0
      %1970 = vmatpush2.xpose.msra.mxu0 0.0
      %1971 = vmatprep.subr.mxu0 0.0
      %1972 = vmatpush2.xpose.msra.mxu0 0.0
      %1973 = vmatprep.subr.mxu0 0.0
      %1974 = vmatpush2.xpose.msra.mxu0 0.0
      %1975 = vmatprep.subr.mxu0 0.0
      %1976 = vmatpush2.xpose.msra.mxu0 0.0
      %1977 = vmatprep.mubr.f32.mxu0 0.0
      %v1978 = vand.u32 %v1682, 4294901760
      %v1979 = vsub.f32 %v1682, %v1978
      %v1980 = vand.u32 %v1979, 4294901760
      %1981 = vmatmul.mubr.f32.gmra.mxu0 %v1980
      %v1982 = vpop.f32.mrf.mxu0
      %v1983 = vadd.f32 %v1909, %v1982
      %v1984 = vpop.f32.mrf.mxu0
      %1985 = vdwg.mxu0
      %1986 = vmatprep.subr.mxu0 0.0
      %1987 = vmatpush1.xpose.msra.mxu0 0.0
      %1988 = vmatprep.subr.mxu0 0.0
      %1989 = vmatpush1.xpose.msra.mxu0 0.0
      %1990 = vmatprep.subr.mxu0 0.0
      %1991 = vmatpush1.xpose.msra.mxu0 0.0
      %1992 = vmatprep.subr.mxu0 0.0
      %1993 = vmatpush1.xpose.msra.mxu0 0.0
      %1994 = vmatprep.subr.mxu0 0.0
      %1995 = vmatpush1.xpose.msra.mxu0 0.0
      %1996 = vmatprep.subr.mxu0 0.0
      %1997 = vmatpush1.xpose.msra.mxu0 0.0
      %1998 = vmatprep.subr.mxu0 0.0
      %1999 = vmatpush1.xpose.msra.mxu0 0.0
      %2000 = vmatprep.subr.mxu0 0.0
      %2001 = vmatpush1.xpose.msra.mxu0 0.0
      %2002 = vmatprep.subr.mxu0 0.0
      %2003 = vmatpush1.xpose.msra.mxu0 0.0
      %2004 = vmatprep.subr.mxu0 0.0
      %2005 = vmatpush1.xpose.msra.mxu0 0.0
      %2006 = vmatprep.subr.mxu0 0.0
      %2007 = vmatpush1.xpose.msra.mxu0 0.0
      %2008 = vmatprep.subr.mxu0 0.0
      %2009 = vmatpush1.xpose.msra.mxu0 0.0
      %2010 = vmatprep.subr.mxu0 0.0
      %2011 = vmatpush1.xpose.msra.mxu0 0.0
      %2012 = vmatprep.subr.mxu0 0.0
      %2013 = vmatpush1.xpose.msra.mxu0 0.0
      %2014 = vmatprep.subr.mxu0 0.0
      %2015 = vmatpush1.xpose.msra.mxu0 0.0
      %2016 = vmatprep.subr.mxu0 0.0
      %v2017 = vand.u32 %v1684, 4294901760
      %v2018 = vsub.f32 %v1684, %v2017
      %v2019 = vand.u32 %v2018, 4294901760
      %2020 = vmatpush1.xpose.msra.mxu0 %v2019
      %2021 = vmatprep.subr.mxu0 0.0
      %2022 = vmatpush2.xpose.msra.mxu0 0.0
      %2023 = vmatprep.subr.mxu0 0.0
      %2024 = vmatpush2.xpose.msra.mxu0 0.0
      %2025 = vmatprep.subr.mxu0 0.0
      %2026 = vmatpush2.xpose.msra.mxu0 0.0
      %2027 = vmatprep.subr.mxu0 0.0
      %2028 = vmatpush2.xpose.msra.mxu0 0.0
      %2029 = vmatprep.subr.mxu0 0.0
      %2030 = vmatpush2.xpose.msra.mxu0 0.0
      %2031 = vmatprep.subr.mxu0 0.0
      %2032 = vmatpush2.xpose.msra.mxu0 0.0
      %2033 = vmatprep.subr.mxu0 0.0
      %2034 = vmatpush2.xpose.msra.mxu0 0.0
      %2035 = vmatprep.subr.mxu0 0.0
      %2036 = vmatpush2.xpose.msra.mxu0 0.0
      %2037 = vmatprep.subr.mxu0 0.0
      %2038 = vmatpush2.xpose.msra.mxu0 0.0
      %2039 = vmatprep.subr.mxu0 0.0
      %2040 = vmatpush2.xpose.msra.mxu0 0.0
      %2041 = vmatprep.subr.mxu0 0.0
      %2042 = vmatpush2.xpose.msra.mxu0 0.0
      %2043 = vmatprep.subr.mxu0 0.0
      %2044 = vmatpush2.xpose.msra.mxu0 0.0
      %2045 = vmatprep.subr.mxu0 0.0
      %2046 = vmatpush2.xpose.msra.mxu0 0.0
      %2047 = vmatprep.subr.mxu0 0.0
      %2048 = vmatpush2.xpose.msra.mxu0 0.0
      %2049 = vmatprep.subr.mxu0 0.0
      %2050 = vmatpush2.xpose.msra.mxu0 0.0
      %2051 = vmatprep.subr.mxu0 0.0
      %2052 = vmatpush2.xpose.msra.mxu0 0.0
      %2053 = vmatprep.mubr.f32.mxu0 0.0
      %v2054 = vand.u32 %v1682, 4294901760
      %2055 = vmatmul.mubr.f32.gmra.mxu0 %v2054
      %v2056 = vpop.f32.mrf.mxu0
      %v2057 = vadd.f32 %v1983, %v2056
      %v2058 = vpop.f32.mrf.mxu0
      %2059 = vdwg.mxu0
      %2060 = vmatprep.subr.mxu0 0.0
      %2061 = vmatpush1.xpose.msra.mxu0 0.0
      %2062 = vmatprep.subr.mxu0 0.0
      %2063 = vmatpush1.xpose.msra.mxu0 0.0
      %2064 = vmatprep.subr.mxu0 0.0
      %2065 = vmatpush1.xpose.msra.mxu0 0.0
      %2066 = vmatprep.subr.mxu0 0.0
      %2067 = vmatpush1.xpose.msra.mxu0 0.0
      %2068 = vmatprep.subr.mxu0 0.0
      %2069 = vmatpush1.xpose.msra.mxu0 0.0
      %2070 = vmatprep.subr.mxu0 0.0
      %2071 = vmatpush1.xpose.msra.mxu0 0.0
      %2072 = vmatprep.subr.mxu0 0.0
      %2073 = vmatpush1.xpose.msra.mxu0 0.0
      %2074 = vmatprep.subr.mxu0 0.0
      %2075 = vmatpush1.xpose.msra.mxu0 0.0
      %2076 = vmatprep.subr.mxu0 0.0
      %2077 = vmatpush1.xpose.msra.mxu0 0.0
      %2078 = vmatprep.subr.mxu0 0.0
      %2079 = vmatpush1.xpose.msra.mxu0 0.0
      %2080 = vmatprep.subr.mxu0 0.0
      %2081 = vmatpush1.xpose.msra.mxu0 0.0
      %2082 = vmatprep.subr.mxu0 0.0
      %2083 = vmatpush1.xpose.msra.mxu0 0.0
      %2084 = vmatprep.subr.mxu0 0.0
      %2085 = vmatpush1.xpose.msra.mxu0 0.0
      %2086 = vmatprep.subr.mxu0 0.0
      %2087 = vmatpush1.xpose.msra.mxu0 0.0
      %2088 = vmatprep.subr.mxu0 0.0
      %2089 = vmatpush1.xpose.msra.mxu0 0.0
      %2090 = vmatprep.subr.mxu0 0.0
      %v2091 = vand.u32 %v1684, 4294901760
      %2092 = vmatpush1.xpose.msra.mxu0 %v2091
      %2093 = vmatprep.subr.mxu0 0.0
      %2094 = vmatpush2.xpose.msra.mxu0 0.0
      %2095 = vmatprep.subr.mxu0 0.0
      %2096 = vmatpush2.xpose.msra.mxu0 0.0
      %2097 = vmatprep.subr.mxu0 0.0
      %2098 = vmatpush2.xpose.msra.mxu0 0.0
      %2099 = vmatprep.subr.mxu0 0.0
      %2100 = vmatpush2.xpose.msra.mxu0 0.0
      %2101 = vmatprep.subr.mxu0 0.0
      %2102 = vmatpush2.xpose.msra.mxu0 0.0
      %2103 = vmatprep.subr.mxu0 0.0
      %2104 = vmatpush2.xpose.msra.mxu0 0.0
      %2105 = vmatprep.subr.mxu0 0.0
      %2106 = vmatpush2.xpose.msra.mxu0 0.0
      %2107 = vmatprep.subr.mxu0 0.0
      %2108 = vmatpush2.xpose.msra.mxu0 0.0
      %2109 = vmatprep.subr.mxu0 0.0
      %2110 = vmatpush2.xpose.msra.mxu0 0.0
      %2111 = vmatprep.subr.mxu0 0.0
      %2112 = vmatpush2.xpose.msra.mxu0 0.0
      %2113 = vmatprep.subr.mxu0 0.0
      %2114 = vmatpush2.xpose.msra.mxu0 0.0
      %2115 = vmatprep.subr.mxu0 0.0
      %2116 = vmatpush2.xpose.msra.mxu0 0.0
      %2117 = vmatprep.subr.mxu0 0.0
      %2118 = vmatpush2.xpose.msra.mxu0 0.0
      %2119 = vmatprep.subr.mxu0 0.0
      %2120 = vmatpush2.xpose.msra.mxu0 0.0
      %2121 = vmatprep.subr.mxu0 0.0
      %2122 = vmatpush2.xpose.msra.mxu0 0.0
      %2123 = vmatprep.subr.mxu0 0.0
      %2124 = vmatpush2.xpose.msra.mxu0 0.0
      %2125 = vmatprep.mubr.f32.mxu0 0.0
      %v2126 = vand.u32 %v1682, 4294901760
      %2127 = vmatmul.mubr.f32.gmra.mxu0 %v2126
      %v2128 = vpop.f32.mrf.mxu0
      %v2129 = vadd.f32 %v2057, %v2128
      %v2130 = vpop.f32.mrf.mxu0
      %2131 = vdwg.mxu0
      %2133 = vrot.lane.b32.xlu0 %v2129, 121
      %v2134 = vpop.permute.xlu0 %2133
      %2136 = vrot.lane.b32.xlu0 %v2129, 1
      %v2137 = vpop.permute.xlu0 %2136
      %v2139 = vsel %vm696, %v2134, %v2137
      %2141 = vrot.lane.b32.xlu0 %v2139, 121
      %v2142 = vpop.permute.xlu0 %2141
      %2144 = vrot.lane.b32.xlu0 %v2139, 1
      %v2145 = vpop.permute.xlu0 %2144
      %v2147 = vsel %vm696, %v2142, %v2145
      %v2148 = vsel %vm211, %v2147, %v2139
      %2150 = vrot.lane.b32.xlu0 %v2148, 122
      %v2151 = vpop.permute.xlu0 %2150
      %2153 = vrot.lane.b32.xlu0 %v2148, 2
      %v2154 = vpop.permute.xlu0 %2153
      %v2156 = vsel %vm714, %v2151, %v2154
      %v2157 = vsel %vm214, %v2156, %v2148
      %2159 = vrot.lane.b32.xlu0 %v2157, 124
      %v2160 = vpop.permute.xlu0 %2159
      %2162 = vrot.lane.b32.xlu0 %v2157, 4
      %v2163 = vpop.permute.xlu0 %2162
      %v2165 = vsel %vm724, %v2160, %v2163
      %v2166 = vsel %vm217, %v2165, %v2157
      %v2168 = vrot.slane %v2166, 1
      %v2170 = vsel %vm730, %v2168, %v2168
      %v2171 = vsel %vm209, 0.0, %v2170
      %v2172 = vsel %vm207, %v2166, %v2171
      %2174 = vrot.lane.b32.xlu0 %v1665, 120
      %v2175 = vpop.permute.xlu0 %2174
      %2176 = vrot.lane.b32.xlu0 %v218, 104
      %v2177 = vpop.permute.xlu0 %2176
      %v2178 = vsel %vm236, %v2175, 0
      %v2180 = vsel %vm236, %v2177, 0
      %2182 = vmatprep.subr.mxu0 0.0
      %2183 = vmatpush1.xpose.msra.mxu0 0.0
      %2184 = vmatprep.subr.mxu0 0.0
      %2185 = vmatpush1.xpose.msra.mxu0 0.0
      %2186 = vmatprep.subr.mxu0 0.0
      %2187 = vmatpush1.xpose.msra.mxu0 0.0
      %2188 = vmatprep.subr.mxu0 0.0
      %2189 = vmatpush1.xpose.msra.mxu0 0.0
      %2190 = vmatprep.subr.mxu0 0.0
      %2191 = vmatpush1.xpose.msra.mxu0 0.0
      %2192 = vmatprep.subr.mxu0 0.0
      %2193 = vmatpush1.xpose.msra.mxu0 0.0
      %2194 = vmatprep.subr.mxu0 0.0
      %2195 = vmatpush1.xpose.msra.mxu0 0.0
      %2196 = vmatprep.subr.mxu0 0.0
      %2197 = vmatpush1.xpose.msra.mxu0 0.0
      %2198 = vmatprep.subr.mxu0 0.0
      %2199 = vmatpush1.xpose.msra.mxu0 0.0
      %2200 = vmatprep.subr.mxu0 0.0
      %2201 = vmatpush1.xpose.msra.mxu0 0.0
      %2202 = vmatprep.subr.mxu0 0.0
      %2203 = vmatpush1.xpose.msra.mxu0 0.0
      %2204 = vmatprep.subr.mxu0 0.0
      %2205 = vmatpush1.xpose.msra.mxu0 0.0
      %2206 = vmatprep.subr.mxu0 0.0
      %2207 = vmatpush1.xpose.msra.mxu0 0.0
      %2208 = vmatprep.subr.mxu0 0.0
      %2209 = vmatpush1.xpose.msra.mxu0 0.0
      %2210 = vmatprep.subr.mxu0 0.0
      %2211 = vmatpush1.xpose.msra.mxu0 0.0
      %2212 = vmatprep.subr.mxu0 0.0
      %v2213 = vand.u32 %v2180, 4294901760
      %2214 = vmatpush1.xpose.msra.mxu0 %v2213
      %2215 = vmatprep.subr.mxu0 0.0
      %2216 = vmatpush2.xpose.msra.mxu0 0.0
      %2217 = vmatprep.subr.mxu0 0.0
      %2218 = vmatpush2.xpose.msra.mxu0 0.0
      %2219 = vmatprep.subr.mxu0 0.0
      %2220 = vmatpush2.xpose.msra.mxu0 0.0
      %2221 = vmatprep.subr.mxu0 0.0
      %2222 = vmatpush2.xpose.msra.mxu0 0.0
      %2223 = vmatprep.subr.mxu0 0.0
      %2224 = vmatpush2.xpose.msra.mxu0 0.0
      %2225 = vmatprep.subr.mxu0 0.0
      %2226 = vmatpush2.xpose.msra.mxu0 0.0
      %2227 = vmatprep.subr.mxu0 0.0
      %2228 = vmatpush2.xpose.msra.mxu0 0.0
      %2229 = vmatprep.subr.mxu0 0.0
      %2230 = vmatpush2.xpose.msra.mxu0 0.0
      %2231 = vmatprep.subr.mxu0 0.0
      %2232 = vmatpush2.xpose.msra.mxu0 0.0
      %2233 = vmatprep.subr.mxu0 0.0
      %2234 = vmatpush2.xpose.msra.mxu0 0.0
      %2235 = vmatprep.subr.mxu0 0.0
      %2236 = vmatpush2.xpose.msra.mxu0 0.0
      %2237 = vmatprep.subr.mxu0 0.0
      %2238 = vmatpush2.xpose.msra.mxu0 0.0
      %2239 = vmatprep.subr.mxu0 0.0
      %2240 = vmatpush2.xpose.msra.mxu0 0.0
      %2241 = vmatprep.subr.mxu0 0.0
      %2242 = vmatpush2.xpose.msra.mxu0 0.0
      %2243 = vmatprep.subr.mxu0 0.0
      %2244 = vmatpush2.xpose.msra.mxu0 0.0
      %2245 = vmatprep.subr.mxu0 0.0
      %2246 = vmatpush2.xpose.msra.mxu0 0.0
      %2247 = vmatprep.mubr.f32.mxu0 0.0
      %v2248 = vand.u32 %v2178, 4294901760
      %v2249 = vsub.f32 %v2178, %v2248
      %v2250 = vand.u32 %v2249, 4294901760
      %v2251 = vsub.f32 %v2249, %v2250
      %v2252 = vand.u32 %v2251, 4294901760
      %2253 = vmatmul.mubr.f32.gmra.mxu0 %v2252
      %v2254 = vpop.f32.mrf.mxu0
      %v2255 = vadd.f32 %v2172, %v2254
      %v2256 = vpop.f32.mrf.mxu0
      %2257 = vdwg.mxu0
      %2258 = vmatprep.subr.mxu0 0.0
      %2259 = vmatpush1.xpose.msra.mxu0 0.0
      %2260 = vmatprep.subr.mxu0 0.0
      %2261 = vmatpush1.xpose.msra.mxu0 0.0
      %2262 = vmatprep.subr.mxu0 0.0
      %2263 = vmatpush1.xpose.msra.mxu0 0.0
      %2264 = vmatprep.subr.mxu0 0.0
      %2265 = vmatpush1.xpose.msra.mxu0 0.0
      %2266 = vmatprep.subr.mxu0 0.0
      %2267 = vmatpush1.xpose.msra.mxu0 0.0
      %2268 = vmatprep.subr.mxu0 0.0
      %2269 = vmatpush1.xpose.msra.mxu0 0.0
      %2270 = vmatprep.subr.mxu0 0.0
      %2271 = vmatpush1.xpose.msra.mxu0 0.0
      %2272 = vmatprep.subr.mxu0 0.0
      %2273 = vmatpush1.xpose.msra.mxu0 0.0
      %2274 = vmatprep.subr.mxu0 0.0
      %2275 = vmatpush1.xpose.msra.mxu0 0.0
      %2276 = vmatprep.subr.mxu0 0.0
      %2277 = vmatpush1.xpose.msra.mxu0 0.0
      %2278 = vmatprep.subr.mxu0 0.0
      %2279 = vmatpush1.xpose.msra.mxu0 0.0
      %2280 = vmatprep.subr.mxu0 0.0
      %2281 = vmatpush1.xpose.msra.mxu0 0.0
      %2282 = vmatprep.subr.mxu0 0.0
      %2283 = vmatpush1.xpose.msra.mxu0 0.0
      %2284 = vmatprep.subr.mxu0 0.0
      %2285 = vmatpush1.xpose.msra.mxu0 0.0
      %2286 = vmatprep.subr.mxu0 0.0
      %2287 = vmatpush1.xpose.msra.mxu0 0.0
      %2288 = vmatprep.subr.mxu0 0.0
      %v2289 = vand.u32 %v2180, 4294901760
      %v2290 = vsub.f32 %v2180, %v2289
      %v2291 = vand.u32 %v2290, 4294901760
      %v2292 = vsub.f32 %v2290, %v2291
      %v2293 = vand.u32 %v2292, 4294901760
      %2294 = vmatpush1.xpose.msra.mxu0 %v2293
      %2295 = vmatprep.subr.mxu0 0.0
      %2296 = vmatpush2.xpose.msra.mxu0 0.0
      %2297 = vmatprep.subr.mxu0 0.0
      %2298 = vmatpush2.xpose.msra.mxu0 0.0
      %2299 = vmatprep.subr.mxu0 0.0
      %2300 = vmatpush2.xpose.msra.mxu0 0.0
      %2301 = vmatprep.subr.mxu0 0.0
      %2302 = vmatpush2.xpose.msra.mxu0 0.0
      %2303 = vmatprep.subr.mxu0 0.0
      %2304 = vmatpush2.xpose.msra.mxu0 0.0
      %2305 = vmatprep.subr.mxu0 0.0
      %2306 = vmatpush2.xpose.msra.mxu0 0.0
      %2307 = vmatprep.subr.mxu0 0.0
      %2308 = vmatpush2.xpose.msra.mxu0 0.0
      %2309 = vmatprep.subr.mxu0 0.0
      %2310 = vmatpush2.xpose.msra.mxu0 0.0
      %2311 = vmatprep.subr.mxu0 0.0
      %2312 = vmatpush2.xpose.msra.mxu0 0.0
      %2313 = vmatprep.subr.mxu0 0.0
      %2314 = vmatpush2.xpose.msra.mxu0 0.0
      %2315 = vmatprep.subr.mxu0 0.0
      %2316 = vmatpush2.xpose.msra.mxu0 0.0
      %2317 = vmatprep.subr.mxu0 0.0
      %2318 = vmatpush2.xpose.msra.mxu0 0.0
      %2319 = vmatprep.subr.mxu0 0.0
      %2320 = vmatpush2.xpose.msra.mxu0 0.0
      %2321 = vmatprep.subr.mxu0 0.0
      %2322 = vmatpush2.xpose.msra.mxu0 0.0
      %2323 = vmatprep.subr.mxu0 0.0
      %2324 = vmatpush2.xpose.msra.mxu0 0.0
      %2325 = vmatprep.subr.mxu0 0.0
      %2326 = vmatpush2.xpose.msra.mxu0 0.0
      %2327 = vmatprep.mubr.f32.mxu0 0.0
      %v2328 = vand.u32 %v2178, 4294901760
      %2329 = vmatmul.mubr.f32.gmra.mxu0 %v2328
      %v2330 = vpop.f32.mrf.mxu0
      %v2331 = vadd.f32 %v2255, %v2330
      %v2332 = vpop.f32.mrf.mxu0
      %2333 = vdwg.mxu0
      %2334 = vmatprep.subr.mxu0 0.0
      %2335 = vmatpush1.xpose.msra.mxu0 0.0
      %2336 = vmatprep.subr.mxu0 0.0
      %2337 = vmatpush1.xpose.msra.mxu0 0.0
      %2338 = vmatprep.subr.mxu0 0.0
      %2339 = vmatpush1.xpose.msra.mxu0 0.0
      %2340 = vmatprep.subr.mxu0 0.0
      %2341 = vmatpush1.xpose.msra.mxu0 0.0
      %2342 = vmatprep.subr.mxu0 0.0
      %2343 = vmatpush1.xpose.msra.mxu0 0.0
      %2344 = vmatprep.subr.mxu0 0.0
      %2345 = vmatpush1.xpose.msra.mxu0 0.0
      %2346 = vmatprep.subr.mxu0 0.0
      %2347 = vmatpush1.xpose.msra.mxu0 0.0
      %2348 = vmatprep.subr.mxu0 0.0
      %2349 = vmatpush1.xpose.msra.mxu0 0.0
      %2350 = vmatprep.subr.mxu0 0.0
      %2351 = vmatpush1.xpose.msra.mxu0 0.0
      %2352 = vmatprep.subr.mxu0 0.0
      %2353 = vmatpush1.xpose.msra.mxu0 0.0
      %2354 = vmatprep.subr.mxu0 0.0
      %2355 = vmatpush1.xpose.msra.mxu0 0.0
      %2356 = vmatprep.subr.mxu0 0.0
      %2357 = vmatpush1.xpose.msra.mxu0 0.0
      %2358 = vmatprep.subr.mxu0 0.0
      %2359 = vmatpush1.xpose.msra.mxu0 0.0
      %2360 = vmatprep.subr.mxu0 0.0
      %2361 = vmatpush1.xpose.msra.mxu0 0.0
      %2362 = vmatprep.subr.mxu0 0.0
      %2363 = vmatpush1.xpose.msra.mxu0 0.0
      %2364 = vmatprep.subr.mxu0 0.0
      %v2365 = vand.u32 %v2180, 4294901760
      %v2366 = vsub.f32 %v2180, %v2365
      %2367 = vmatpush1.xpose.msra.mxu0 %v2366
      %2368 = vmatprep.subr.mxu0 0.0
      %2369 = vmatpush2.xpose.msra.mxu0 0.0
      %2370 = vmatprep.subr.mxu0 0.0
      %2371 = vmatpush2.xpose.msra.mxu0 0.0
      %2372 = vmatprep.subr.mxu0 0.0
      %2373 = vmatpush2.xpose.msra.mxu0 0.0
      %2374 = vmatprep.subr.mxu0 0.0
      %2375 = vmatpush2.xpose.msra.mxu0 0.0
      %2376 = vmatprep.subr.mxu0 0.0
      %2377 = vmatpush2.xpose.msra.mxu0 0.0
      %2378 = vmatprep.subr.mxu0 0.0
      %2379 = vmatpush2.xpose.msra.mxu0 0.0
      %2380 = vmatprep.subr.mxu0 0.0
      %2381 = vmatpush2.xpose.msra.mxu0 0.0
      %2382 = vmatprep.subr.mxu0 0.0
      %2383 = vmatpush2.xpose.msra.mxu0 0.0
      %2384 = vmatprep.subr.mxu0 0.0
      %2385 = vmatpush2.xpose.msra.mxu0 0.0
      %2386 = vmatprep.subr.mxu0 0.0
      %2387 = vmatpush2.xpose.msra.mxu0 0.0
      %2388 = vmatprep.subr.mxu0 0.0
      %2389 = vmatpush2.xpose.msra.mxu0 0.0
      %2390 = vmatprep.subr.mxu0 0.0
      %2391 = vmatpush2.xpose.msra.mxu0 0.0
      %2392 = vmatprep.subr.mxu0 0.0
      %2393 = vmatpush2.xpose.msra.mxu0 0.0
      %2394 = vmatprep.subr.mxu0 0.0
      %2395 = vmatpush2.xpose.msra.mxu0 0.0
      %2396 = vmatprep.subr.mxu0 0.0
      %2397 = vmatpush2.xpose.msra.mxu0 0.0
      %2398 = vmatprep.subr.mxu0 0.0
      %2399 = vmatpush2.xpose.msra.mxu0 0.0
      %2400 = vmatprep.mubr.f32.mxu0 0.0
      %v2401 = vand.u32 %v2178, 4294901760
      %v2402 = vsub.f32 %v2178, %v2401
      %2403 = vmatmul.mubr.f32.gmra.mxu0 %v2402
      %v2404 = vpop.f32.mrf.mxu0
      %v2405 = vadd.f32 %v2331, %v2404
      %v2406 = vpop.f32.mrf.mxu0
      %2407 = vdwg.mxu0
      %2408 = vmatprep.subr.mxu0 0.0
      %2409 = vmatpush1.xpose.msra.mxu0 0.0
      %2410 = vmatprep.subr.mxu0 0.0
      %2411 = vmatpush1.xpose.msra.mxu0 0.0
      %2412 = vmatprep.subr.mxu0 0.0
      %2413 = vmatpush1.xpose.msra.mxu0 0.0
      %2414 = vmatprep.subr.mxu0 0.0
      %2415 = vmatpush1.xpose.msra.mxu0 0.0
      %2416 = vmatprep.subr.mxu0 0.0
      %2417 = vmatpush1.xpose.msra.mxu0 0.0
      %2418 = vmatprep.subr.mxu0 0.0
      %2419 = vmatpush1.xpose.msra.mxu0 0.0
      %2420 = vmatprep.subr.mxu0 0.0
      %2421 = vmatpush1.xpose.msra.mxu0 0.0
      %2422 = vmatprep.subr.mxu0 0.0
      %2423 = vmatpush1.xpose.msra.mxu0 0.0
      %2424 = vmatprep.subr.mxu0 0.0
      %2425 = vmatpush1.xpose.msra.mxu0 0.0
      %2426 = vmatprep.subr.mxu0 0.0
      %2427 = vmatpush1.xpose.msra.mxu0 0.0
      %2428 = vmatprep.subr.mxu0 0.0
      %2429 = vmatpush1.xpose.msra.mxu0 0.0
      %2430 = vmatprep.subr.mxu0 0.0
      %2431 = vmatpush1.xpose.msra.mxu0 0.0
      %2432 = vmatprep.subr.mxu0 0.0
      %2433 = vmatpush1.xpose.msra.mxu0 0.0
      %2434 = vmatprep.subr.mxu0 0.0
      %2435 = vmatpush1.xpose.msra.mxu0 0.0
      %2436 = vmatprep.subr.mxu0 0.0
      %2437 = vmatpush1.xpose.msra.mxu0 0.0
      %2438 = vmatprep.subr.mxu0 0.0
      %v2439 = vand.u32 %v2180, 4294901760
      %2440 = vmatpush1.xpose.msra.mxu0 %v2439
      %2441 = vmatprep.subr.mxu0 0.0
      %2442 = vmatpush2.xpose.msra.mxu0 0.0
      %2443 = vmatprep.subr.mxu0 0.0
      %2444 = vmatpush2.xpose.msra.mxu0 0.0
      %2445 = vmatprep.subr.mxu0 0.0
      %2446 = vmatpush2.xpose.msra.mxu0 0.0
      %2447 = vmatprep.subr.mxu0 0.0
      %2448 = vmatpush2.xpose.msra.mxu0 0.0
      %2449 = vmatprep.subr.mxu0 0.0
      %2450 = vmatpush2.xpose.msra.mxu0 0.0
      %2451 = vmatprep.subr.mxu0 0.0
      %2452 = vmatpush2.xpose.msra.mxu0 0.0
      %2453 = vmatprep.subr.mxu0 0.0
      %2454 = vmatpush2.xpose.msra.mxu0 0.0
      %2455 = vmatprep.subr.mxu0 0.0
      %2456 = vmatpush2.xpose.msra.mxu0 0.0
      %2457 = vmatprep.subr.mxu0 0.0
      %2458 = vmatpush2.xpose.msra.mxu0 0.0
      %2459 = vmatprep.subr.mxu0 0.0
      %2460 = vmatpush2.xpose.msra.mxu0 0.0
      %2461 = vmatprep.subr.mxu0 0.0
      %2462 = vmatpush2.xpose.msra.mxu0 0.0
      %2463 = vmatprep.subr.mxu0 0.0
      %2464 = vmatpush2.xpose.msra.mxu0 0.0
      %2465 = vmatprep.subr.mxu0 0.0
      %2466 = vmatpush2.xpose.msra.mxu0 0.0
      %2467 = vmatprep.subr.mxu0 0.0
      %2468 = vmatpush2.xpose.msra.mxu0 0.0
      %2469 = vmatprep.subr.mxu0 0.0
      %2470 = vmatpush2.xpose.msra.mxu0 0.0
      %2471 = vmatprep.subr.mxu0 0.0
      %2472 = vmatpush2.xpose.msra.mxu0 0.0
      %2473 = vmatprep.mubr.f32.mxu0 0.0
      %v2474 = vand.u32 %v2178, 4294901760
      %v2475 = vsub.f32 %v2178, %v2474
      %v2476 = vand.u32 %v2475, 4294901760
      %2477 = vmatmul.mubr.f32.gmra.mxu0 %v2476
      %v2478 = vpop.f32.mrf.mxu0
      %v2479 = vadd.f32 %v2405, %v2478
      %v2480 = vpop.f32.mrf.mxu0
      %2481 = vdwg.mxu0
      %2482 = vmatprep.subr.mxu0 0.0
      %2483 = vmatpush1.xpose.msra.mxu0 0.0
      %2484 = vmatprep.subr.mxu0 0.0
      %2485 = vmatpush1.xpose.msra.mxu0 0.0
      %2486 = vmatprep.subr.mxu0 0.0
      %2487 = vmatpush1.xpose.msra.mxu0 0.0
      %2488 = vmatprep.subr.mxu0 0.0
      %2489 = vmatpush1.xpose.msra.mxu0 0.0
      %2490 = vmatprep.subr.mxu0 0.0
      %2491 = vmatpush1.xpose.msra.mxu0 0.0
      %2492 = vmatprep.subr.mxu0 0.0
      %2493 = vmatpush1.xpose.msra.mxu0 0.0
      %2494 = vmatprep.subr.mxu0 0.0
      %2495 = vmatpush1.xpose.msra.mxu0 0.0
      %2496 = vmatprep.subr.mxu0 0.0
      %2497 = vmatpush1.xpose.msra.mxu0 0.0
      %2498 = vmatprep.subr.mxu0 0.0
      %2499 = vmatpush1.xpose.msra.mxu0 0.0
      %2500 = vmatprep.subr.mxu0 0.0
      %2501 = vmatpush1.xpose.msra.mxu0 0.0
      %2502 = vmatprep.subr.mxu0 0.0
      %2503 = vmatpush1.xpose.msra.mxu0 0.0
      %2504 = vmatprep.subr.mxu0 0.0
      %2505 = vmatpush1.xpose.msra.mxu0 0.0
      %2506 = vmatprep.subr.mxu0 0.0
      %2507 = vmatpush1.xpose.msra.mxu0 0.0
      %2508 = vmatprep.subr.mxu0 0.0
      %2509 = vmatpush1.xpose.msra.mxu0 0.0
      %2510 = vmatprep.subr.mxu0 0.0
      %2511 = vmatpush1.xpose.msra.mxu0 0.0
      %2512 = vmatprep.subr.mxu0 0.0
      %v2513 = vand.u32 %v2180, 4294901760
      %v2514 = vsub.f32 %v2180, %v2513
      %v2515 = vand.u32 %v2514, 4294901760
      %2516 = vmatpush1.xpose.msra.mxu0 %v2515
      %2517 = vmatprep.subr.mxu0 0.0
      %2518 = vmatpush2.xpose.msra.mxu0 0.0
      %2519 = vmatprep.subr.mxu0 0.0
      %2520 = vmatpush2.xpose.msra.mxu0 0.0
      %2521 = vmatprep.subr.mxu0 0.0
      %2522 = vmatpush2.xpose.msra.mxu0 0.0
      %2523 = vmatprep.subr.mxu0 0.0
      %2524 = vmatpush2.xpose.msra.mxu0 0.0
      %2525 = vmatprep.subr.mxu0 0.0
      %2526 = vmatpush2.xpose.msra.mxu0 0.0
      %2527 = vmatprep.subr.mxu0 0.0
      %2528 = vmatpush2.xpose.msra.mxu0 0.0
      %2529 = vmatprep.subr.mxu0 0.0
      %2530 = vmatpush2.xpose.msra.mxu0 0.0
      %2531 = vmatprep.subr.mxu0 0.0
      %2532 = vmatpush2.xpose.msra.mxu0 0.0
      %2533 = vmatprep.subr.mxu0 0.0
      %2534 = vmatpush2.xpose.msra.mxu0 0.0
      %2535 = vmatprep.subr.mxu0 0.0
      %2536 = vmatpush2.xpose.msra.mxu0 0.0
      %2537 = vmatprep.subr.mxu0 0.0
      %2538 = vmatpush2.xpose.msra.mxu0 0.0
      %2539 = vmatprep.subr.mxu0 0.0
      %2540 = vmatpush2.xpose.msra.mxu0 0.0
      %2541 = vmatprep.subr.mxu0 0.0
      %2542 = vmatpush2.xpose.msra.mxu0 0.0
      %2543 = vmatprep.subr.mxu0 0.0
      %2544 = vmatpush2.xpose.msra.mxu0 0.0
      %2545 = vmatprep.subr.mxu0 0.0
      %2546 = vmatpush2.xpose.msra.mxu0 0.0
      %2547 = vmatprep.subr.mxu0 0.0
      %2548 = vmatpush2.xpose.msra.mxu0 0.0
      %2549 = vmatprep.mubr.f32.mxu0 0.0
      %v2550 = vand.u32 %v2178, 4294901760
      %2551 = vmatmul.mubr.f32.gmra.mxu0 %v2550
      %v2552 = vpop.f32.mrf.mxu0
      %v2553 = vadd.f32 %v2479, %v2552
      %v2554 = vpop.f32.mrf.mxu0
      %2555 = vdwg.mxu0
      %2556 = vmatprep.subr.mxu0 0.0
      %2557 = vmatpush1.xpose.msra.mxu0 0.0
      %2558 = vmatprep.subr.mxu0 0.0
      %2559 = vmatpush1.xpose.msra.mxu0 0.0
      %2560 = vmatprep.subr.mxu0 0.0
      %2561 = vmatpush1.xpose.msra.mxu0 0.0
      %2562 = vmatprep.subr.mxu0 0.0
      %2563 = vmatpush1.xpose.msra.mxu0 0.0
      %2564 = vmatprep.subr.mxu0 0.0
      %2565 = vmatpush1.xpose.msra.mxu0 0.0
      %2566 = vmatprep.subr.mxu0 0.0
      %2567 = vmatpush1.xpose.msra.mxu0 0.0
      %2568 = vmatprep.subr.mxu0 0.0
      %2569 = vmatpush1.xpose.msra.mxu0 0.0
      %2570 = vmatprep.subr.mxu0 0.0
      %2571 = vmatpush1.xpose.msra.mxu0 0.0
      %2572 = vmatprep.subr.mxu0 0.0
      %2573 = vmatpush1.xpose.msra.mxu0 0.0
      %2574 = vmatprep.subr.mxu0 0.0
      %2575 = vmatpush1.xpose.msra.mxu0 0.0
      %2576 = vmatprep.subr.mxu0 0.0
      %2577 = vmatpush1.xpose.msra.mxu0 0.0
      %2578 = vmatprep.subr.mxu0 0.0
      %2579 = vmatpush1.xpose.msra.mxu0 0.0
      %2580 = vmatprep.subr.mxu0 0.0
      %2581 = vmatpush1.xpose.msra.mxu0 0.0
      %2582 = vmatprep.subr.mxu0 0.0
      %2583 = vmatpush1.xpose.msra.mxu0 0.0
      %2584 = vmatprep.subr.mxu0 0.0
      %2585 = vmatpush1.xpose.msra.mxu0 0.0
      %2586 = vmatprep.subr.mxu0 0.0
      %v2587 = vand.u32 %v2180, 4294901760
      %2588 = vmatpush1.xpose.msra.mxu0 %v2587
      %2589 = vmatprep.subr.mxu0 0.0
      %2590 = vmatpush2.xpose.msra.mxu0 0.0
      %2591 = vmatprep.subr.mxu0 0.0
      %2592 = vmatpush2.xpose.msra.mxu0 0.0
      %2593 = vmatprep.subr.mxu0 0.0
      %2594 = vmatpush2.xpose.msra.mxu0 0.0
      %2595 = vmatprep.subr.mxu0 0.0
      %2596 = vmatpush2.xpose.msra.mxu0 0.0
      %2597 = vmatprep.subr.mxu0 0.0
      %2598 = vmatpush2.xpose.msra.mxu0 0.0
      %2599 = vmatprep.subr.mxu0 0.0
      %2600 = vmatpush2.xpose.msra.mxu0 0.0
      %2601 = vmatprep.subr.mxu0 0.0
      %2602 = vmatpush2.xpose.msra.mxu0 0.0
      %2603 = vmatprep.subr.mxu0 0.0
      %2604 = vmatpush2.xpose.msra.mxu0 0.0
      %2605 = vmatprep.subr.mxu0 0.0
      %2606 = vmatpush2.xpose.msra.mxu0 0.0
      %2607 = vmatprep.subr.mxu0 0.0
      %2608 = vmatpush2.xpose.msra.mxu0 0.0
      %2609 = vmatprep.subr.mxu0 0.0
      %2610 = vmatpush2.xpose.msra.mxu0 0.0
      %2611 = vmatprep.subr.mxu0 0.0
      %2612 = vmatpush2.xpose.msra.mxu0 0.0
      %2613 = vmatprep.subr.mxu0 0.0
      %2614 = vmatpush2.xpose.msra.mxu0 0.0
      %2615 = vmatprep.subr.mxu0 0.0
      %2616 = vmatpush2.xpose.msra.mxu0 0.0
      %2617 = vmatprep.subr.mxu0 0.0
      %2618 = vmatpush2.xpose.msra.mxu0 0.0
      %2619 = vmatprep.subr.mxu0 0.0
      %2620 = vmatpush2.xpose.msra.mxu0 0.0
      %2621 = vmatprep.mubr.f32.mxu0 0.0
      %v2622 = vand.u32 %v2178, 4294901760
      %2623 = vmatmul.mubr.f32.gmra.mxu0 %v2622
      %v2624 = vpop.f32.mrf.mxu0
      %v2625 = vadd.f32 %v2553, %v2624
      %v2626 = vpop.f32.mrf.mxu0
      %2627 = vdwg.mxu0
      %v2628 = vmul.f32 %v2625, 0.35355338
      %v2629 = vsel %vm206, %v2628, -10000.0
      %v2630 = vsel %vm236, %v2629, -inf
      %2631 = vmax.xlane.f32.xlu0 %v2630
      %v2632 = vpop.xlane.xlu0 %2631
      %v2633 = vsub.f32 %v2629, %v2632
      %v2634 = vmul.f32 %v2633, 1.442695
      %v2635 = vpow.pop %v2634
      %v2636 = vsel %vm236, %v2635, 0.0
      %2637 = vadd.xlane.f32.xlu0 %v2636
      %v2638 = vpop.xlane.xlu0 %2637
      %2639 = vrot.lane.b32.xlu0 %v218, 88
      %v2640 = vpop.permute.xlu0 %2639
      %v2643 = vsel %vm236, %v2635, 0
      %2645 = vmatprep.subr.mxu0 0.0
      %2646 = vmatpush1.msra.mxu0 0.0
      %2647 = vmatprep.subr.mxu0 0.0
      %2648 = vmatpush1.msra.mxu0 0.0
      %2649 = vmatprep.subr.mxu0 0.0
      %2650 = vmatpush1.msra.mxu0 0.0
      %2651 = vmatprep.subr.mxu0 0.0
      %2652 = vmatpush1.msra.mxu0 0.0
      %2653 = vmatprep.subr.mxu0 0.0
      %2654 = vmatpush1.msra.mxu0 0.0
      %2655 = vmatprep.subr.mxu0 0.0
      %2656 = vmatpush1.msra.mxu0 0.0
      %2657 = vmatprep.subr.mxu0 0.0
      %2658 = vmatpush1.msra.mxu0 0.0
      %2659 = vmatprep.subr.mxu0 0.0
      %2660 = vmatpush1.msra.mxu0 0.0
      %2661 = vmatprep.subr.mxu0 0.0
      %2662 = vmatpush1.msra.mxu0 0.0
      %2663 = vmatprep.subr.mxu0 0.0
      %2664 = vmatpush1.msra.mxu0 0.0
      %2665 = vmatprep.subr.mxu0 0.0
      %2666 = vmatpush1.msra.mxu0 0.0
      %2667 = vmatprep.subr.mxu0 0.0
      %2668 = vmatpush1.msra.mxu0 0.0
      %2669 = vmatprep.subr.mxu0 0.0
      %2670 = vmatpush1.msra.mxu0 0.0
      %2671 = vmatprep.subr.mxu0 0.0
      %2672 = vmatpush1.msra.mxu0 0.0
      %2673 = vmatprep.subr.mxu0 0.0
      %2674 = vmatpush1.msra.mxu0 0.0
      %2675 = vmatprep.subr.mxu0 0.0
      %v2676 = vand.u32 %v2640, 4294901760
      %2677 = vmatpush1.msra.mxu0 %v2676
      %2678 = vmatprep.subr.mxu0 0.0
      %2679 = vmatpush2.msra.mxu0 0.0
      %2680 = vmatprep.subr.mxu0 0.0
      %2681 = vmatpush2.msra.mxu0 0.0
      %2682 = vmatprep.subr.mxu0 0.0
      %2683 = vmatpush2.msra.mxu0 0.0
      %2684 = vmatprep.subr.mxu0 0.0
      %2685 = vmatpush2.msra.mxu0 0.0
      %2686 = vmatprep.subr.mxu0 0.0
      %2687 = vmatpush2.msra.mxu0 0.0
      %2688 = vmatprep.subr.mxu0 0.0
      %2689 = vmatpush2.msra.mxu0 0.0
      %2690 = vmatprep.subr.mxu0 0.0
      %2691 = vmatpush2.msra.mxu0 0.0
      %2692 = vmatprep.subr.mxu0 0.0
      %2693 = vmatpush2.msra.mxu0 0.0
      %2694 = vmatprep.subr.mxu0 0.0
      %2695 = vmatpush2.msra.mxu0 0.0
      %2696 = vmatprep.subr.mxu0 0.0
      %2697 = vmatpush2.msra.mxu0 0.0
      %2698 = vmatprep.subr.mxu0 0.0
      %2699 = vmatpush2.msra.mxu0 0.0
      %2700 = vmatprep.subr.mxu0 0.0
      %2701 = vmatpush2.msra.mxu0 0.0
      %2702 = vmatprep.subr.mxu0 0.0
      %2703 = vmatpush2.msra.mxu0 0.0
      %2704 = vmatprep.subr.mxu0 0.0
      %2705 = vmatpush2.msra.mxu0 0.0
      %2706 = vmatprep.subr.mxu0 0.0
      %2707 = vmatpush2.msra.mxu0 0.0
      %2708 = vmatprep.subr.mxu0 0.0
      %2709 = vmatpush2.msra.mxu0 0.0
      %2710 = vmatprep.mubr.f32.mxu0 0.0
      %v2711 = vand.u32 %v2643, 4294901760
      %v2712 = vsub.f32 %v2643, %v2711
      %v2713 = vand.u32 %v2712, 4294901760
      %v2714 = vsub.f32 %v2712, %v2713
      %v2715 = vand.u32 %v2714, 4294901760
      %2716 = vmatmul.mubr.f32.gmra.mxu0 %v2715
      %v2717 = vpop.f32.mrf.mxu0
      %v2718 = vadd.f32 0.0, %v2717
      %v2719 = vpop.f32.mrf.mxu0
      %2720 = vdwg.mxu0
      %2721 = vmatprep.subr.mxu0 0.0
      %2722 = vmatpush1.msra.mxu0 0.0
      %2723 = vmatprep.subr.mxu0 0.0
      %2724 = vmatpush1.msra.mxu0 0.0
      %2725 = vmatprep.subr.mxu0 0.0
      %2726 = vmatpush1.msra.mxu0 0.0
      %2727 = vmatprep.subr.mxu0 0.0
      %2728 = vmatpush1.msra.mxu0 0.0
      %2729 = vmatprep.subr.mxu0 0.0
      %2730 = vmatpush1.msra.mxu0 0.0
      %2731 = vmatprep.subr.mxu0 0.0
      %2732 = vmatpush1.msra.mxu0 0.0
      %2733 = vmatprep.subr.mxu0 0.0
      %2734 = vmatpush1.msra.mxu0 0.0
      %2735 = vmatprep.subr.mxu0 0.0
      %2736 = vmatpush1.msra.mxu0 0.0
      %2737 = vmatprep.subr.mxu0 0.0
      %2738 = vmatpush1.msra.mxu0 0.0
      %2739 = vmatprep.subr.mxu0 0.0
      %2740 = vmatpush1.msra.mxu0 0.0
      %2741 = vmatprep.subr.mxu0 0.0
      %2742 = vmatpush1.msra.mxu0 0.0
      %2743 = vmatprep.subr.mxu0 0.0
      %2744 = vmatpush1.msra.mxu0 0.0
      %2745 = vmatprep.subr.mxu0 0.0
      %2746 = vmatpush1.msra.mxu0 0.0
      %2747 = vmatprep.subr.mxu0 0.0
      %2748 = vmatpush1.msra.mxu0 0.0
      %2749 = vmatprep.subr.mxu0 0.0
      %2750 = vmatpush1.msra.mxu0 0.0
      %2751 = vmatprep.subr.mxu0 0.0
      %v2752 = vand.u32 %v2640, 4294901760
      %v2753 = vsub.f32 %v2640, %v2752
      %v2754 = vand.u32 %v2753, 4294901760
      %v2755 = vsub.f32 %v2753, %v2754
      %v2756 = vand.u32 %v2755, 4294901760
      %2757 = vmatpush1.msra.mxu0 %v2756
      %2758 = vmatprep.subr.mxu0 0.0
      %2759 = vmatpush2.msra.mxu0 0.0
      %2760 = vmatprep.subr.mxu0 0.0
      %2761 = vmatpush2.msra.mxu0 0.0
      %2762 = vmatprep.subr.mxu0 0.0
      %2763 = vmatpush2.msra.mxu0 0.0
      %2764 = vmatprep.subr.mxu0 0.0
      %2765 = vmatpush2.msra.mxu0 0.0
      %2766 = vmatprep.subr.mxu0 0.0
      %2767 = vmatpush2.msra.mxu0 0.0
      %2768 = vmatprep.subr.mxu0 0.0
      %2769 = vmatpush2.msra.mxu0 0.0
      %2770 = vmatprep.subr.mxu0 0.0
      %2771 = vmatpush2.msra.mxu0 0.0
      %2772 = vmatprep.subr.mxu0 0.0
      %2773 = vmatpush2.msra.mxu0 0.0
      %2774 = vmatprep.subr.mxu0 0.0
      %2775 = vmatpush2.msra.mxu0 0.0
      %2776 = vmatprep.subr.mxu0 0.0
      %2777 = vmatpush2.msra.mxu0 0.0
      %2778 = vmatprep.subr.mxu0 0.0
      %2779 = vmatpush2.msra.mxu0 0.0
      %2780 = vmatprep.subr.mxu0 0.0
      %2781 = vmatpush2.msra.mxu0 0.0
      %2782 = vmatprep.subr.mxu0 0.0
      %2783 = vmatpush2.msra.mxu0 0.0
      %2784 = vmatprep.subr.mxu0 0.0
      %2785 = vmatpush2.msra.mxu0 0.0
      %2786 = vmatprep.subr.mxu0 0.0
      %2787 = vmatpush2.msra.mxu0 0.0
      %2788 = vmatprep.subr.mxu0 0.0
      %2789 = vmatpush2.msra.mxu0 0.0
      %2790 = vmatprep.mubr.f32.mxu0 0.0
      %v2791 = vand.u32 %v2643, 4294901760
      %2792 = vmatmul.mubr.f32.gmra.mxu0 %v2791
      %v2793 = vpop.f32.mrf.mxu0
      %v2794 = vadd.f32 %v2718, %v2793
      %v2795 = vpop.f32.mrf.mxu0
      %2796 = vdwg.mxu0
      %2797 = vmatprep.subr.mxu0 0.0
      %2798 = vmatpush1.msra.mxu0 0.0
      %2799 = vmatprep.subr.mxu0 0.0
      %2800 = vmatpush1.msra.mxu0 0.0
      %2801 = vmatprep.subr.mxu0 0.0
      %2802 = vmatpush1.msra.mxu0 0.0
      %2803 = vmatprep.subr.mxu0 0.0
      %2804 = vmatpush1.msra.mxu0 0.0
      %2805 = vmatprep.subr.mxu0 0.0
      %2806 = vmatpush1.msra.mxu0 0.0
      %2807 = vmatprep.subr.mxu0 0.0
      %2808 = vmatpush1.msra.mxu0 0.0
      %2809 = vmatprep.subr.mxu0 0.0
      %2810 = vmatpush1.msra.mxu0 0.0
      %2811 = vmatprep.subr.mxu0 0.0
      %2812 = vmatpush1.msra.mxu0 0.0
      %2813 = vmatprep.subr.mxu0 0.0
      %2814 = vmatpush1.msra.mxu0 0.0
      %2815 = vmatprep.subr.mxu0 0.0
      %2816 = vmatpush1.msra.mxu0 0.0
      %2817 = vmatprep.subr.mxu0 0.0
      %2818 = vmatpush1.msra.mxu0 0.0
      %2819 = vmatprep.subr.mxu0 0.0
      %2820 = vmatpush1.msra.mxu0 0.0
      %2821 = vmatprep.subr.mxu0 0.0
      %2822 = vmatpush1.msra.mxu0 0.0
      %2823 = vmatprep.subr.mxu0 0.0
      %2824 = vmatpush1.msra.mxu0 0.0
      %2825 = vmatprep.subr.mxu0 0.0
      %2826 = vmatpush1.msra.mxu0 0.0
      %2827 = vmatprep.subr.mxu0 0.0
      %v2828 = vand.u32 %v2640, 4294901760
      %v2829 = vsub.f32 %v2640, %v2828
      %2830 = vmatpush1.msra.mxu0 %v2829
      %2831 = vmatprep.subr.mxu0 0.0
      %2832 = vmatpush2.msra.mxu0 0.0
      %2833 = vmatprep.subr.mxu0 0.0
      %2834 = vmatpush2.msra.mxu0 0.0
      %2835 = vmatprep.subr.mxu0 0.0
      %2836 = vmatpush2.msra.mxu0 0.0
      %2837 = vmatprep.subr.mxu0 0.0
      %2838 = vmatpush2.msra.mxu0 0.0
      %2839 = vmatprep.subr.mxu0 0.0
      %2840 = vmatpush2.msra.mxu0 0.0
      %2841 = vmatprep.subr.mxu0 0.0
      %2842 = vmatpush2.msra.mxu0 0.0
      %2843 = vmatprep.subr.mxu0 0.0
      %2844 = vmatpush2.msra.mxu0 0.0
      %2845 = vmatprep.subr.mxu0 0.0
      %2846 = vmatpush2.msra.mxu0 0.0
      %2847 = vmatprep.subr.mxu0 0.0
      %2848 = vmatpush2.msra.mxu0 0.0
      %2849 = vmatprep.subr.mxu0 0.0
      %2850 = vmatpush2.msra.mxu0 0.0
      %2851 = vmatprep.subr.mxu0 0.0
      %2852 = vmatpush2.msra.mxu0 0.0
      %2853 = vmatprep.subr.mxu0 0.0
      %2854 = vmatpush2.msra.mxu0 0.0
      %2855 = vmatprep.subr.mxu0 0.0
      %2856 = vmatpush2.msra.mxu0 0.0
      %2857 = vmatprep.subr.mxu0 0.0
      %2858 = vmatpush2.msra.mxu0 0.0
      %2859 = vmatprep.subr.mxu0 0.0
      %2860 = vmatpush2.msra.mxu0 0.0
      %2861 = vmatprep.subr.mxu0 0.0
      %2862 = vmatpush2.msra.mxu0 0.0
      %2863 = vmatprep.mubr.f32.mxu0 0.0
      %v2864 = vand.u32 %v2643, 4294901760
      %v2865 = vsub.f32 %v2643, %v2864
      %2866 = vmatmul.mubr.f32.gmra.mxu0 %v2865
      %v2867 = vpop.f32.mrf.mxu0
      %v2868 = vadd.f32 %v2794, %v2867
      %v2869 = vpop.f32.mrf.mxu0
      %2870 = vdwg.mxu0
      %2871 = vmatprep.subr.mxu0 0.0
      %2872 = vmatpush1.msra.mxu0 0.0
      %2873 = vmatprep.subr.mxu0 0.0
      %2874 = vmatpush1.msra.mxu0 0.0
      %2875 = vmatprep.subr.mxu0 0.0
      %2876 = vmatpush1.msra.mxu0 0.0
      %2877 = vmatprep.subr.mxu0 0.0
      %2878 = vmatpush1.msra.mxu0 0.0
      %2879 = vmatprep.subr.mxu0 0.0
      %2880 = vmatpush1.msra.mxu0 0.0
      %2881 = vmatprep.subr.mxu0 0.0
      %2882 = vmatpush1.msra.mxu0 0.0
      %2883 = vmatprep.subr.mxu0 0.0
      %2884 = vmatpush1.msra.mxu0 0.0
      %2885 = vmatprep.subr.mxu0 0.0
      %2886 = vmatpush1.msra.mxu0 0.0
      %2887 = vmatprep.subr.mxu0 0.0
      %2888 = vmatpush1.msra.mxu0 0.0
      %2889 = vmatprep.subr.mxu0 0.0
      %2890 = vmatpush1.msra.mxu0 0.0
      %2891 = vmatprep.subr.mxu0 0.0
      %2892 = vmatpush1.msra.mxu0 0.0
      %2893 = vmatprep.subr.mxu0 0.0
      %2894 = vmatpush1.msra.mxu0 0.0
      %2895 = vmatprep.subr.mxu0 0.0
      %2896 = vmatpush1.msra.mxu0 0.0
      %2897 = vmatprep.subr.mxu0 0.0
      %2898 = vmatpush1.msra.mxu0 0.0
      %2899 = vmatprep.subr.mxu0 0.0
      %2900 = vmatpush1.msra.mxu0 0.0
      %2901 = vmatprep.subr.mxu0 0.0
      %v2902 = vand.u32 %v2640, 4294901760
      %2903 = vmatpush1.msra.mxu0 %v2902
      %2904 = vmatprep.subr.mxu0 0.0
      %2905 = vmatpush2.msra.mxu0 0.0
      %2906 = vmatprep.subr.mxu0 0.0
      %2907 = vmatpush2.msra.mxu0 0.0
      %2908 = vmatprep.subr.mxu0 0.0
      %2909 = vmatpush2.msra.mxu0 0.0
      %2910 = vmatprep.subr.mxu0 0.0
      %2911 = vmatpush2.msra.mxu0 0.0
      %2912 = vmatprep.subr.mxu0 0.0
      %2913 = vmatpush2.msra.mxu0 0.0
      %2914 = vmatprep.subr.mxu0 0.0
      %2915 = vmatpush2.msra.mxu0 0.0
      %2916 = vmatprep.subr.mxu0 0.0
      %2917 = vmatpush2.msra.mxu0 0.0
      %2918 = vmatprep.subr.mxu0 0.0
      %2919 = vmatpush2.msra.mxu0 0.0
      %2920 = vmatprep.subr.mxu0 0.0
      %2921 = vmatpush2.msra.mxu0 0.0
      %2922 = vmatprep.subr.mxu0 0.0
      %2923 = vmatpush2.msra.mxu0 0.0
      %2924 = vmatprep.subr.mxu0 0.0
      %2925 = vmatpush2.msra.mxu0 0.0
      %2926 = vmatprep.subr.mxu0 0.0
      %2927 = vmatpush2.msra.mxu0 0.0
      %2928 = vmatprep.subr.mxu0 0.0
      %2929 = vmatpush2.msra.mxu0 0.0
      %2930 = vmatprep.subr.mxu0 0.0
      %2931 = vmatpush2.msra.mxu0 0.0
      %2932 = vmatprep.subr.mxu0 0.0
      %2933 = vmatpush2.msra.mxu0 0.0
      %2934 = vmatprep.subr.mxu0 0.0
      %2935 = vmatpush2.msra.mxu0 0.0
      %2936 = vmatprep.mubr.f32.mxu0 0.0
      %v2937 = vand.u32 %v2643, 4294901760
      %v2938 = vsub.f32 %v2643, %v2937
      %v2939 = vand.u32 %v2938, 4294901760
      %2940 = vmatmul.mubr.f32.gmra.mxu0 %v2939
      %v2941 = vpop.f32.mrf.mxu0
      %v2942 = vadd.f32 %v2868, %v2941
      %v2943 = vpop.f32.mrf.mxu0
      %2944 = vdwg.mxu0
      %2945 = vmatprep.subr.mxu0 0.0
      %2946 = vmatpush1.msra.mxu0 0.0
      %2947 = vmatprep.subr.mxu0 0.0
      %2948 = vmatpush1.msra.mxu0 0.0
      %2949 = vmatprep.subr.mxu0 0.0
      %2950 = vmatpush1.msra.mxu0 0.0
      %2951 = vmatprep.subr.mxu0 0.0
      %2952 = vmatpush1.msra.mxu0 0.0
      %2953 = vmatprep.subr.mxu0 0.0
      %2954 = vmatpush1.msra.mxu0 0.0
      %2955 = vmatprep.subr.mxu0 0.0
      %2956 = vmatpush1.msra.mxu0 0.0
      %2957 = vmatprep.subr.mxu0 0.0
      %2958 = vmatpush1.msra.mxu0 0.0
      %2959 = vmatprep.subr.mxu0 0.0
      %2960 = vmatpush1.msra.mxu0 0.0
      %2961 = vmatprep.subr.mxu0 0.0
      %2962 = vmatpush1.msra.mxu0 0.0
      %2963 = vmatprep.subr.mxu0 0.0
      %2964 = vmatpush1.msra.mxu0 0.0
      %2965 = vmatprep.subr.mxu0 0.0
      %2966 = vmatpush1.msra.mxu0 0.0
      %2967 = vmatprep.subr.mxu0 0.0
      %2968 = vmatpush1.msra.mxu0 0.0
      %2969 = vmatprep.subr.mxu0 0.0
      %2970 = vmatpush1.msra.mxu0 0.0
      %2971 = vmatprep.subr.mxu0 0.0
      %2972 = vmatpush1.msra.mxu0 0.0
      %2973 = vmatprep.subr.mxu0 0.0
      %2974 = vmatpush1.msra.mxu0 0.0
      %2975 = vmatprep.subr.mxu0 0.0
      %v2976 = vand.u32 %v2640, 4294901760
      %v2977 = vsub.f32 %v2640, %v2976
      %v2978 = vand.u32 %v2977, 4294901760
      %2979 = vmatpush1.msra.mxu0 %v2978
      %2980 = vmatprep.subr.mxu0 0.0
      %2981 = vmatpush2.msra.mxu0 0.0
      %2982 = vmatprep.subr.mxu0 0.0
      %2983 = vmatpush2.msra.mxu0 0.0
      %2984 = vmatprep.subr.mxu0 0.0
      %2985 = vmatpush2.msra.mxu0 0.0
      %2986 = vmatprep.subr.mxu0 0.0
      %2987 = vmatpush2.msra.mxu0 0.0
      %2988 = vmatprep.subr.mxu0 0.0
      %2989 = vmatpush2.msra.mxu0 0.0
      %2990 = vmatprep.subr.mxu0 0.0
      %2991 = vmatpush2.msra.mxu0 0.0
      %2992 = vmatprep.subr.mxu0 0.0
      %2993 = vmatpush2.msra.mxu0 0.0
      %2994 = vmatprep.subr.mxu0 0.0
      %2995 = vmatpush2.msra.mxu0 0.0
      %2996 = vmatprep.subr.mxu0 0.0
      %2997 = vmatpush2.msra.mxu0 0.0
      %2998 = vmatprep.subr.mxu0 0.0
      %2999 = vmatpush2.msra.mxu0 0.0
      %3000 = vmatprep.subr.mxu0 0.0
      %3001 = vmatpush2.msra.mxu0 0.0
      %3002 = vmatprep.subr.mxu0 0.0
      %3003 = vmatpush2.msra.mxu0 0.0
      %3004 = vmatprep.subr.mxu0 0.0
      %3005 = vmatpush2.msra.mxu0 0.0
      %3006 = vmatprep.subr.mxu0 0.0
      %3007 = vmatpush2.msra.mxu0 0.0
      %3008 = vmatprep.subr.mxu0 0.0
      %3009 = vmatpush2.msra.mxu0 0.0
      %3010 = vmatprep.subr.mxu0 0.0
      %3011 = vmatpush2.msra.mxu0 0.0
      %3012 = vmatprep.mubr.f32.mxu0 0.0
      %v3013 = vand.u32 %v2643, 4294901760
      %3014 = vmatmul.mubr.f32.gmra.mxu0 %v3013
      %v3015 = vpop.f32.mrf.mxu0
      %v3016 = vadd.f32 %v2942, %v3015
      %v3017 = vpop.f32.mrf.mxu0
      %3018 = vdwg.mxu0
      %3019 = vmatprep.subr.mxu0 0.0
      %3020 = vmatpush1.msra.mxu0 0.0
      %3021 = vmatprep.subr.mxu0 0.0
      %3022 = vmatpush1.msra.mxu0 0.0
      %3023 = vmatprep.subr.mxu0 0.0
      %3024 = vmatpush1.msra.mxu0 0.0
      %3025 = vmatprep.subr.mxu0 0.0
      %3026 = vmatpush1.msra.mxu0 0.0
      %3027 = vmatprep.subr.mxu0 0.0
      %3028 = vmatpush1.msra.mxu0 0.0
      %3029 = vmatprep.subr.mxu0 0.0
      %3030 = vmatpush1.msra.mxu0 0.0
      %3031 = vmatprep.subr.mxu0 0.0
      %3032 = vmatpush1.msra.mxu0 0.0
      %3033 = vmatprep.subr.mxu0 0.0
      %3034 = vmatpush1.msra.mxu0 0.0
      %3035 = vmatprep.subr.mxu0 0.0
      %3036 = vmatpush1.msra.mxu0 0.0
      %3037 = vmatprep.subr.mxu0 0.0
      %3038 = vmatpush1.msra.mxu0 0.0
      %3039 = vmatprep.subr.mxu0 0.0
      %3040 = vmatpush1.msra.mxu0 0.0
      %3041 = vmatprep.subr.mxu0 0.0
      %3042 = vmatpush1.msra.mxu0 0.0
      %3043 = vmatprep.subr.mxu0 0.0
      %3044 = vmatpush1.msra.mxu0 0.0
      %3045 = vmatprep.subr.mxu0 0.0
      %3046 = vmatpush1.msra.mxu0 0.0
      %3047 = vmatprep.subr.mxu0 0.0
      %3048 = vmatpush1.msra.mxu0 0.0
      %3049 = vmatprep.subr.mxu0 0.0
      %v3050 = vand.u32 %v2640, 4294901760
      %3051 = vmatpush1.msra.mxu0 %v3050
      %3052 = vmatprep.subr.mxu0 0.0
      %3053 = vmatpush2.msra.mxu0 0.0
      %3054 = vmatprep.subr.mxu0 0.0
      %3055 = vmatpush2.msra.mxu0 0.0
      %3056 = vmatprep.subr.mxu0 0.0
      %3057 = vmatpush2.msra.mxu0 0.0
      %3058 = vmatprep.subr.mxu0 0.0
      %3059 = vmatpush2.msra.mxu0 0.0
      %3060 = vmatprep.subr.mxu0 0.0
      %3061 = vmatpush2.msra.mxu0 0.0
      %3062 = vmatprep.subr.mxu0 0.0
      %3063 = vmatpush2.msra.mxu0 0.0
      %3064 = vmatprep.subr.mxu0 0.0
      %3065 = vmatpush2.msra.mxu0 0.0
      %3066 = vmatprep.subr.mxu0 0.0
      %3067 = vmatpush2.msra.mxu0 0.0
      %3068 = vmatprep.subr.mxu0 0.0
      %3069 = vmatpush2.msra.mxu0 0.0
      %3070 = vmatprep.subr.mxu0 0.0
      %3071 = vmatpush2.msra.mxu0 0.0
      %3072 = vmatprep.subr.mxu0 0.0
      %3073 = vmatpush2.msra.mxu0 0.0
      %3074 = vmatprep.subr.mxu0 0.0
      %3075 = vmatpush2.msra.mxu0 0.0
      %3076 = vmatprep.subr.mxu0 0.0
      %3077 = vmatpush2.msra.mxu0 0.0
      %3078 = vmatprep.subr.mxu0 0.0
      %3079 = vmatpush2.msra.mxu0 0.0
      %3080 = vmatprep.subr.mxu0 0.0
      %3081 = vmatpush2.msra.mxu0 0.0
      %3082 = vmatprep.subr.mxu0 0.0
      %3083 = vmatpush2.msra.mxu0 0.0
      %3084 = vmatprep.mubr.f32.mxu0 0.0
      %v3085 = vand.u32 %v2643, 4294901760
      %3086 = vmatmul.mubr.f32.gmra.mxu0 %v3085
      %v3087 = vpop.f32.mrf.mxu0
      %v3088 = vadd.f32 %v3016, %v3087
      %v3089 = vpop.f32.mrf.mxu0
      %3090 = vdwg.mxu0
      %v3091 = vrcp.pop %v2638
      %v3092 = vmul.f32 1.0, %v3091
      %v3093 = vmul.f32 %v3088, %v3092
      %3095 = vrot.lane.b32.xlu0 %v3093, 8
      %v3096 = vpop.permute.xlu0 %3095
      %vm3098 = vcmask 130112
      %3099 = vst.msk [vmem:[%s199] sm:$0xff] %vm3098, %v3096
      %p3100 = scmp.lt.s32.totalorder %s22, 1
      %s3101 = scalar_select %p3100, %s22, 1
      %s3102 = smul.addr %s3101, 8
      %s3103 = scalar_lea.vmem %s5, %s3102
      // Predicated region
      $region37: #{mhsa_forward.6} parent=35 // pred_check
        %p3104 = pneg %p129
      $region38: #{mhsa_forward.6} parent=35 // pred_check_branch
        %3106 = sbr.rel (%p3104) target = $region40
      $region39: #{mhsa_forward.6} parent=35 // pred_region
        _
      $region40: #{mhsa_forward.6} parent=35 // pred_fallthru
        _
    $region36: #{mhsa_forward.6} parent=5 // pred_fallthru
      _
    %p3107 = scmp.le.s32.totalorder 2, %s17
    // Predicated region
    $region41: #{mhsa_forward.6} parent=5 // pred_check
      %p3108 = pneg %p3107
    $region42: #{mhsa_forward.6} parent=5 // pred_check_branch
      %3110 = sbr.rel (%p3108) target = $region44
    $region43: #{mhsa_forward.6} parent=5 // pred_region
      %s3111 = ssub.s32 %s17, 2
      // Predicated region
      $region45: #{mhsa_forward.6} parent=43 // pred_check
        %p3112 = pneg %p135
      $region46: #{mhsa_forward.6} parent=43 // pred_check_branch
        %3114 = sbr.rel (%p3112) target = $region48
      $region47: #{mhsa_forward.6} parent=43 // pred_region
        %p3115 = scmp.lt.s32.totalorder %s23, 1
        %s3116 = scalar_select %p3115, %s23, 1
        %s3117 = smul.addr %s3116, 8
        %s3118 = scalar_lea.vmem %s5, %s3117
      $region48: #{mhsa_forward.6} parent=43 // pred_fallthru
        _
    $region44: #{mhsa_forward.6} parent=5 // pred_fallthru
      _
  $region6: #{mhsa_forward.6} parent=0 // loop_footer
    %s21 = sadd.s32 1, %s17
  $region7: #{mhsa_forward.6} parent=0 // loop_footer_branch
    %16 = sbr.rel target = $region3
  $region8: #{mhsa_forward.6} parent=0 // loop_exit
    _

</llo_original>
